<compile_context>
chip_gen: v7x
topology: tpu7x:2x2x1
jax: 0.10.0
libtpu: 0.0.40
codegen_flags: <defaults>
</compile_context>

<pallas_src>
import numpy as np
import jax
import jax.numpy as jnp
from jax import lax
from jax.experimental import pallas as pl
from jax.experimental.pallas import tpu as pltpu

# ---- model dimensions (module defaults, small synthetic problem) ------------
B = 2                    # Batch_Size
F = 8                    # N_Features
T = 16                   # sequence length
H = 128                  # N_LSTM_Out
C1, C2, C3 = 128, 256, 128        # Conv1_NF, Conv2_NF, Conv3_NF
K1, K2, K3 = 8, 5, 3              # conv kernel sizes
NCLASS = 6                         # N_ClassesOut
NPAD = 128                         # lane-padded FC output width
L1 = T - K1 + 1                    # 9
L2 = L1 - K2 + 1                   # 5
L3 = L2 - K3 + 1                   # 3
R1 = B * L1                        # 18 flattened conv rows after conv1
R2 = R1 - K2 + 1                   # 14 "full" rows after conv2
R3 = R2 - K3 + 1                   # 12 "full" rows after conv3
BP = 8                             # batch rows padded to one f32 sublane group
FP = 64                            # LSTM input cols padded to conv patch width
HID = 256                          # SE slab width (zero-padded hidden dims)
BN_EPS = 1e-5

# static guards: valid conv windows must never straddle a batch boundary in
# the flattened-row ("garbage rows") layout.
assert FP == K1 * F
assert (L2 - 1) + (K2 - 1) <= L1 - 1      # conv2 reads only same-batch a1 rows
assert (L3 - 1) + (K3 - 1) <= L2 - 1      # conv3 reads only same-batch a2 rows


# ---------------------------- Pallas kernel ----------------------------------
def mlstm_fcn_kernel(x_ref, lstmw_ref, vec_ref, c1w_ref, c2w_ref, c3w_ref,
                     se_ref, fcw_ref, pool_ref, exp_ref, out_ref, xw_ref):
    f32 = jnp.float32
    bf16 = jnp.bfloat16

    def bdot(a, b):
        # bf16 MXU feed, f32 accumulation
        return jnp.dot(a.astype(bf16), b.astype(bf16),
                       preferred_element_type=f32)

    # -------- unpack the per-channel vector slab (one DMA) -------------------
    vec = vec_ref[...]                                   # (8, 4H) f32
    b_lstm = vec[0:1, :]                                 # g-cols pre-scaled x2
    bn1_s, bn1_h = vec[1:2, 0:C1], vec[2:3, 0:C1]        # conv bias folded in
    bn2_s, bn2_h = vec[3:4, 0:C2], vec[4:5, 0:C2]
    bn3_s, bn3_h = vec[5:6, 0:C3], vec[6:7, 0:C3]
    fcb = vec[7:8, 0:NPAD]

    # -------- LSTM branch -----------------------------------------------------
    # Hoisted input projection, 8 rows per timestep (sublane-aligned slices).
    xw_ref[...] = bdot(x_ref[0:T * BP, :], lstmw_ref[0:FP, :]) + b_lstm

    w_hh = lstmw_ref[FP:FP + H, :]                       # (H, 4H) bf16, read once
    h = jnp.zeros((BP, H), f32)
    c = jnp.zeros((BP, H), f32)
    for t in range(T):                                   # fully unrolled, one BB
        gates = xw_ref[t * BP:(t + 1) * BP, :] + bdot(h, w_hh)   # (8, 4H)
        s = jax.nn.sigmoid(gates)                        # one wide EUP call
        i_g = s[:, 0:H]
        f_g = s[:, H:2 * H]
        g_g = 2.0 * s[:, 2 * H:3 * H] - 1.0              # tanh(g) = 2*sig(2g)-1
        o_g = s[:, 3 * H:4 * H]
        c = f_g * c + i_g * g_g
        h = o_g * jnp.tanh(c)
    x1 = h                                               # (8, H); rows >= B junk

    # -------- Conv / BN / ReLU / SE branch -----------------------------------
    pm = pool_ref[...]                                   # (24, R1) 0/1 f32 masks
    em = exp_ref[...]                                    # (40, 8)  0/1 f32 masks

    def bn_relu(acc, scale, shift):
        return jnp.maximum(acc * scale + shift, 0.0)

    def se(a, p_mask, inv_len, e_mask, w1, w2, cout):
        y = bdot(p_mask, a) * inv_len                    # per-batch temporal mean
        hid = jnp.maximum(bdot(y, w1), 0.0)
        gate = jax.nn.sigmoid(bdot(hid, w2)[:, 0:cout])
        return a * bdot(e_mask, gate)                    # broadcast gate per row

    # conv1: single im2col matmul  (B*L1, K1*F) x (K1*F, C1)
    a1 = bn_relu(bdot(x_ref[T * BP:T * BP + R1, :], c1w_ref[...]), bn1_s, bn1_h)
    a1 = se(a1, pm[0:8, 0:R1], 1.0 / L1, em[0:R1, :],
            se_ref[0:C1, :], se_ref[C1:C1 + HID, :], C1)

    # conv2: per-tap matmuls over the flattened row axis (batch-merged)
    acc2 = bdot(a1[0:R2, :], c2w_ref[0])
    for k in range(1, K2):
        acc2 = acc2 + bdot(a1[k:k + R2, :], c2w_ref[k])
    a2 = bn_relu(acc2, bn2_s, bn2_h)                     # (14, C2)
    a2 = se(a2, pm[8:16, 0:R2], 1.0 / L2, em[24:24 + R2, :],
            se_ref[C1 + HID:C1 + HID + C2, :],
            se_ref[C1 + HID + C2:C1 + 2 * HID + C2, :], C2)

    # conv3
    acc3 = bdot(a2[0:R3, :], c3w_ref[0])
    for k in range(1, K3):
        acc3 = acc3 + bdot(a2[k:k + R3, :], c3w_ref[k])
    a3 = bn_relu(acc3, bn3_s, bn3_h)                     # (12, C3)

    x2 = bdot(pm[16:24, 0:R3], a3) * (1.0 / L3)          # (8, C3), rows >= B zero

    # -------- FC head: split weights, lane-padded dense store ----------------
    out_ref[...] = (bdot(x1, fcw_ref[0:H, :])
                    + bdot(x2, fcw_ref[H:H + C3, :]) + fcb)


# ---------------------------- constant masks ----------------------------------
def _build_masks():
    pm = np.zeros((24, R1), np.float32)      # P1 rows 0:8, P2 rows 8:16, P3 16:24
    em = np.zeros((40, BP), np.float32)      # E1 rows 0:R1, E2 rows 24:24+R2
    for b in range(B):
        pm[b, b * L1:b * L1 + L1] = 1.0
        pm[8 + b, b * L1:b * L1 + L2] = 1.0
        pm[16 + b, b * L1:b * L1 + L3] = 1.0
        em[b * L1:b * L1 + L1, b] = 1.0
        em[24 + b * L1:24 + b * L1 + L2, b] = 1.0
    return jnp.asarray(pm), jnp.asarray(em)


# ---------------------------- jitted wrapper ----------------------------------
@jax.jit
def mlstm_fcn_forward(x_ncl, packed):
    """x_ncl: (B, F, T) float32, PyTorch NCL layout."""
    # time-major LSTM rows, 8 sublanes per timestep (2 real rows), lane-padded
    x_tm = jnp.transpose(x_ncl, (2, 0, 1))                         # (T, B, F)
    x_tm = jnp.pad(x_tm, ((0, 0), (0, BP - B), (0, 0)))            # (T, 8, F)
    x_lstm = jnp.pad(x_tm.reshape(T * BP, F), ((0, 0), (0, FP - F)))
    # im2col patches for conv1: patch[b*L1+l, k*F+f] = x[b, f, l+k]
    x_seq = jnp.transpose(x_ncl, (0, 2, 1))                        # (B, T, F)
    patch1 = jnp.concatenate([x_seq[:, k:k + L1, :] for k in range(K1)],
                             axis=2).reshape(B * L1, K1 * F)
    x_slab = jnp.concatenate([x_lstm, patch1], axis=0)             # (146, 64)

    inputs = (x_slab,) + packed
    in_specs = [pl.BlockSpec(memory_space=pltpu.MemorySpace.VMEM)
                for _ in inputs]
    out = pl.pallas_call(
        mlstm_fcn_kernel,
        out_shape=jax.ShapeDtypeStruct((BP, NPAD), jnp.float32),
        in_specs=in_specs,
        out_specs=pl.BlockSpec(memory_space=pltpu.MemorySpace.VMEM),
        scratch_shapes=[pltpu.VMEM((T * BP, 4 * H), jnp.float32)],  # hoisted x@W_ih
        cost_estimate=pl.CostEstimate(
            flops=38_000_000, transcendentals=90_000, bytes_accessed=2_000_000),
    )(*inputs)
    return out[:B, :NCLASS]


# ---------------------------- parameters ---------------------------------------
def init_params(key):
    """Logical (PyTorch-layout) parameters, BN pre-folded to eval-mode scale/shift."""
    ks = jax.random.split(key, 20)
    f32 = jnp.float32
    nrm = lambda k, shape, s: s * jax.random.normal(k, shape, f32)
    p = {}
    p['w_ih'] = nrm(ks[0], (4 * H, F), 0.10)
    p['w_hh'] = nrm(ks[1], (4 * H, H), 0.05)
    p['b_ih'] = nrm(ks[2], (4 * H,), 0.05)
    p['b_hh'] = nrm(ks[3], (4 * H,), 0.05)
    p['c1w'] = nrm(ks[4], (C1, F, K1), 0.10); p['c1b'] = nrm(ks[5], (C1,), 0.05)
    p['c2w'] = nrm(ks[6], (C2, C1, K2), 0.03); p['c2b'] = nrm(ks[7], (C2,), 0.05)
    p['c3w'] = nrm(ks[8], (C3, C2, K3), 0.03); p['c3b'] = nrm(ks[9], (C3,), 0.05)

    def bn(k, C):
        kg, kb, km, kv = jax.random.split(k, 4)
        gamma = 1.0 + 0.1 * jax.random.normal(kg, (C,), f32)
        beta = 0.1 * jax.random.normal(kb, (C,), f32)
        mean = 0.1 * jax.random.normal(km, (C,), f32)
        var = 1.0 + 0.1 * jax.random.uniform(kv, (C,), f32)
        scale = gamma / jnp.sqrt(var + BN_EPS)
        shift = beta - mean * scale
        return scale, shift

    p['bn1_s'], p['bn1_h'] = bn(ks[10], C1)
    p['bn2_s'], p['bn2_h'] = bn(ks[11], C2)
    p['bn3_s'], p['bn3_h'] = bn(ks[12], C3)
    # SELayer fc weights (Linear, bias=False), PyTorch (out, in)
    p['se1w1'] = nrm(ks[13], (C1 // 16, C1), 0.10)
    p['se1w2'] = nrm(ks[14], (C1, C1 // 16), 0.10)
    p['se2w1'] = nrm(ks[15], (C2 // 16, C2), 0.10)
    p['se2w2'] = nrm(ks[16], (C2, C2 // 16), 0.10)
    p['fcw'] = nrm(ks[17], (NCLASS, H + C3), 0.05)
    p['fcb'] = nrm(ks[18], (NCLASS,), 0.05)
    return p


def pack_params(p):
    """Pack logical params into the 9 kernel slabs (bf16 matmul weights)."""
    f32, bf16 = jnp.float32, jnp.bfloat16

    # LSTM weights: transpose to (in, 4H) and pre-scale g-gate columns by 2
    gate_scale = jnp.ones((4 * H,), f32).at[2 * H:3 * H].set(2.0)
    w_ih_t = p['w_ih'].T * gate_scale[None, :]           # (F, 4H)
    w_hh_t = p['w_hh'].T * gate_scale[None, :]           # (H, 4H)
    b_lstm = (p['b_ih'] + p['b_hh']) * gate_scale        # (4H,)
    lstmw = jnp.zeros((FP + H, 4 * H), f32)
    lstmw = lstmw.at[0:F, :].set(w_ih_t)                 # zero-row padded to FP
    lstmw = lstmw.at[FP:FP + H, :].set(w_hh_t)
    lstmw = lstmw.astype(bf16)                           # (192, 512)

    # per-channel vector slab (conv bias folded into BN shift)
    vec = jnp.zeros((8, 4 * H), f32)
    vec = vec.at[0, :].set(b_lstm)
    vec = vec.at[1, 0:C1].set(p['bn1_s'])
    vec = vec.at[2, 0:C1].set(p['c1b'] * p['bn1_s'] + p['bn1_h'])
    vec = vec.at[3, 0:C2].set(p['bn2_s'])
    vec = vec.at[4, 0:C2].set(p['c2b'] * p['bn2_s'] + p['bn2_h'])
    vec = vec.at[5, 0:C3].set(p['bn3_s'])
    vec = vec.at[6, 0:C3].set(p['c3b'] * p['bn3_s'] + p['bn3_h'])
    vec = vec.at[7, 0:NCLASS].set(p['fcb'])

    # conv weights: conv1 im2col (K1*F, C1); conv2/3 per-tap (K, Cin, Cout)
    c1w = jnp.transpose(p['c1w'], (2, 1, 0)).reshape(K1 * F, C1).astype(bf16)
    c2w = jnp.transpose(p['c2w'], (2, 1, 0)).astype(bf16)
    c3w = jnp.transpose(p['c3w'], (2, 1, 0)).astype(bf16)

    # SE slab: hidden dims zero-padded to HID so all kernel slices are
    # row-block aligned and full / 128-multiple width (exact: pads are zero).
    se = jnp.zeros((C1 + 2 * HID + C2, HID), f32)
    se = se.at[0:C1, 0:C1 // 16].set(p['se1w1'].T)                       # rows 0:128
    se = se.at[C1:C1 + C1 // 16, 0:C1].set(p['se1w2'].T)                 # rows 128:136
    se = se.at[C1 + HID:C1 + HID + C2, 0:C2 // 16].set(p['se2w1'].T)     # rows 384:640
    se = se.at[C1 + HID + C2:C1 + HID + C2 + C2 // 16, 0:C2].set(p['se2w2'].T)
    se = se.astype(bf16)                                                  # (896, 256)

    # FC slab: (H + C3, NPAD), lane-padded output columns
    fcw = jnp.zeros((H + C3, NPAD), f32).at[:, 0:NCLASS].set(p['fcw'].T).astype(bf16)

    pm, em = _build_masks()
    return (lstmw, vec, c1w, c2w, c3w, se, fcw, pm, em)


# ---------------------------- pure-JAX reference ------------------------------
def reference_forward(x_ncl, p):
    bf16 = jnp.bfloat16
    bdot = lambda a, b: jnp.dot(a.astype(bf16), b.astype(bf16),
                                preferred_element_type=jnp.float32)
    x_seq = jnp.transpose(x_ncl, (0, 2, 1))               # (B, T, F)

    w_ih_t, w_hh_t = p['w_ih'].T, p['w_hh'].T
    b_lstm = (p['b_ih'] + p['b_hh'])[None, :]

    def step(carry, x_t):
        h, c = carry
        gates = bdot(x_t, w_ih_t) + bdot(h, w_hh_t) + b_lstm
        i = jax.nn.sigmoid(gates[:, :H])
        f = jax.nn.sigmoid(gates[:, H:2 * H])
        g = jnp.tanh(gates[:, 2 * H:3 * H])
        o = jax.nn.sigmoid(gates[:, 3 * H:])
        c = f * c + i * g
        h = o * jnp.tanh(c)
        return (h, c), None

    (h, _), _ = lax.scan(step, (jnp.zeros((B, H), jnp.float32),
                                jnp.zeros((B, H), jnp.float32)),
                         jnp.transpose(x_seq, (1, 0, 2)))
    x1 = h

    def conv_bn_relu(x, w, bias, s, sh):
        K = w.shape[2]
        L = x.shape[1] - K + 1
        taps = jnp.transpose(w, (2, 1, 0))                # (K, Cin, Cout)
        acc = sum(jnp.einsum('blc,cd->bld', x[:, k:k + L, :].astype(bf16),
                             taps[k].astype(bf16),
                             preferred_element_type=jnp.float32)
                  for k in range(K))
        return jnp.maximum((acc + bias) * s + sh, 0.0)

    def se(x, w1, w2):
        y = jnp.mean(x, axis=1)
        y = jax.nn.sigmoid(bdot(jnp.maximum(bdot(y, w1.T), 0.0), w2.T))
        return x * y[:, None, :]

    a = conv_bn_relu(x_seq, p['c1w'], p['c1b'], p['bn1_s'], p['bn1_h'])
    a = se(a, p['se1w1'], p['se1w2'])
    a = conv_bn_relu(a, p['c2w'], p['c2b'], p['bn2_s'], p['bn2_h'])
    a = se(a, p['se2w1'], p['se2w2'])
    a = conv_bn_relu(a, p['c3w'], p['c3b'], p['bn3_s'], p['bn3_h'])
    x2 = jnp.mean(a, axis=1)
    return bdot(jnp.concatenate([x1, x2], axis=1), p['fcw'].T) + p['fcb'][None, :]


# ---------------------------- main --------------------------------------------
if __name__ == "__main__":
    key = jax.random.PRNGKey(0)
    kx, kp = jax.random.split(key)
    x = jax.random.normal(kx, (B, F, T), jnp.float32)      # PyTorch NCL input
    params = init_params(kp)
    packed = pack_params(params)

    out = mlstm_fcn_forward(x, packed)
    out = jax.block_until_ready(out)

    ref = reference_forward(x, params)
    assert out.shape == (B, NCLASS)
    assert jnp.allclose(out, ref, atol=2.5e-2, rtol=2.5e-2), (out, ref)
    print("KERNEL_OK")
</pallas_src>

<mosaic_0001>
module attributes {stable_mosaic.version = 11 : i64} {
  func.func @mlstm_fcn_kernel(%arg0: memref<146x64xf32, #tpu.memory_space<vmem>>, %arg1: memref<192x512xbf16, #tpu.memory_space<vmem>>, %arg2: memref<8x512xf32, #tpu.memory_space<vmem>>, %arg3: memref<64x128xbf16, #tpu.memory_space<vmem>>, %arg4: memref<5x128x256xbf16, #tpu.memory_space<vmem>>, %arg5: memref<3x256x128xbf16, #tpu.memory_space<vmem>>, %arg6: memref<896x256xbf16, #tpu.memory_space<vmem>>, %arg7: memref<256x128xbf16, #tpu.memory_space<vmem>>, %arg8: memref<24x18xf32, #tpu.memory_space<vmem>>, %arg9: memref<40x8xf32, #tpu.memory_space<vmem>>, %arg10: memref<8x128xf32, #tpu.memory_space<vmem>>, %arg11: memref<128x512xf32, #tpu.memory_space<vmem>>) attributes {dimension_semantics = [], scalar_prefetch = 0 : i64, scratch_operands = 1 : i64, tpu.core_type = #tpu.core_type<tc>} {
    %c0 = arith.constant 0 : index
    %c0_0 = arith.constant 0 : index
    %0 = vector.load %arg2[%c0, %c0_0] : memref<8x512xf32, #tpu.memory_space<vmem>>, vector<8x512xf32>
    %1 = vector.extract_strided_slice %0 {offsets = [0, 0], sizes = [1, 512], strides = [1, 1]} : vector<8x512xf32> to vector<1x512xf32>
    %2 = vector.extract_strided_slice %0 {offsets = [1, 0], sizes = [1, 128], strides = [1, 1]} : vector<8x512xf32> to vector<1x128xf32>
    %3 = vector.extract_strided_slice %0 {offsets = [2, 0], sizes = [1, 128], strides = [1, 1]} : vector<8x512xf32> to vector<1x128xf32>
    %4 = vector.extract_strided_slice %0 {offsets = [3, 0], sizes = [1, 256], strides = [1, 1]} : vector<8x512xf32> to vector<1x256xf32>
    %5 = vector.extract_strided_slice %0 {offsets = [4, 0], sizes = [1, 256], strides = [1, 1]} : vector<8x512xf32> to vector<1x256xf32>
    %6 = vector.extract_strided_slice %0 {offsets = [5, 0], sizes = [1, 128], strides = [1, 1]} : vector<8x512xf32> to vector<1x128xf32>
    %7 = vector.extract_strided_slice %0 {offsets = [6, 0], sizes = [1, 128], strides = [1, 1]} : vector<8x512xf32> to vector<1x128xf32>
    %8 = vector.extract_strided_slice %0 {offsets = [7, 0], sizes = [1, 128], strides = [1, 1]} : vector<8x512xf32> to vector<1x128xf32>
    %c0_1 = arith.constant 0 : index
    %c0_2 = arith.constant 0 : index
    %9 = vector.load %arg0[%c0_1, %c0_2] : memref<146x64xf32, #tpu.memory_space<vmem>>, vector<128x64xf32>
    %c0_3 = arith.constant 0 : index
    %c0_4 = arith.constant 0 : index
    %10 = vector.load %arg1[%c0_3, %c0_4] : memref<192x512xbf16, #tpu.memory_space<vmem>>, vector<64x512xbf16>
    %11 = arith.truncf %9 : vector<128x64xf32> to vector<128x64xbf16>
    %cst = arith.constant dense<0.000000e+00> : vector<128x512xf32>
    %12 = tpu.matmul %11, %10, %cst {dimension_numbers = #tpu.dot_dimension_numbers<[1], [0], [0], [1], [0, 0, 1, 1], [], []>} : vector<128x64xbf16>, vector<64x512xbf16>, vector<128x512xf32> -> vector<128x512xf32>
    %13 = vector.broadcast %1 : vector<1x512xf32> to vector<128x512xf32>
    %14 = arith.addf %12, %13 : vector<128x512xf32>
    %c0_5 = arith.constant 0 : index
    %c0_6 = arith.constant 0 : index
    %15 = vector.load %arg11[%c0_5, %c0_6] : memref<128x512xf32, #tpu.memory_space<vmem>>, vector<128x512xf32>
    tpu.vector_store %arg11[%c0_5, %c0_6], %14 {strides = array<i32>} : memref<128x512xf32, #tpu.memory_space<vmem>>, vector<128x512xf32>,
    %c64 = arith.constant 64 : index
    %c0_7 = arith.constant 0 : index
    %16 = vector.load %arg1[%c64, %c0_7] : memref<192x512xbf16, #tpu.memory_space<vmem>>, vector<128x512xbf16>
    %cst_8 = arith.constant 0.000000e+00 : f32
    %17 = vector.broadcast %cst_8 : f32 to vector<8x128xf32>
    %cst_9 = arith.constant 0.000000e+00 : f32
    %18 = vector.broadcast %cst_9 : f32 to vector<8x128xf32>
    %c0_10 = arith.constant 0 : index
    %c0_11 = arith.constant 0 : index
    %19 = vector.load %arg11[%c0_10, %c0_11] : memref<128x512xf32, #tpu.memory_space<vmem>>, vector<8x512xf32>
    %20 = arith.truncf %17 : vector<8x128xf32> to vector<8x128xbf16>
    %cst_12 = arith.constant dense<0.000000e+00> : vector<8x512xf32>
    %21 = tpu.matmul %20, %16, %cst_12 {dimension_numbers = #tpu.dot_dimension_numbers<[1], [0], [0], [1], [0, 0, 1, 1], [], []>} : vector<8x128xbf16>, vector<128x512xbf16>, vector<8x512xf32> -> vector<8x512xf32>
    %22 = arith.addf %19, %21 : vector<8x512xf32>
    %23 = arith.negf %22 : vector<8x512xf32>
    %24 = math.exp %23 : vector<8x512xf32>
    %cst_13 = arith.constant 1.000000e+00 : f32
    %25 = vector.broadcast %cst_13 : f32 to vector<8x512xf32>
    %26 = arith.addf %25, %24 : vector<8x512xf32>
    %27 = arith.divf %25, %26 : vector<8x512xf32>
    %28 = vector.extract_strided_slice %27 {offsets = [0, 0], sizes = [8, 128], strides = [1, 1]} : vector<8x512xf32> to vector<8x128xf32>
    %29 = vector.extract_strided_slice %27 {offsets = [0, 128], sizes = [8, 128], strides = [1, 1]} : vector<8x512xf32> to vector<8x128xf32>
    %30 = vector.extract_strided_slice %27 {offsets = [0, 256], sizes = [8, 128], strides = [1, 1]} : vector<8x512xf32> to vector<8x128xf32>
    %cst_14 = arith.constant 2.000000e+00 : f32
    %31 = vector.broadcast %cst_14 : f32 to vector<8x128xf32>
    %32 = arith.mulf %31, %30 : vector<8x128xf32>
    %cst_15 = arith.constant 1.000000e+00 : f32
    %33 = vector.broadcast %cst_15 : f32 to vector<8x128xf32>
    %34 = arith.subf %32, %33 : vector<8x128xf32>
    %35 = vector.extract_strided_slice %27 {offsets = [0, 384], sizes = [8, 128], strides = [1, 1]} : vector<8x512xf32> to vector<8x128xf32>
    %36 = arith.mulf %29, %18 : vector<8x128xf32>
    %37 = arith.mulf %28, %34 : vector<8x128xf32>
    %38 = arith.addf %36, %37 : vector<8x128xf32>
    %39 = math.tanh %38 : vector<8x128xf32>
    %40 = arith.mulf %35, %39 : vector<8x128xf32>
    %c8 = arith.constant 8 : index
    %c0_16 = arith.constant 0 : index
    %41 = vector.load %arg11[%c8, %c0_16] : memref<128x512xf32, #tpu.memory_space<vmem>>, vector<8x512xf32>
    %42 = arith.truncf %40 : vector<8x128xf32> to vector<8x128xbf16>
    %cst_17 = arith.constant dense<0.000000e+00> : vector<8x512xf32>
    %43 = tpu.matmul %42, %16, %cst_17 {dimension_numbers = #tpu.dot_dimension_numbers<[1], [0], [0], [1], [0, 0, 1, 1], [], []>} : vector<8x128xbf16>, vector<128x512xbf16>, vector<8x512xf32> -> vector<8x512xf32>
    %44 = arith.addf %41, %43 : vector<8x512xf32>
    %45 = arith.negf %44 : vector<8x512xf32>
    %46 = math.exp %45 : vector<8x512xf32>
    %cst_18 = arith.constant 1.000000e+00 : f32
    %47 = vector.broadcast %cst_18 : f32 to vector<8x512xf32>
    %48 = arith.addf %47, %46 : vector<8x512xf32>
    %49 = arith.divf %47, %48 : vector<8x512xf32>
    %50 = vector.extract_strided_slice %49 {offsets = [0, 0], sizes = [8, 128], strides = [1, 1]} : vector<8x512xf32> to vector<8x128xf32>
    %51 = vector.extract_strided_slice %49 {offsets = [0, 128], sizes = [8, 128], strides = [1, 1]} : vector<8x512xf32> to vector<8x128xf32>
    %52 = vector.extract_strided_slice %49 {offsets = [0, 256], sizes = [8, 128], strides = [1, 1]} : vector<8x512xf32> to vector<8x128xf32>
    %cst_19 = arith.constant 2.000000e+00 : f32
    %53 = vector.broadcast %cst_19 : f32 to vector<8x128xf32>
    %54 = arith.mulf %53, %52 : vector<8x128xf32>
    %cst_20 = arith.constant 1.000000e+00 : f32
    %55 = vector.broadcast %cst_20 : f32 to vector<8x128xf32>
    %56 = arith.subf %54, %55 : vector<8x128xf32>
    %57 = vector.extract_strided_slice %49 {offsets = [0, 384], sizes = [8, 128], strides = [1, 1]} : vector<8x512xf32> to vector<8x128xf32>
    %58 = arith.mulf %51, %38 : vector<8x128xf32>
    %59 = arith.mulf %50, %56 : vector<8x128xf32>
    %60 = arith.addf %58, %59 : vector<8x128xf32>
    %61 = math.tanh %60 : vector<8x128xf32>
    %62 = arith.mulf %57, %61 : vector<8x128xf32>
    %c16 = arith.constant 16 : index
    %c0_21 = arith.constant 0 : index
    %63 = vector.load %arg11[%c16, %c0_21] : memref<128x512xf32, #tpu.memory_space<vmem>>, vector<8x512xf32>
    %64 = arith.truncf %62 : vector<8x128xf32> to vector<8x128xbf16>
    %cst_22 = arith.constant dense<0.000000e+00> : vector<8x512xf32>
    %65 = tpu.matmul %64, %16, %cst_22 {dimension_numbers = #tpu.dot_dimension_numbers<[1], [0], [0], [1], [0, 0, 1, 1], [], []>} : vector<8x128xbf16>, vector<128x512xbf16>, vector<8x512xf32> -> vector<8x512xf32>
    %66 = arith.addf %63, %65 : vector<8x512xf32>
    %67 = arith.negf %66 : vector<8x512xf32>
    %68 = math.exp %67 : vector<8x512xf32>
    %cst_23 = arith.constant 1.000000e+00 : f32
    %69 = vector.broadcast %cst_23 : f32 to vector<8x512xf32>
    %70 = arith.addf %69, %68 : vector<8x512xf32>
    %71 = arith.divf %69, %70 : vector<8x512xf32>
    %72 = vector.extract_strided_slice %71 {offsets = [0, 0], sizes = [8, 128], strides = [1, 1]} : vector<8x512xf32> to vector<8x128xf32>
    %73 = vector.extract_strided_slice %71 {offsets = [0, 128], sizes = [8, 128], strides = [1, 1]} : vector<8x512xf32> to vector<8x128xf32>
    %74 = vector.extract_strided_slice %71 {offsets = [0, 256], sizes = [8, 128], strides = [1, 1]} : vector<8x512xf32> to vector<8x128xf32>
    %cst_24 = arith.constant 2.000000e+00 : f32
    %75 = vector.broadcast %cst_24 : f32 to vector<8x128xf32>
    %76 = arith.mulf %75, %74 : vector<8x128xf32>
    %cst_25 = arith.constant 1.000000e+00 : f32
    %77 = vector.broadcast %cst_25 : f32 to vector<8x128xf32>
    %78 = arith.subf %76, %77 : vector<8x128xf32>
    %79 = vector.extract_strided_slice %71 {offsets = [0, 384], sizes = [8, 128], strides = [1, 1]} : vector<8x512xf32> to vector<8x128xf32>
    %80 = arith.mulf %73, %60 : vector<8x128xf32>
    %81 = arith.mulf %72, %78 : vector<8x128xf32>
    %82 = arith.addf %80, %81 : vector<8x128xf32>
    %83 = math.tanh %82 : vector<8x128xf32>
    %84 = arith.mulf %79, %83 : vector<8x128xf32>
    %c24 = arith.constant 24 : index
    %c0_26 = arith.constant 0 : index
    %85 = vector.load %arg11[%c24, %c0_26] : memref<128x512xf32, #tpu.memory_space<vmem>>, vector<8x512xf32>
    %86 = arith.truncf %84 : vector<8x128xf32> to vector<8x128xbf16>
    %cst_27 = arith.constant dense<0.000000e+00> : vector<8x512xf32>
    %87 = tpu.matmul %86, %16, %cst_27 {dimension_numbers = #tpu.dot_dimension_numbers<[1], [0], [0], [1], [0, 0, 1, 1], [], []>} : vector<8x128xbf16>, vector<128x512xbf16>, vector<8x512xf32> -> vector<8x512xf32>
    %88 = arith.addf %85, %87 : vector<8x512xf32>
    %89 = arith.negf %88 : vector<8x512xf32>
    %90 = math.exp %89 : vector<8x512xf32>
    %cst_28 = arith.constant 1.000000e+00 : f32
    %91 = vector.broadcast %cst_28 : f32 to vector<8x512xf32>
    %92 = arith.addf %91, %90 : vector<8x512xf32>
    %93 = arith.divf %91, %92 : vector<8x512xf32>
    %94 = vector.extract_strided_slice %93 {offsets = [0, 0], sizes = [8, 128], strides = [1, 1]} : vector<8x512xf32> to vector<8x128xf32>
    %95 = vector.extract_strided_slice %93 {offsets = [0, 128], sizes = [8, 128], strides = [1, 1]} : vector<8x512xf32> to vector<8x128xf32>
    %96 = vector.extract_strided_slice %93 {offsets = [0, 256], sizes = [8, 128], strides = [1, 1]} : vector<8x512xf32> to vector<8x128xf32>
    %cst_29 = arith.constant 2.000000e+00 : f32
    %97 = vector.broadcast %cst_29 : f32 to vector<8x128xf32>
    %98 = arith.mulf %97, %96 : vector<8x128xf32>
    %cst_30 = arith.constant 1.000000e+00 : f32
    %99 = vector.broadcast %cst_30 : f32 to vector<8x128xf32>
    %100 = arith.subf %98, %99 : vector<8x128xf32>
    %101 = vector.extract_strided_slice %93 {offsets = [0, 384], sizes = [8, 128], strides = [1, 1]} : vector<8x512xf32> to vector<8x128xf32>
    %102 = arith.mulf %95, %82 : vector<8x128xf32>
    %103 = arith.mulf %94, %100 : vector<8x128xf32>
    %104 = arith.addf %102, %103 : vector<8x128xf32>
    %105 = math.tanh %104 : vector<8x128xf32>
    %106 = arith.mulf %101, %105 : vector<8x128xf32>
    %c32 = arith.constant 32 : index
    %c0_31 = arith.constant 0 : index
    %107 = vector.load %arg11[%c32, %c0_31] : memref<128x512xf32, #tpu.memory_space<vmem>>, vector<8x512xf32>
    %108 = arith.truncf %106 : vector<8x128xf32> to vector<8x128xbf16>
    %cst_32 = arith.constant dense<0.000000e+00> : vector<8x512xf32>
    %109 = tpu.matmul %108, %16, %cst_32 {dimension_numbers = #tpu.dot_dimension_numbers<[1], [0], [0], [1], [0, 0, 1, 1], [], []>} : vector<8x128xbf16>, vector<128x512xbf16>, vector<8x512xf32> -> vector<8x512xf32>
    %110 = arith.addf %107, %109 : vector<8x512xf32>
    %111 = arith.negf %110 : vector<8x512xf32>
    %112 = math.exp %111 : vector<8x512xf32>
    %cst_33 = arith.constant 1.000000e+00 : f32
    %113 = vector.broadcast %cst_33 : f32 to vector<8x512xf32>
    %114 = arith.addf %113, %112 : vector<8x512xf32>
    %115 = arith.divf %113, %114 : vector<8x512xf32>
    %116 = vector.extract_strided_slice %115 {offsets = [0, 0], sizes = [8, 128], strides = [1, 1]} : vector<8x512xf32> to vector<8x128xf32>
    %117 = vector.extract_strided_slice %115 {offsets = [0, 128], sizes = [8, 128], strides = [1, 1]} : vector<8x512xf32> to vector<8x128xf32>
    %118 = vector.extract_strided_slice %115 {offsets = [0, 256], sizes = [8, 128], strides = [1, 1]} : vector<8x512xf32> to vector<8x128xf32>
    %cst_34 = arith.constant 2.000000e+00 : f32
    %119 = vector.broadcast %cst_34 : f32 to vector<8x128xf32>
    %120 = arith.mulf %119, %118 : vector<8x128xf32>
    %cst_35 = arith.constant 1.000000e+00 : f32
    %121 = vector.broadcast %cst_35 : f32 to vector<8x128xf32>
    %122 = arith.subf %120, %121 : vector<8x128xf32>
    %123 = vector.extract_strided_slice %115 {offsets = [0, 384], sizes = [8, 128], strides = [1, 1]} : vector<8x512xf32> to vector<8x128xf32>
    %124 = arith.mulf %117, %104 : vector<8x128xf32>
    %125 = arith.mulf %116, %122 : vector<8x128xf32>
    %126 = arith.addf %124, %125 : vector<8x128xf32>
    %127 = math.tanh %126 : vector<8x128xf32>
    %128 = arith.mulf %123, %127 : vector<8x128xf32>
    %c40 = arith.constant 40 : index
    %c0_36 = arith.constant 0 : index
    %129 = vector.load %arg11[%c40, %c0_36] : memref<128x512xf32, #tpu.memory_space<vmem>>, vector<8x512xf32>
    %130 = arith.truncf %128 : vector<8x128xf32> to vector<8x128xbf16>
    %cst_37 = arith.constant dense<0.000000e+00> : vector<8x512xf32>
    %131 = tpu.matmul %130, %16, %cst_37 {dimension_numbers = #tpu.dot_dimension_numbers<[1], [0], [0], [1], [0, 0, 1, 1], [], []>} : vector<8x128xbf16>, vector<128x512xbf16>, vector<8x512xf32> -> vector<8x512xf32>
    %132 = arith.addf %129, %131 : vector<8x512xf32>
    %133 = arith.negf %132 : vector<8x512xf32>
    %134 = math.exp %133 : vector<8x512xf32>
    %cst_38 = arith.constant 1.000000e+00 : f32
    %135 = vector.broadcast %cst_38 : f32 to vector<8x512xf32>
    %136 = arith.addf %135, %134 : vector<8x512xf32>
    %137 = arith.divf %135, %136 : vector<8x512xf32>
    %138 = vector.extract_strided_slice %137 {offsets = [0, 0], sizes = [8, 128], strides = [1, 1]} : vector<8x512xf32> to vector<8x128xf32>
    %139 = vector.extract_strided_slice %137 {offsets = [0, 128], sizes = [8, 128], strides = [1, 1]} : vector<8x512xf32> to vector<8x128xf32>
    %140 = vector.extract_strided_slice %137 {offsets = [0, 256], sizes = [8, 128], strides = [1, 1]} : vector<8x512xf32> to vector<8x128xf32>
    %cst_39 = arith.constant 2.000000e+00 : f32
    %141 = vector.broadcast %cst_39 : f32 to vector<8x128xf32>
    %142 = arith.mulf %141, %140 : vector<8x128xf32>
    %cst_40 = arith.constant 1.000000e+00 : f32
    %143 = vector.broadcast %cst_40 : f32 to vector<8x128xf32>
    %144 = arith.subf %142, %143 : vector<8x128xf32>
    %145 = vector.extract_strided_slice %137 {offsets = [0, 384], sizes = [8, 128], strides = [1, 1]} : vector<8x512xf32> to vector<8x128xf32>
    %146 = arith.mulf %139, %126 : vector<8x128xf32>
    %147 = arith.mulf %138, %144 : vector<8x128xf32>
    %148 = arith.addf %146, %147 : vector<8x128xf32>
    %149 = math.tanh %148 : vector<8x128xf32>
    %150 = arith.mulf %145, %149 : vector<8x128xf32>
    %c48 = arith.constant 48 : index
    %c0_41 = arith.constant 0 : index
    %151 = vector.load %arg11[%c48, %c0_41] : memref<128x512xf32, #tpu.memory_space<vmem>>, vector<8x512xf32>
    %152 = arith.truncf %150 : vector<8x128xf32> to vector<8x128xbf16>
    %cst_42 = arith.constant dense<0.000000e+00> : vector<8x512xf32>
    %153 = tpu.matmul %152, %16, %cst_42 {dimension_numbers = #tpu.dot_dimension_numbers<[1], [0], [0], [1], [0, 0, 1, 1], [], []>} : vector<8x128xbf16>, vector<128x512xbf16>, vector<8x512xf32> -> vector<8x512xf32>
    %154 = arith.addf %151, %153 : vector<8x512xf32>
    %155 = arith.negf %154 : vector<8x512xf32>
    %156 = math.exp %155 : vector<8x512xf32>
    %cst_43 = arith.constant 1.000000e+00 : f32
    %157 = vector.broadcast %cst_43 : f32 to vector<8x512xf32>
    %158 = arith.addf %157, %156 : vector<8x512xf32>
    %159 = arith.divf %157, %158 : vector<8x512xf32>
    %160 = vector.extract_strided_slice %159 {offsets = [0, 0], sizes = [8, 128], strides = [1, 1]} : vector<8x512xf32> to vector<8x128xf32>
    %161 = vector.extract_strided_slice %159 {offsets = [0, 128], sizes = [8, 128], strides = [1, 1]} : vector<8x512xf32> to vector<8x128xf32>
    %162 = vector.extract_strided_slice %159 {offsets = [0, 256], sizes = [8, 128], strides = [1, 1]} : vector<8x512xf32> to vector<8x128xf32>
    %cst_44 = arith.constant 2.000000e+00 : f32
    %163 = vector.broadcast %cst_44 : f32 to vector<8x128xf32>
    %164 = arith.mulf %163, %162 : vector<8x128xf32>
    %cst_45 = arith.constant 1.000000e+00 : f32
    %165 = vector.broadcast %cst_45 : f32 to vector<8x128xf32>
    %166 = arith.subf %164, %165 : vector<8x128xf32>
    %167 = vector.extract_strided_slice %159 {offsets = [0, 384], sizes = [8, 128], strides = [1, 1]} : vector<8x512xf32> to vector<8x128xf32>
    %168 = arith.mulf %161, %148 : vector<8x128xf32>
    %169 = arith.mulf %160, %166 : vector<8x128xf32>
    %170 = arith.addf %168, %169 : vector<8x128xf32>
    %171 = math.tanh %170 : vector<8x128xf32>
    %172 = arith.mulf %167, %171 : vector<8x128xf32>
    %c56 = arith.constant 56 : index
    %c0_46 = arith.constant 0 : index
    %173 = vector.load %arg11[%c56, %c0_46] : memref<128x512xf32, #tpu.memory_space<vmem>>, vector<8x512xf32>
    %174 = arith.truncf %172 : vector<8x128xf32> to vector<8x128xbf16>
    %cst_47 = arith.constant dense<0.000000e+00> : vector<8x512xf32>
    %175 = tpu.matmul %174, %16, %cst_47 {dimension_numbers = #tpu.dot_dimension_numbers<[1], [0], [0], [1], [0, 0, 1, 1], [], []>} : vector<8x128xbf16>, vector<128x512xbf16>, vector<8x512xf32> -> vector<8x512xf32>
    %176 = arith.addf %173, %175 : vector<8x512xf32>
    %177 = arith.negf %176 : vector<8x512xf32>
    %178 = math.exp %177 : vector<8x512xf32>
    %cst_48 = arith.constant 1.000000e+00 : f32
    %179 = vector.broadcast %cst_48 : f32 to vector<8x512xf32>
    %180 = arith.addf %179, %178 : vector<8x512xf32>
    %181 = arith.divf %179, %180 : vector<8x512xf32>
    %182 = vector.extract_strided_slice %181 {offsets = [0, 0], sizes = [8, 128], strides = [1, 1]} : vector<8x512xf32> to vector<8x128xf32>
    %183 = vector.extract_strided_slice %181 {offsets = [0, 128], sizes = [8, 128], strides = [1, 1]} : vector<8x512xf32> to vector<8x128xf32>
    %184 = vector.extract_strided_slice %181 {offsets = [0, 256], sizes = [8, 128], strides = [1, 1]} : vector<8x512xf32> to vector<8x128xf32>
    %cst_49 = arith.constant 2.000000e+00 : f32
    %185 = vector.broadcast %cst_49 : f32 to vector<8x128xf32>
    %186 = arith.mulf %185, %184 : vector<8x128xf32>
    %cst_50 = arith.constant 1.000000e+00 : f32
    %187 = vector.broadcast %cst_50 : f32 to vector<8x128xf32>
    %188 = arith.subf %186, %187 : vector<8x128xf32>
    %189 = vector.extract_strided_slice %181 {offsets = [0, 384], sizes = [8, 128], strides = [1, 1]} : vector<8x512xf32> to vector<8x128xf32>
    %190 = arith.mulf %183, %170 : vector<8x128xf32>
    %191 = arith.mulf %182, %188 : vector<8x128xf32>
    %192 = arith.addf %190, %191 : vector<8x128xf32>
    %193 = math.tanh %192 : vector<8x128xf32>
    %194 = arith.mulf %189, %193 : vector<8x128xf32>
    %c64_51 = arith.constant 64 : index
    %c0_52 = arith.constant 0 : index
    %195 = vector.load %arg11[%c64_51, %c0_52] : memref<128x512xf32, #tpu.memory_space<vmem>>, vector<8x512xf32>
    %196 = arith.truncf %194 : vector<8x128xf32> to vector<8x128xbf16>
    %cst_53 = arith.constant dense<0.000000e+00> : vector<8x512xf32>
    %197 = tpu.matmul %196, %16, %cst_53 {dimension_numbers = #tpu.dot_dimension_numbers<[1], [0], [0], [1], [0, 0, 1, 1], [], []>} : vector<8x128xbf16>, vector<128x512xbf16>, vector<8x512xf32> -> vector<8x512xf32>
    %198 = arith.addf %195, %197 : vector<8x512xf32>
    %199 = arith.negf %198 : vector<8x512xf32>
    %200 = math.exp %199 : vector<8x512xf32>
    %cst_54 = arith.constant 1.000000e+00 : f32
    %201 = vector.broadcast %cst_54 : f32 to vector<8x512xf32>
    %202 = arith.addf %201, %200 : vector<8x512xf32>
    %203 = arith.divf %201, %202 : vector<8x512xf32>
    %204 = vector.extract_strided_slice %203 {offsets = [0, 0], sizes = [8, 128], strides = [1, 1]} : vector<8x512xf32> to vector<8x128xf32>
    %205 = vector.extract_strided_slice %203 {offsets = [0, 128], sizes = [8, 128], strides = [1, 1]} : vector<8x512xf32> to vector<8x128xf32>
    %206 = vector.extract_strided_slice %203 {offsets = [0, 256], sizes = [8, 128], strides = [1, 1]} : vector<8x512xf32> to vector<8x128xf32>
    %cst_55 = arith.constant 2.000000e+00 : f32
    %207 = vector.broadcast %cst_55 : f32 to vector<8x128xf32>
    %208 = arith.mulf %207, %206 : vector<8x128xf32>
    %cst_56 = arith.constant 1.000000e+00 : f32
    %209 = vector.broadcast %cst_56 : f32 to vector<8x128xf32>
    %210 = arith.subf %208, %209 : vector<8x128xf32>
    %211 = vector.extract_strided_slice %203 {offsets = [0, 384], sizes = [8, 128], strides = [1, 1]} : vector<8x512xf32> to vector<8x128xf32>
    %212 = arith.mulf %205, %192 : vector<8x128xf32>
    %213 = arith.mulf %204, %210 : vector<8x128xf32>
    %214 = arith.addf %212, %213 : vector<8x128xf32>
    %215 = math.tanh %214 : vector<8x128xf32>
    %216 = arith.mulf %211, %215 : vector<8x128xf32>
    %c72 = arith.constant 72 : index
    %c0_57 = arith.constant 0 : index
    %217 = vector.load %arg11[%c72, %c0_57] : memref<128x512xf32, #tpu.memory_space<vmem>>, vector<8x512xf32>
    %218 = arith.truncf %216 : vector<8x128xf32> to vector<8x128xbf16>
    %cst_58 = arith.constant dense<0.000000e+00> : vector<8x512xf32>
    %219 = tpu.matmul %218, %16, %cst_58 {dimension_numbers = #tpu.dot_dimension_numbers<[1], [0], [0], [1], [0, 0, 1, 1], [], []>} : vector<8x128xbf16>, vector<128x512xbf16>, vector<8x512xf32> -> vector<8x512xf32>
    %220 = arith.addf %217, %219 : vector<8x512xf32>
    %221 = arith.negf %220 : vector<8x512xf32>
    %222 = math.exp %221 : vector<8x512xf32>
    %cst_59 = arith.constant 1.000000e+00 : f32
    %223 = vector.broadcast %cst_59 : f32 to vector<8x512xf32>
    %224 = arith.addf %223, %222 : vector<8x512xf32>
    %225 = arith.divf %223, %224 : vector<8x512xf32>
    %226 = vector.extract_strided_slice %225 {offsets = [0, 0], sizes = [8, 128], strides = [1, 1]} : vector<8x512xf32> to vector<8x128xf32>
    %227 = vector.extract_strided_slice %225 {offsets = [0, 128], sizes = [8, 128], strides = [1, 1]} : vector<8x512xf32> to vector<8x128xf32>
    %228 = vector.extract_strided_slice %225 {offsets = [0, 256], sizes = [8, 128], strides = [1, 1]} : vector<8x512xf32> to vector<8x128xf32>
    %cst_60 = arith.constant 2.000000e+00 : f32
    %229 = vector.broadcast %cst_60 : f32 to vector<8x128xf32>
    %230 = arith.mulf %229, %228 : vector<8x128xf32>
    %cst_61 = arith.constant 1.000000e+00 : f32
    %231 = vector.broadcast %cst_61 : f32 to vector<8x128xf32>
    %232 = arith.subf %230, %231 : vector<8x128xf32>
    %233 = vector.extract_strided_slice %225 {offsets = [0, 384], sizes = [8, 128], strides = [1, 1]} : vector<8x512xf32> to vector<8x128xf32>
    %234 = arith.mulf %227, %214 : vector<8x128xf32>
    %235 = arith.mulf %226, %232 : vector<8x128xf32>
    %236 = arith.addf %234, %235 : vector<8x128xf32>
    %237 = math.tanh %236 : vector<8x128xf32>
    %238 = arith.mulf %233, %237 : vector<8x128xf32>
    %c80 = arith.constant 80 : index
    %c0_62 = arith.constant 0 : index
    %239 = vector.load %arg11[%c80, %c0_62] : memref<128x512xf32, #tpu.memory_space<vmem>>, vector<8x512xf32>
    %240 = arith.truncf %238 : vector<8x128xf32> to vector<8x128xbf16>
    %cst_63 = arith.constant dense<0.000000e+00> : vector<8x512xf32>
    %241 = tpu.matmul %240, %16, %cst_63 {dimension_numbers = #tpu.dot_dimension_numbers<[1], [0], [0], [1], [0, 0, 1, 1], [], []>} : vector<8x128xbf16>, vector<128x512xbf16>, vector<8x512xf32> -> vector<8x512xf32>
    %242 = arith.addf %239, %241 : vector<8x512xf32>
    %243 = arith.negf %242 : vector<8x512xf32>
    %244 = math.exp %243 : vector<8x512xf32>
    %cst_64 = arith.constant 1.000000e+00 : f32
    %245 = vector.broadcast %cst_64 : f32 to vector<8x512xf32>
    %246 = arith.addf %245, %244 : vector<8x512xf32>
    %247 = arith.divf %245, %246 : vector<8x512xf32>
    %248 = vector.extract_strided_slice %247 {offsets = [0, 0], sizes = [8, 128], strides = [1, 1]} : vector<8x512xf32> to vector<8x128xf32>
    %249 = vector.extract_strided_slice %247 {offsets = [0, 128], sizes = [8, 128], strides = [1, 1]} : vector<8x512xf32> to vector<8x128xf32>
    %250 = vector.extract_strided_slice %247 {offsets = [0, 256], sizes = [8, 128], strides = [1, 1]} : vector<8x512xf32> to vector<8x128xf32>
    %cst_65 = arith.constant 2.000000e+00 : f32
    %251 = vector.broadcast %cst_65 : f32 to vector<8x128xf32>
    %252 = arith.mulf %251, %250 : vector<8x128xf32>
    %cst_66 = arith.constant 1.000000e+00 : f32
    %253 = vector.broadcast %cst_66 : f32 to vector<8x128xf32>
    %254 = arith.subf %252, %253 : vector<8x128xf32>
    %255 = vector.extract_strided_slice %247 {offsets = [0, 384], sizes = [8, 128], strides = [1, 1]} : vector<8x512xf32> to vector<8x128xf32>
    %256 = arith.mulf %249, %236 : vector<8x128xf32>
    %257 = arith.mulf %248, %254 : vector<8x128xf32>
    %258 = arith.addf %256, %257 : vector<8x128xf32>
    %259 = math.tanh %258 : vector<8x128xf32>
    %260 = arith.mulf %255, %259 : vector<8x128xf32>
    %c88 = arith.constant 88 : index
    %c0_67 = arith.constant 0 : index
    %261 = vector.load %arg11[%c88, %c0_67] : memref<128x512xf32, #tpu.memory_space<vmem>>, vector<8x512xf32>
    %262 = arith.truncf %260 : vector<8x128xf32> to vector<8x128xbf16>
    %cst_68 = arith.constant dense<0.000000e+00> : vector<8x512xf32>
    %263 = tpu.matmul %262, %16, %cst_68 {dimension_numbers = #tpu.dot_dimension_numbers<[1], [0], [0], [1], [0, 0, 1, 1], [], []>} : vector<8x128xbf16>, vector<128x512xbf16>, vector<8x512xf32> -> vector<8x512xf32>
    %264 = arith.addf %261, %263 : vector<8x512xf32>
    %265 = arith.negf %264 : vector<8x512xf32>
    %266 = math.exp %265 : vector<8x512xf32>
    %cst_69 = arith.constant 1.000000e+00 : f32
    %267 = vector.broadcast %cst_69 : f32 to vector<8x512xf32>
    %268 = arith.addf %267, %266 : vector<8x512xf32>
    %269 = arith.divf %267, %268 : vector<8x512xf32>
    %270 = vector.extract_strided_slice %269 {offsets = [0, 0], sizes = [8, 128], strides = [1, 1]} : vector<8x512xf32> to vector<8x128xf32>
    %271 = vector.extract_strided_slice %269 {offsets = [0, 128], sizes = [8, 128], strides = [1, 1]} : vector<8x512xf32> to vector<8x128xf32>
    %272 = vector.extract_strided_slice %269 {offsets = [0, 256], sizes = [8, 128], strides = [1, 1]} : vector<8x512xf32> to vector<8x128xf32>
    %cst_70 = arith.constant 2.000000e+00 : f32
    %273 = vector.broadcast %cst_70 : f32 to vector<8x128xf32>
    %274 = arith.mulf %273, %272 : vector<8x128xf32>
    %cst_71 = arith.constant 1.000000e+00 : f32
    %275 = vector.broadcast %cst_71 : f32 to vector<8x128xf32>
    %276 = arith.subf %274, %275 : vector<8x128xf32>
    %277 = vector.extract_strided_slice %269 {offsets = [0, 384], sizes = [8, 128], strides = [1, 1]} : vector<8x512xf32> to vector<8x128xf32>
    %278 = arith.mulf %271, %258 : vector<8x128xf32>
    %279 = arith.mulf %270, %276 : vector<8x128xf32>
    %280 = arith.addf %278, %279 : vector<8x128xf32>
    %281 = math.tanh %280 : vector<8x128xf32>
    %282 = arith.mulf %277, %281 : vector<8x128xf32>
    %c96 = arith.constant 96 : index
    %c0_72 = arith.constant 0 : index
    %283 = vector.load %arg11[%c96, %c0_72] : memref<128x512xf32, #tpu.memory_space<vmem>>, vector<8x512xf32>
    %284 = arith.truncf %282 : vector<8x128xf32> to vector<8x128xbf16>
    %cst_73 = arith.constant dense<0.000000e+00> : vector<8x512xf32>
    %285 = tpu.matmul %284, %16, %cst_73 {dimension_numbers = #tpu.dot_dimension_numbers<[1], [0], [0], [1], [0, 0, 1, 1], [], []>} : vector<8x128xbf16>, vector<128x512xbf16>, vector<8x512xf32> -> vector<8x512xf32>
    %286 = arith.addf %283, %285 : vector<8x512xf32>
    %287 = arith.negf %286 : vector<8x512xf32>
    %288 = math.exp %287 : vector<8x512xf32>
    %cst_74 = arith.constant 1.000000e+00 : f32
    %289 = vector.broadcast %cst_74 : f32 to vector<8x512xf32>
    %290 = arith.addf %289, %288 : vector<8x512xf32>
    %291 = arith.divf %289, %290 : vector<8x512xf32>
    %292 = vector.extract_strided_slice %291 {offsets = [0, 0], sizes = [8, 128], strides = [1, 1]} : vector<8x512xf32> to vector<8x128xf32>
    %293 = vector.extract_strided_slice %291 {offsets = [0, 128], sizes = [8, 128], strides = [1, 1]} : vector<8x512xf32> to vector<8x128xf32>
    %294 = vector.extract_strided_slice %291 {offsets = [0, 256], sizes = [8, 128], strides = [1, 1]} : vector<8x512xf32> to vector<8x128xf32>
    %cst_75 = arith.constant 2.000000e+00 : f32
    %295 = vector.broadcast %cst_75 : f32 to vector<8x128xf32>
    %296 = arith.mulf %295, %294 : vector<8x128xf32>
    %cst_76 = arith.constant 1.000000e+00 : f32
    %297 = vector.broadcast %cst_76 : f32 to vector<8x128xf32>
    %298 = arith.subf %296, %297 : vector<8x128xf32>
    %299 = vector.extract_strided_slice %291 {offsets = [0, 384], sizes = [8, 128], strides = [1, 1]} : vector<8x512xf32> to vector<8x128xf32>
    %300 = arith.mulf %293, %280 : vector<8x128xf32>
    %301 = arith.mulf %292, %298 : vector<8x128xf32>
    %302 = arith.addf %300, %301 : vector<8x128xf32>
    %303 = math.tanh %302 : vector<8x128xf32>
    %304 = arith.mulf %299, %303 : vector<8x128xf32>
    %c104 = arith.constant 104 : index
    %c0_77 = arith.constant 0 : index
    %305 = vector.load %arg11[%c104, %c0_77] : memref<128x512xf32, #tpu.memory_space<vmem>>, vector<8x512xf32>
    %306 = arith.truncf %304 : vector<8x128xf32> to vector<8x128xbf16>
    %cst_78 = arith.constant dense<0.000000e+00> : vector<8x512xf32>
    %307 = tpu.matmul %306, %16, %cst_78 {dimension_numbers = #tpu.dot_dimension_numbers<[1], [0], [0], [1], [0, 0, 1, 1], [], []>} : vector<8x128xbf16>, vector<128x512xbf16>, vector<8x512xf32> -> vector<8x512xf32>
    %308 = arith.addf %305, %307 : vector<8x512xf32>
    %309 = arith.negf %308 : vector<8x512xf32>
    %310 = math.exp %309 : vector<8x512xf32>
    %cst_79 = arith.constant 1.000000e+00 : f32
    %311 = vector.broadcast %cst_79 : f32 to vector<8x512xf32>
    %312 = arith.addf %311, %310 : vector<8x512xf32>
    %313 = arith.divf %311, %312 : vector<8x512xf32>
    %314 = vector.extract_strided_slice %313 {offsets = [0, 0], sizes = [8, 128], strides = [1, 1]} : vector<8x512xf32> to vector<8x128xf32>
    %315 = vector.extract_strided_slice %313 {offsets = [0, 128], sizes = [8, 128], strides = [1, 1]} : vector<8x512xf32> to vector<8x128xf32>
    %316 = vector.extract_strided_slice %313 {offsets = [0, 256], sizes = [8, 128], strides = [1, 1]} : vector<8x512xf32> to vector<8x128xf32>
    %cst_80 = arith.constant 2.000000e+00 : f32
    %317 = vector.broadcast %cst_80 : f32 to vector<8x128xf32>
    %318 = arith.mulf %317, %316 : vector<8x128xf32>
    %cst_81 = arith.constant 1.000000e+00 : f32
    %319 = vector.broadcast %cst_81 : f32 to vector<8x128xf32>
    %320 = arith.subf %318, %319 : vector<8x128xf32>
    %321 = vector.extract_strided_slice %313 {offsets = [0, 384], sizes = [8, 128], strides = [1, 1]} : vector<8x512xf32> to vector<8x128xf32>
    %322 = arith.mulf %315, %302 : vector<8x128xf32>
    %323 = arith.mulf %314, %320 : vector<8x128xf32>
    %324 = arith.addf %322, %323 : vector<8x128xf32>
    %325 = math.tanh %324 : vector<8x128xf32>
    %326 = arith.mulf %321, %325 : vector<8x128xf32>
    %c112 = arith.constant 112 : index
    %c0_82 = arith.constant 0 : index
    %327 = vector.load %arg11[%c112, %c0_82] : memref<128x512xf32, #tpu.memory_space<vmem>>, vector<8x512xf32>
    %328 = arith.truncf %326 : vector<8x128xf32> to vector<8x128xbf16>
    %cst_83 = arith.constant dense<0.000000e+00> : vector<8x512xf32>
    %329 = tpu.matmul %328, %16, %cst_83 {dimension_numbers = #tpu.dot_dimension_numbers<[1], [0], [0], [1], [0, 0, 1, 1], [], []>} : vector<8x128xbf16>, vector<128x512xbf16>, vector<8x512xf32> -> vector<8x512xf32>
    %330 = arith.addf %327, %329 : vector<8x512xf32>
    %331 = arith.negf %330 : vector<8x512xf32>
    %332 = math.exp %331 : vector<8x512xf32>
    %cst_84 = arith.constant 1.000000e+00 : f32
    %333 = vector.broadcast %cst_84 : f32 to vector<8x512xf32>
    %334 = arith.addf %333, %332 : vector<8x512xf32>
    %335 = arith.divf %333, %334 : vector<8x512xf32>
    %336 = vector.extract_strided_slice %335 {offsets = [0, 0], sizes = [8, 128], strides = [1, 1]} : vector<8x512xf32> to vector<8x128xf32>
    %337 = vector.extract_strided_slice %335 {offsets = [0, 128], sizes = [8, 128], strides = [1, 1]} : vector<8x512xf32> to vector<8x128xf32>
    %338 = vector.extract_strided_slice %335 {offsets = [0, 256], sizes = [8, 128], strides = [1, 1]} : vector<8x512xf32> to vector<8x128xf32>
    %cst_85 = arith.constant 2.000000e+00 : f32
    %339 = vector.broadcast %cst_85 : f32 to vector<8x128xf32>
    %340 = arith.mulf %339, %338 : vector<8x128xf32>
    %cst_86 = arith.constant 1.000000e+00 : f32
    %341 = vector.broadcast %cst_86 : f32 to vector<8x128xf32>
    %342 = arith.subf %340, %341 : vector<8x128xf32>
    %343 = vector.extract_strided_slice %335 {offsets = [0, 384], sizes = [8, 128], strides = [1, 1]} : vector<8x512xf32> to vector<8x128xf32>
    %344 = arith.mulf %337, %324 : vector<8x128xf32>
    %345 = arith.mulf %336, %342 : vector<8x128xf32>
    %346 = arith.addf %344, %345 : vector<8x128xf32>
    %347 = math.tanh %346 : vector<8x128xf32>
    %348 = arith.mulf %343, %347 : vector<8x128xf32>
    %c120 = arith.constant 120 : index
    %c0_87 = arith.constant 0 : index
    %349 = vector.load %arg11[%c120, %c0_87] : memref<128x512xf32, #tpu.memory_space<vmem>>, vector<8x512xf32>
    %350 = arith.truncf %348 : vector<8x128xf32> to vector<8x128xbf16>
    %cst_88 = arith.constant dense<0.000000e+00> : vector<8x512xf32>
    %351 = tpu.matmul %350, %16, %cst_88 {dimension_numbers = #tpu.dot_dimension_numbers<[1], [0], [0], [1], [0, 0, 1, 1], [], []>} : vector<8x128xbf16>, vector<128x512xbf16>, vector<8x512xf32> -> vector<8x512xf32>
    %352 = arith.addf %349, %351 : vector<8x512xf32>
    %353 = arith.negf %352 : vector<8x512xf32>
    %354 = math.exp %353 : vector<8x512xf32>
    %cst_89 = arith.constant 1.000000e+00 : f32
    %355 = vector.broadcast %cst_89 : f32 to vector<8x512xf32>
    %356 = arith.addf %355, %354 : vector<8x512xf32>
    %357 = arith.divf %355, %356 : vector<8x512xf32>
    %358 = vector.extract_strided_slice %357 {offsets = [0, 0], sizes = [8, 128], strides = [1, 1]} : vector<8x512xf32> to vector<8x128xf32>
    %359 = vector.extract_strided_slice %357 {offsets = [0, 128], sizes = [8, 128], strides = [1, 1]} : vector<8x512xf32> to vector<8x128xf32>
    %360 = vector.extract_strided_slice %357 {offsets = [0, 256], sizes = [8, 128], strides = [1, 1]} : vector<8x512xf32> to vector<8x128xf32>
    %cst_90 = arith.constant 2.000000e+00 : f32
    %361 = vector.broadcast %cst_90 : f32 to vector<8x128xf32>
    %362 = arith.mulf %361, %360 : vector<8x128xf32>
    %cst_91 = arith.constant 1.000000e+00 : f32
    %363 = vector.broadcast %cst_91 : f32 to vector<8x128xf32>
    %364 = arith.subf %362, %363 : vector<8x128xf32>
    %365 = vector.extract_strided_slice %357 {offsets = [0, 384], sizes = [8, 128], strides = [1, 1]} : vector<8x512xf32> to vector<8x128xf32>
    %366 = arith.mulf %359, %346 : vector<8x128xf32>
    %367 = arith.mulf %358, %364 : vector<8x128xf32>
    %368 = arith.addf %366, %367 : vector<8x128xf32>
    %369 = math.tanh %368 : vector<8x128xf32>
    %370 = arith.mulf %365, %369 : vector<8x128xf32>
    %c0_92 = arith.constant 0 : index
    %c0_93 = arith.constant 0 : index
    %371 = vector.load %arg8[%c0_92, %c0_93] : memref<24x18xf32, #tpu.memory_space<vmem>>, vector<24x18xf32>
    %c0_94 = arith.constant 0 : index
    %c0_95 = arith.constant 0 : index
    %372 = vector.load %arg9[%c0_94, %c0_95] : memref<40x8xf32, #tpu.memory_space<vmem>>, vector<40x8xf32>
    %c128 = arith.constant 128 : index
    %c0_96 = arith.constant 0 : index
    %373 = vector.load %arg0[%c128, %c0_96] : memref<146x64xf32, #tpu.memory_space<vmem>>, vector<18x64xf32>
    %c0_97 = arith.constant 0 : index
    %c0_98 = arith.constant 0 : index
    %374 = vector.load %arg3[%c0_97, %c0_98] : memref<64x128xbf16, #tpu.memory_space<vmem>>, vector<64x128xbf16>
    %375 = arith.truncf %373 : vector<18x64xf32> to vector<18x64xbf16>
    %cst_99 = arith.constant dense<0.000000e+00> : vector<18x128xf32>
    %376 = tpu.matmul %375, %374, %cst_99 {dimension_numbers = #tpu.dot_dimension_numbers<[1], [0], [0], [1], [0, 0, 1, 1], [], []>} : vector<18x64xbf16>, vector<64x128xbf16>, vector<18x128xf32> -> vector<18x128xf32>
    %377 = vector.broadcast %2 : vector<1x128xf32> to vector<18x128xf32>
    %378 = arith.mulf %376, %377 : vector<18x128xf32>
    %379 = vector.broadcast %3 : vector<1x128xf32> to vector<18x128xf32>
    %380 = arith.addf %378, %379 : vector<18x128xf32>
    %cst_100 = arith.constant 0.000000e+00 : f32
    %381 = vector.broadcast %cst_100 : f32 to vector<18x128xf32>
    %382 = arith.maximumf %380, %381 : vector<18x128xf32>
    %383 = vector.extract_strided_slice %371 {offsets = [0, 0], sizes = [8, 18], strides = [1, 1]} : vector<24x18xf32> to vector<8x18xf32>
    %384 = vector.extract_strided_slice %372 {offsets = [0, 0], sizes = [18, 8], strides = [1, 1]} : vector<40x8xf32> to vector<18x8xf32>
    %c0_101 = arith.constant 0 : index
    %c0_102 = arith.constant 0 : index
    %385 = vector.load %arg6[%c0_101, %c0_102] : memref<896x256xbf16, #tpu.memory_space<vmem>>, vector<128x256xbf16>
    %c128_103 = arith.constant 128 : index
    %c0_104 = arith.constant 0 : index
    %386 = vector.load %arg6[%c128_103, %c0_104] : memref<896x256xbf16, #tpu.memory_space<vmem>>, vector<256x256xbf16>
    %387 = arith.truncf %383 : vector<8x18xf32> to vector<8x18xbf16>
    %388 = arith.truncf %382 : vector<18x128xf32> to vector<18x128xbf16>
    %cst_105 = arith.constant dense<0.000000e+00> : vector<8x128xf32>
    %389 = tpu.matmul %387, %388, %cst_105 {dimension_numbers = #tpu.dot_dimension_numbers<[1], [0], [0], [1], [0, 0, 1, 1], [], []>} : vector<8x18xbf16>, vector<18x128xbf16>, vector<8x128xf32> -> vector<8x128xf32>
    %cst_106 = arith.constant 0.111111112 : f32
    %390 = vector.broadcast %cst_106 : f32 to vector<8x128xf32>
    %391 = arith.mulf %389, %390 : vector<8x128xf32>
    %392 = arith.truncf %391 : vector<8x128xf32> to vector<8x128xbf16>
    %cst_107 = arith.constant dense<0.000000e+00> : vector<8x256xf32>
    %393 = tpu.matmul %392, %385, %cst_107 {dimension_numbers = #tpu.dot_dimension_numbers<[1], [0], [0], [1], [0, 0, 1, 1], [], []>} : vector<8x128xbf16>, vector<128x256xbf16>, vector<8x256xf32> -> vector<8x256xf32>
    %cst_108 = arith.constant 0.000000e+00 : f32
    %394 = vector.broadcast %cst_108 : f32 to vector<8x256xf32>
    %395 = arith.maximumf %393, %394 : vector<8x256xf32>
    %396 = arith.truncf %395 : vector<8x256xf32> to vector<8x256xbf16>
    %cst_109 = arith.constant dense<0.000000e+00> : vector<8x256xf32>
    %397 = tpu.matmul %396, %386, %cst_109 {dimension_numbers = #tpu.dot_dimension_numbers<[1], [0], [0], [1], [0, 0, 1, 1], [], []>} : vector<8x256xbf16>, vector<256x256xbf16>, vector<8x256xf32> -> vector<8x256xf32>
    %398 = vector.extract_strided_slice %397 {offsets = [0, 0], sizes = [8, 128], strides = [1, 1]} : vector<8x256xf32> to vector<8x128xf32>
    %399 = arith.negf %398 : vector<8x128xf32>
    %400 = math.exp %399 : vector<8x128xf32>
    %cst_110 = arith.constant 1.000000e+00 : f32
    %401 = vector.broadcast %cst_110 : f32 to vector<8x128xf32>
    %402 = arith.addf %401, %400 : vector<8x128xf32>
    %403 = arith.divf %401, %402 : vector<8x128xf32>
    %404 = arith.truncf %384 : vector<18x8xf32> to vector<18x8xbf16>
    %405 = arith.truncf %403 : vector<8x128xf32> to vector<8x128xbf16>
    %cst_111 = arith.constant dense<0.000000e+00> : vector<18x128xf32>
    %406 = tpu.matmul %404, %405, %cst_111 {dimension_numbers = #tpu.dot_dimension_numbers<[1], [0], [0], [1], [0, 0, 1, 1], [], []>} : vector<18x8xbf16>, vector<8x128xbf16>, vector<18x128xf32> -> vector<18x128xf32>
    %407 = arith.mulf %382, %406 : vector<18x128xf32>
    %408 = vector.extract_strided_slice %407 {offsets = [0, 0], sizes = [14, 128], strides = [1, 1]} : vector<18x128xf32> to vector<14x128xf32>
    %c0_112 = arith.constant 0 : index
    %c0_113 = arith.constant 0 : index
    %c0_114 = arith.constant 0 : index
    %409 = vector.load %arg4[%c0_112, %c0_113, %c0_114] : memref<5x128x256xbf16, #tpu.memory_space<vmem>>, vector<1x128x256xbf16>
    %410 = vector.shape_cast %409 : vector<1x128x256xbf16> to vector<128x256xbf16>
    %411 = arith.truncf %408 : vector<14x128xf32> to vector<14x128xbf16>
    %cst_115 = arith.constant dense<0.000000e+00> : vector<14x256xf32>
    %412 = tpu.matmul %411, %410, %cst_115 {dimension_numbers = #tpu.dot_dimension_numbers<[1], [0], [0], [1], [0, 0, 1, 1], [], []>} : vector<14x128xbf16>, vector<128x256xbf16>, vector<14x256xf32> -> vector<14x256xf32>
    %413 = vector.extract_strided_slice %407 {offsets = [1, 0], sizes = [14, 128], strides = [1, 1]} : vector<18x128xf32> to vector<14x128xf32>
    %c1 = arith.constant 1 : index
    %c0_116 = arith.constant 0 : index
    %c0_117 = arith.constant 0 : index
    %414 = vector.load %arg4[%c1, %c0_116, %c0_117] : memref<5x128x256xbf16, #tpu.memory_space<vmem>>, vector<1x128x256xbf16>
    %415 = vector.shape_cast %414 : vector<1x128x256xbf16> to vector<128x256xbf16>
    %416 = arith.truncf %413 : vector<14x128xf32> to vector<14x128xbf16>
    %cst_118 = arith.constant dense<0.000000e+00> : vector<14x256xf32>
    %417 = tpu.matmul %416, %415, %cst_118 {dimension_numbers = #tpu.dot_dimension_numbers<[1], [0], [0], [1], [0, 0, 1, 1], [], []>} : vector<14x128xbf16>, vector<128x256xbf16>, vector<14x256xf32> -> vector<14x256xf32>
    %418 = arith.addf %412, %417 : vector<14x256xf32>
    %419 = vector.extract_strided_slice %407 {offsets = [2, 0], sizes = [14, 128], strides = [1, 1]} : vector<18x128xf32> to vector<14x128xf32>
    %c2 = arith.constant 2 : index
    %c0_119 = arith.constant 0 : index
    %c0_120 = arith.constant 0 : index
    %420 = vector.load %arg4[%c2, %c0_119, %c0_120] : memref<5x128x256xbf16, #tpu.memory_space<vmem>>, vector<1x128x256xbf16>
    %421 = vector.shape_cast %420 : vector<1x128x256xbf16> to vector<128x256xbf16>
    %422 = arith.truncf %419 : vector<14x128xf32> to vector<14x128xbf16>
    %cst_121 = arith.constant dense<0.000000e+00> : vector<14x256xf32>
    %423 = tpu.matmul %422, %421, %cst_121 {dimension_numbers = #tpu.dot_dimension_numbers<[1], [0], [0], [1], [0, 0, 1, 1], [], []>} : vector<14x128xbf16>, vector<128x256xbf16>, vector<14x256xf32> -> vector<14x256xf32>
    %424 = arith.addf %418, %423 : vector<14x256xf32>
    %425 = vector.extract_strided_slice %407 {offsets = [3, 0], sizes = [14, 128], strides = [1, 1]} : vector<18x128xf32> to vector<14x128xf32>
    %c3 = arith.constant 3 : index
    %c0_122 = arith.constant 0 : index
    %c0_123 = arith.constant 0 : index
    %426 = vector.load %arg4[%c3, %c0_122, %c0_123] : memref<5x128x256xbf16, #tpu.memory_space<vmem>>, vector<1x128x256xbf16>
    %427 = vector.shape_cast %426 : vector<1x128x256xbf16> to vector<128x256xbf16>
    %428 = arith.truncf %425 : vector<14x128xf32> to vector<14x128xbf16>
    %cst_124 = arith.constant dense<0.000000e+00> : vector<14x256xf32>
    %429 = tpu.matmul %428, %427, %cst_124 {dimension_numbers = #tpu.dot_dimension_numbers<[1], [0], [0], [1], [0, 0, 1, 1], [], []>} : vector<14x128xbf16>, vector<128x256xbf16>, vector<14x256xf32> -> vector<14x256xf32>
    %430 = arith.addf %424, %429 : vector<14x256xf32>
    %431 = vector.extract_strided_slice %407 {offsets = [4, 0], sizes = [14, 128], strides = [1, 1]} : vector<18x128xf32> to vector<14x128xf32>
    %c4 = arith.constant 4 : index
    %c0_125 = arith.constant 0 : index
    %c0_126 = arith.constant 0 : index
    %432 = vector.load %arg4[%c4, %c0_125, %c0_126] : memref<5x128x256xbf16, #tpu.memory_space<vmem>>, vector<1x128x256xbf16>
    %433 = vector.shape_cast %432 : vector<1x128x256xbf16> to vector<128x256xbf16>
    %434 = arith.truncf %431 : vector<14x128xf32> to vector<14x128xbf16>
    %cst_127 = arith.constant dense<0.000000e+00> : vector<14x256xf32>
    %435 = tpu.matmul %434, %433, %cst_127 {dimension_numbers = #tpu.dot_dimension_numbers<[1], [0], [0], [1], [0, 0, 1, 1], [], []>} : vector<14x128xbf16>, vector<128x256xbf16>, vector<14x256xf32> -> vector<14x256xf32>
    %436 = arith.addf %430, %435 : vector<14x256xf32>
    %437 = vector.broadcast %4 : vector<1x256xf32> to vector<14x256xf32>
    %438 = arith.mulf %436, %437 : vector<14x256xf32>
    %439 = vector.broadcast %5 : vector<1x256xf32> to vector<14x256xf32>
    %440 = arith.addf %438, %439 : vector<14x256xf32>
    %cst_128 = arith.constant 0.000000e+00 : f32
    %441 = vector.broadcast %cst_128 : f32 to vector<14x256xf32>
    %442 = arith.maximumf %440, %441 : vector<14x256xf32>
    %443 = vector.extract_strided_slice %371 {offsets = [8, 0], sizes = [8, 14], strides = [1, 1]} : vector<24x18xf32> to vector<8x14xf32>
    %444 = vector.extract_strided_slice %372 {offsets = [24, 0], sizes = [14, 8], strides = [1, 1]} : vector<40x8xf32> to vector<14x8xf32>
    %c384 = arith.constant 384 : index
    %c0_129 = arith.constant 0 : index
    %445 = vector.load %arg6[%c384, %c0_129] : memref<896x256xbf16, #tpu.memory_space<vmem>>, vector<256x256xbf16>
    %c640 = arith.constant 640 : index
    %c0_130 = arith.constant 0 : index
    %446 = vector.load %arg6[%c640, %c0_130] : memref<896x256xbf16, #tpu.memory_space<vmem>>, vector<256x256xbf16>
    %447 = arith.truncf %443 : vector<8x14xf32> to vector<8x14xbf16>
    %448 = arith.truncf %442 : vector<14x256xf32> to vector<14x256xbf16>
    %cst_131 = arith.constant dense<0.000000e+00> : vector<8x256xf32>
    %449 = tpu.matmul %447, %448, %cst_131 {dimension_numbers = #tpu.dot_dimension_numbers<[1], [0], [0], [1], [0, 0, 1, 1], [], []>} : vector<8x14xbf16>, vector<14x256xbf16>, vector<8x256xf32> -> vector<8x256xf32>
    %cst_132 = arith.constant 2.000000e-01 : f32
    %450 = vector.broadcast %cst_132 : f32 to vector<8x256xf32>
    %451 = arith.mulf %449, %450 : vector<8x256xf32>
    %452 = arith.truncf %451 : vector<8x256xf32> to vector<8x256xbf16>
    %cst_133 = arith.constant dense<0.000000e+00> : vector<8x256xf32>
    %453 = tpu.matmul %452, %445, %cst_133 {dimension_numbers = #tpu.dot_dimension_numbers<[1], [0], [0], [1], [0, 0, 1, 1], [], []>} : vector<8x256xbf16>, vector<256x256xbf16>, vector<8x256xf32> -> vector<8x256xf32>
    %cst_134 = arith.constant 0.000000e+00 : f32
    %454 = vector.broadcast %cst_134 : f32 to vector<8x256xf32>
    %455 = arith.maximumf %453, %454 : vector<8x256xf32>
    %456 = arith.truncf %455 : vector<8x256xf32> to vector<8x256xbf16>
    %cst_135 = arith.constant dense<0.000000e+00> : vector<8x256xf32>
    %457 = tpu.matmul %456, %446, %cst_135 {dimension_numbers = #tpu.dot_dimension_numbers<[1], [0], [0], [1], [0, 0, 1, 1], [], []>} : vector<8x256xbf16>, vector<256x256xbf16>, vector<8x256xf32> -> vector<8x256xf32>
    %458 = arith.negf %457 : vector<8x256xf32>
    %459 = math.exp %458 : vector<8x256xf32>
    %cst_136 = arith.constant 1.000000e+00 : f32
    %460 = vector.broadcast %cst_136 : f32 to vector<8x256xf32>
    %461 = arith.addf %460, %459 : vector<8x256xf32>
    %462 = arith.divf %460, %461 : vector<8x256xf32>
    %463 = arith.truncf %444 : vector<14x8xf32> to vector<14x8xbf16>
    %464 = arith.truncf %462 : vector<8x256xf32> to vector<8x256xbf16>
    %cst_137 = arith.constant dense<0.000000e+00> : vector<14x256xf32>
    %465 = tpu.matmul %463, %464, %cst_137 {dimension_numbers = #tpu.dot_dimension_numbers<[1], [0], [0], [1], [0, 0, 1, 1], [], []>} : vector<14x8xbf16>, vector<8x256xbf16>, vector<14x256xf32> -> vector<14x256xf32>
    %466 = arith.mulf %442, %465 : vector<14x256xf32>
    %467 = vector.extract_strided_slice %466 {offsets = [0, 0], sizes = [12, 256], strides = [1, 1]} : vector<14x256xf32> to vector<12x256xf32>
    %c0_138 = arith.constant 0 : index
    %c0_139 = arith.constant 0 : index
    %c0_140 = arith.constant 0 : index
    %468 = vector.load %arg5[%c0_138, %c0_139, %c0_140] : memref<3x256x128xbf16, #tpu.memory_space<vmem>>, vector<1x256x128xbf16>
    %469 = vector.shape_cast %468 : vector<1x256x128xbf16> to vector<256x128xbf16>
    %470 = arith.truncf %467 : vector<12x256xf32> to vector<12x256xbf16>
    %cst_141 = arith.constant dense<0.000000e+00> : vector<12x128xf32>
    %471 = tpu.matmul %470, %469, %cst_141 {dimension_numbers = #tpu.dot_dimension_numbers<[1], [0], [0], [1], [0, 0, 1, 1], [], []>} : vector<12x256xbf16>, vector<256x128xbf16>, vector<12x128xf32> -> vector<12x128xf32>
    %472 = vector.extract_strided_slice %466 {offsets = [1, 0], sizes = [12, 256], strides = [1, 1]} : vector<14x256xf32> to vector<12x256xf32>
    %c1_142 = arith.constant 1 : index
    %c0_143 = arith.constant 0 : index
    %c0_144 = arith.constant 0 : index
    %473 = vector.load %arg5[%c1_142, %c0_143, %c0_144] : memref<3x256x128xbf16, #tpu.memory_space<vmem>>, vector<1x256x128xbf16>
    %474 = vector.shape_cast %473 : vector<1x256x128xbf16> to vector<256x128xbf16>
    %475 = arith.truncf %472 : vector<12x256xf32> to vector<12x256xbf16>
    %cst_145 = arith.constant dense<0.000000e+00> : vector<12x128xf32>
    %476 = tpu.matmul %475, %474, %cst_145 {dimension_numbers = #tpu.dot_dimension_numbers<[1], [0], [0], [1], [0, 0, 1, 1], [], []>} : vector<12x256xbf16>, vector<256x128xbf16>, vector<12x128xf32> -> vector<12x128xf32>
    %477 = arith.addf %471, %476 : vector<12x128xf32>
    %478 = vector.extract_strided_slice %466 {offsets = [2, 0], sizes = [12, 256], strides = [1, 1]} : vector<14x256xf32> to vector<12x256xf32>
    %c2_146 = arith.constant 2 : index
    %c0_147 = arith.constant 0 : index
    %c0_148 = arith.constant 0 : index
    %479 = vector.load %arg5[%c2_146, %c0_147, %c0_148] : memref<3x256x128xbf16, #tpu.memory_space<vmem>>, vector<1x256x128xbf16>
    %480 = vector.shape_cast %479 : vector<1x256x128xbf16> to vector<256x128xbf16>
    %481 = arith.truncf %478 : vector<12x256xf32> to vector<12x256xbf16>
    %cst_149 = arith.constant dense<0.000000e+00> : vector<12x128xf32>
    %482 = tpu.matmul %481, %480, %cst_149 {dimension_numbers = #tpu.dot_dimension_numbers<[1], [0], [0], [1], [0, 0, 1, 1], [], []>} : vector<12x256xbf16>, vector<256x128xbf16>, vector<12x128xf32> -> vector<12x128xf32>
    %483 = arith.addf %477, %482 : vector<12x128xf32>
    %484 = vector.broadcast %6 : vector<1x128xf32> to vector<12x128xf32>
    %485 = arith.mulf %483, %484 : vector<12x128xf32>
    %486 = vector.broadcast %7 : vector<1x128xf32> to vector<12x128xf32>
    %487 = arith.addf %485, %486 : vector<12x128xf32>
    %cst_150 = arith.constant 0.000000e+00 : f32
    %488 = vector.broadcast %cst_150 : f32 to vector<12x128xf32>
    %489 = arith.maximumf %487, %488 : vector<12x128xf32>
    %490 = vector.extract_strided_slice %371 {offsets = [16, 0], sizes = [8, 12], strides = [1, 1]} : vector<24x18xf32> to vector<8x12xf32>
    %491 = arith.truncf %490 : vector<8x12xf32> to vector<8x12xbf16>
    %492 = arith.truncf %489 : vector<12x128xf32> to vector<12x128xbf16>
    %cst_151 = arith.constant dense<0.000000e+00> : vector<8x128xf32>
    %493 = tpu.matmul %491, %492, %cst_151 {dimension_numbers = #tpu.dot_dimension_numbers<[1], [0], [0], [1], [0, 0, 1, 1], [], []>} : vector<8x12xbf16>, vector<12x128xbf16>, vector<8x128xf32> -> vector<8x128xf32>
    %cst_152 = arith.constant 0.333333343 : f32
    %494 = vector.broadcast %cst_152 : f32 to vector<8x128xf32>
    %495 = arith.mulf %493, %494 : vector<8x128xf32>
    %c0_153 = arith.constant 0 : index
    %c0_154 = arith.constant 0 : index
    %496 = vector.load %arg7[%c0_153, %c0_154] : memref<256x128xbf16, #tpu.memory_space<vmem>>, vector<128x128xbf16>
    %497 = arith.truncf %370 : vector<8x128xf32> to vector<8x128xbf16>
    %cst_155 = arith.constant dense<0.000000e+00> : vector<8x128xf32>
    %498 = tpu.matmul %497, %496, %cst_155 {dimension_numbers = #tpu.dot_dimension_numbers<[1], [0], [0], [1], [0, 0, 1, 1], [], []>} : vector<8x128xbf16>, vector<128x128xbf16>, vector<8x128xf32> -> vector<8x128xf32>
    %c128_156 = arith.constant 128 : index
    %c0_157 = arith.constant 0 : index
    %499 = vector.load %arg7[%c128_156, %c0_157] : memref<256x128xbf16, #tpu.memory_space<vmem>>, vector<128x128xbf16>
    %500 = arith.truncf %495 : vector<8x128xf32> to vector<8x128xbf16>
    %cst_158 = arith.constant dense<0.000000e+00> : vector<8x128xf32>
    %501 = tpu.matmul %500, %499, %cst_158 {dimension_numbers = #tpu.dot_dimension_numbers<[1], [0], [0], [1], [0, 0, 1, 1], [], []>} : vector<8x128xbf16>, vector<128x128xbf16>, vector<8x128xf32> -> vector<8x128xf32>
    %502 = arith.addf %498, %501 : vector<8x128xf32>
    %503 = vector.broadcast %8 : vector<1x128xf32> to vector<8x128xf32>
    %504 = arith.addf %502, %503 : vector<8x128xf32>
    %c0_159 = arith.constant 0 : index
    %c0_160 = arith.constant 0 : index
    %505 = vector.load %arg10[%c0_159, %c0_160] : memref<8x128xf32, #tpu.memory_space<vmem>>, vector<8x128xf32>
    tpu.vector_store %arg10[%c0_159, %c0_160], %504 {strides = array<i32>} : memref<8x128xf32, #tpu.memory_space<vmem>>, vector<8x128xf32>,
    return
  }
}

</mosaic_0001>

<llo_original>
// kernel: mlstm_fcn_forward.1
$region0: #{mlstm_fcn_forward.1}
  #allocation0 [shape = 'u32[]', space=smem, size = 0x4, offset = 0x4, fixed_abs, tag = 'smem constant byte address 0x4 - core index']
  #allocation1 [shape = 'u32[144,128]{1,0:T(1,128)}', space=vmem, size = 0x12000, scoped, tag = 'internal scratch']
  #allocation2 [shape = 'f32[128,512]{1,0:T(8,128)}', space=vmem, size = 0x40000, scoped, tag = 'scratch operand']
  %s0 = inlined_call_operand.vmem [shape: f32[146,64], index: 0, kind: input, shape index: {}]
  %s1 = inlined_call_operand.hbm [shape: bf16[192,512], index: 1, kind: input, shape index: {}]
  %s2 = inlined_call_operand.vmem [shape: f32[8,512], index: 2, kind: input, shape index: {}]
  %s3 = inlined_call_operand.vmem [shape: bf16[64,128], index: 3, kind: input, shape index: {}]
  %s4 = inlined_call_operand.hbm [shape: bf16[5,128,256], index: 4, kind: input, shape index: {}]
  %s5 = inlined_call_operand.hbm [shape: bf16[3,256,128], index: 5, kind: input, shape index: {}]
  %s6 = inlined_call_operand.vmem [shape: bf16[896,256], index: 6, kind: input, shape index: {}]
  %s7 = inlined_call_operand.vmem [shape: bf16[256,128], index: 7, kind: input, shape index: {}]
  %s8 = inlined_call_operand.vmem [shape: f32[24,18], index: 8, kind: input, shape index: {}]
  %s9 = inlined_call_operand.vmem [shape: f32[40,8], index: 9, kind: input, shape index: {}]
  %s10 = inlined_call_operand.vmem [shape: f32[8,128], index: 10, kind: output, shape index: {}]
  %s11 = sld [smem:[#allocation0]]
  $region62: #{mlstm_fcn_forward.1} parent=0
    _
  %s13 = ssub.s32 1, %s11
  %s14 = scalar_select 0, %s13, %s11
  $region1: #{mlstm_fcn_forward.1} parent=0
    #allocation3 [shape = 'u8[196608]{0}', space=vmem, size = 0x30000, scoped, tag = 'input window, operand 1, single buffered']
    #allocation4 [shape = 's32[1]{0}', space=sflag, size = 0x4, scoped, tag = 'scoped memory for mlstm_fcn_forward.1']
    #allocation5 [shape = 'u8[327680]{0}', space=vmem, size = 0x50000, scoped, tag = 'input window, operand 4, single buffered']
    #allocation6 [shape = 's32[1]{0}', space=sflag, size = 0x4, scoped, tag = 'scoped memory for mlstm_fcn_forward.1']
    #allocation7 [shape = 'u8[196608]{0}', space=vmem, size = 0x30000, scoped, tag = 'input window, operand 5, single buffered']
    %15 = vsyncpa [#allocation4], 0
    %16 = vsyncpa [#allocation6], 0
    // Predicated region
    $region2: #{mlstm_fcn_forward.1} parent=1 // pred_check
      _
    $region3: #{mlstm_fcn_forward.1} parent=1 // pred_check_branch
      %18 = sbr.rel (0) target = $region5
    $region4: #{mlstm_fcn_forward.1} parent=1 // pred_region
      _
    $region5: #{mlstm_fcn_forward.1} parent=1 // pred_fallthru
      _
    // Predicated region
    $region6: #{mlstm_fcn_forward.1} parent=1 // pred_check
      _
    $region7: #{mlstm_fcn_forward.1} parent=1 // pred_check_branch
      %20 = sbr.rel (0) target = $region9
    $region8: #{mlstm_fcn_forward.1} parent=1 // pred_region
      %s22 = ssub.s32 6144, 6144
      %23 = vsyncadd [#allocation4], %s22
      %s24 = sshll.u32 [#allocation3], 4
      %s25 = int_to_ptr.vmem [resolvable:$true] %s24
      %30 = dma.hbm_to_vmem [thread:$0]  %s1, 6144, %s25, [#allocation4], 256, 256, 16
    $region9: #{mlstm_fcn_forward.1} parent=1 // pred_fallthru
      _
    // Predicated region
    $region10: #{mlstm_fcn_forward.1} parent=1 // pred_check
      _
    $region11: #{mlstm_fcn_forward.1} parent=1 // pred_check_branch
      %32 = sbr.rel (0) target = $region13
    $region12: #{mlstm_fcn_forward.1} parent=1 // pred_region
      _
    $region13: #{mlstm_fcn_forward.1} parent=1 // pred_fallthru
      _
    // Predicated region
    $region14: #{mlstm_fcn_forward.1} parent=1 // pred_check
      _
    $region15: #{mlstm_fcn_forward.1} parent=1 // pred_check_branch
      %34 = sbr.rel (0) target = $region17
    $region16: #{mlstm_fcn_forward.1} parent=1 // pred_region
      _
    $region17: #{mlstm_fcn_forward.1} parent=1 // pred_fallthru
      _
    // Predicated region
    $region18: #{mlstm_fcn_forward.1} parent=1 // pred_check
      _
    $region19: #{mlstm_fcn_forward.1} parent=1 // pred_check_branch
      %36 = sbr.rel (0) target = $region21
    $region20: #{mlstm_fcn_forward.1} parent=1 // pred_region
      %s38 = ssub.s32 10240, 10240
      %39 = vsyncadd [#allocation6], %s38
      %s40 = sshll.u32 [#allocation5], 4
      %s41 = int_to_ptr.vmem [resolvable:$true] %s40
      %46 = dma.hbm_to_vmem [thread:$0]  %s4, 10240, %s41, [#allocation6], 128, 128, 8
    $region21: #{mlstm_fcn_forward.1} parent=1 // pred_fallthru
      _
    // Predicated region
    $region22: #{mlstm_fcn_forward.1} parent=1 // pred_check
      _
    $region23: #{mlstm_fcn_forward.1} parent=1 // pred_check_branch
      %48 = sbr.rel (0) target = $region25
    $region24: #{mlstm_fcn_forward.1} parent=1 // pred_region
      %s50 = ssub.s32 6144, 6144
      %51 = vsyncadd [#allocation6], %s50
      %s52 = sshll.u32 [#allocation7], 4
      %s53 = int_to_ptr.vmem [resolvable:$true] %s52
      %58 = dma.hbm_to_vmem [thread:$0]  %s5, 6144, %s53, [#allocation6], 64, 64, 4
    $region25: #{mlstm_fcn_forward.1} parent=1 // pred_fallthru
      _
    // Predicated region
    $region26: #{mlstm_fcn_forward.1} parent=1 // pred_check
      _
    $region27: #{mlstm_fcn_forward.1} parent=1 // pred_check_branch
      %60 = sbr.rel (0) target = $region29
    $region28: #{mlstm_fcn_forward.1} parent=1 // pred_region
      _
    $region29: #{mlstm_fcn_forward.1} parent=1 // pred_fallthru
      _
    // Predicated region
    $region30: #{mlstm_fcn_forward.1} parent=1 // pred_check
      _
    $region31: #{mlstm_fcn_forward.1} parent=1 // pred_check_branch
      %62 = sbr.rel (0) target = $region33
    $region32: #{mlstm_fcn_forward.1} parent=1 // pred_region
      _
    $region33: #{mlstm_fcn_forward.1} parent=1 // pred_fallthru
      _
    // Predicated region
    $region34: #{mlstm_fcn_forward.1} parent=1 // pred_check
      _
    $region35: #{mlstm_fcn_forward.1} parent=1 // pred_check_branch
      %64 = sbr.rel (0) target = $region37
    $region36: #{mlstm_fcn_forward.1} parent=1 // pred_region
      _
    $region37: #{mlstm_fcn_forward.1} parent=1 // pred_fallthru
      _
    // Predicated region
    $region38: #{mlstm_fcn_forward.1} parent=1 // pred_check
      _
    $region39: #{mlstm_fcn_forward.1} parent=1 // pred_check_branch
      %66 = sbr.rel (0) target = $region41
    $region40: #{mlstm_fcn_forward.1} parent=1 // pred_region
      _
    $region41: #{mlstm_fcn_forward.1} parent=1 // pred_fallthru
      _
    // Predicated region
    $region42: #{mlstm_fcn_forward.1} parent=1 // pred_check
      _
    $region43: #{mlstm_fcn_forward.1} parent=1 // pred_check_branch
      %68 = sbr.rel (0) target = $region45
    $region44: #{mlstm_fcn_forward.1} parent=1 // pred_region
      %69 = dma.done [#allocation4], 6144
    $region45: #{mlstm_fcn_forward.1} parent=1 // pred_fallthru
      _
    // Predicated region
    $region46: #{mlstm_fcn_forward.1} parent=1 // pred_check
      _
    $region47: #{mlstm_fcn_forward.1} parent=1 // pred_check_branch
      %71 = sbr.rel (0) target = $region49
    $region48: #{mlstm_fcn_forward.1} parent=1 // pred_region
      %72 = dma.done [#allocation6], 10240
    $region49: #{mlstm_fcn_forward.1} parent=1 // pred_fallthru
      _
    // Predicated region
    $region50: #{mlstm_fcn_forward.1} parent=1 // pred_check
      _
    $region51: #{mlstm_fcn_forward.1} parent=1 // pred_check_branch
      %74 = sbr.rel (0) target = $region53
    $region52: #{mlstm_fcn_forward.1} parent=1 // pred_region
      %75 = dma.done [#allocation6], 6144
    $region53: #{mlstm_fcn_forward.1} parent=1 // pred_fallthru
      _
    %v77 = vld [vmem:[%s2] sm:$0xff]
    %v78 = vld [vmem:[%s2 + $0x8] sm:$0xff]
    %v79 = vld [vmem:[%s2 + $0x10] sm:$0xff]
    %v80 = vld [vmem:[%s2 + $0x18] sm:$0xff]
    %v81 = vld [vmem:[%s0] sm:$0xff]
    %v82 = vld [vmem:[%s0 + $0x8] sm:$0xff]
    %v83 = vld [vmem:[%s0 + $0x10] sm:$0xff]
    %v84 = vld [vmem:[%s0 + $0x18] sm:$0xff]
    %v85 = vld [vmem:[%s0 + $0x20] sm:$0xff]
    %v86 = vld [vmem:[%s0 + $0x28] sm:$0xff]
    %v87 = vld [vmem:[%s0 + $0x30] sm:$0xff]
    %v88 = vld [vmem:[%s0 + $0x38] sm:$0xff]
    %v89 = vld [vmem:[%s0 + $0x40] sm:$0xff]
    %v90 = vld [vmem:[%s0 + $0x48] sm:$0xff]
    %v91 = vld [vmem:[%s0 + $0x50] sm:$0xff]
    %v92 = vld [vmem:[%s0 + $0x58] sm:$0xff]
    %v93 = vld [vmem:[%s0 + $0x60] sm:$0xff]
    %v94 = vld [vmem:[%s0 + $0x68] sm:$0xff]
    %v95 = vld [vmem:[%s0 + $0x70] sm:$0xff]
    %v96 = vld [vmem:[%s0 + $0x78] sm:$0xff]
    %v97 = vld [vmem:[#allocation3] sm:$0xff]
    %v98 = vld [vmem:[#allocation3 + $0x8] sm:$0xff]
    %v99 = vld [vmem:[#allocation3 + $0x10] sm:$0xff]
    %v100 = vld [vmem:[#allocation3 + $0x18] sm:$0xff]
    %v101 = vld [vmem:[#allocation3 + $0x20] sm:$0xff]
    %v102 = vld [vmem:[#allocation3 + $0x28] sm:$0xff]
    %v103 = vld [vmem:[#allocation3 + $0x30] sm:$0xff]
    %v104 = vld [vmem:[#allocation3 + $0x38] sm:$0xff]
    %v105 = vld [vmem:[#allocation3 + $0x40] sm:$0xff]
    %v106 = vld [vmem:[#allocation3 + $0x48] sm:$0xff]
    %v107 = vld [vmem:[#allocation3 + $0x50] sm:$0xff]
    %v108 = vld [vmem:[#allocation3 + $0x58] sm:$0xff]
    %v109 = vld [vmem:[#allocation3 + $0x60] sm:$0xff]
    %v110 = vld [vmem:[#allocation3 + $0x68] sm:$0xff]
    %v111 = vld [vmem:[#allocation3 + $0x70] sm:$0xff]
    %v112 = vld [vmem:[#allocation3 + $0x78] sm:$0xff]
    %v113 = vpack.c.bf16 %v82, %v81
    %v114 = vpack.c.bf16 %v84, %v83
    %v115 = vpack.c.bf16 %v86, %v85
    %v116 = vpack.c.bf16 %v88, %v87
    %v117 = vpack.c.bf16 %v90, %v89
    %v118 = vpack.c.bf16 %v92, %v91
    %v119 = vpack.c.bf16 %v94, %v93
    %v120 = vpack.c.bf16 %v96, %v95
    %v121 = vlaneseq
    %v122 = vshrl.u32 %v121, 7
    %v123 = vsub.s32 0, %v122
    %v124 = vrot.slane %v77, %v123
    %v125 = vlaneseq
    %v126 = vshrl.u32 %v125, 7
    %v127 = vsub.s32 0, %v126
    %v128 = vrot.slane %v78, %v127
    %v129 = vlaneseq
    %v130 = vshrl.u32 %v129, 7
    %v131 = vsub.s32 0, %v130
    %v132 = vrot.slane %v79, %v131
    %v133 = vlaneseq
    %v134 = vshrl.u32 %v133, 7
    %v135 = vsub.s32 0, %v134
    %v136 = vrot.slane %v80, %v135
    %v153 = vunpack.c.l.b16 %v97
    %v154 = vunpack.c.h.b16 %v97
    %v155 = vunpack.c.l.b16 %v98
    %v156 = vunpack.c.h.b16 %v98
    %v157 = vunpack.c.l.b16 %v99
    %v158 = vunpack.c.h.b16 %v99
    %v159 = vunpack.c.l.b16 %v100
    %v160 = vunpack.c.h.b16 %v100
    %v161 = vunpack.c.l.b16 %v101
    %v162 = vunpack.c.h.b16 %v101
    %v163 = vunpack.c.l.b16 %v102
    %v164 = vunpack.c.h.b16 %v102
    %v165 = vunpack.c.l.b16 %v103
    %v166 = vunpack.c.h.b16 %v103
    %v167 = vunpack.c.l.b16 %v104
    %v168 = vunpack.c.h.b16 %v104
    %v169 = vunpack.c.l.b16 %v105
    %v170 = vunpack.c.h.b16 %v105
    %v171 = vunpack.c.l.b16 %v106
    %v172 = vunpack.c.h.b16 %v106
    %v173 = vunpack.c.l.b16 %v107
    %v174 = vunpack.c.h.b16 %v107
    %v175 = vunpack.c.l.b16 %v108
    %v176 = vunpack.c.h.b16 %v108
    %v177 = vunpack.c.l.b16 %v109
    %v178 = vunpack.c.h.b16 %v109
    %v179 = vunpack.c.l.b16 %v110
    %v180 = vunpack.c.h.b16 %v110
    %v181 = vunpack.c.l.b16 %v111
    %v182 = vunpack.c.h.b16 %v111
    %v183 = vunpack.c.l.b16 %v112
    %v184 = vunpack.c.h.b16 %v112
    %v185 = vpack.c.b16 %v157, %v153
    %v186 = vpack.c.b16 %v158, %v154
    %v187 = vpack.c.b16 %v159, %v155
    %v188 = vpack.c.b16 %v160, %v156
    %v189 = vpack.c.b16 %v165, %v161
    %v190 = vpack.c.b16 %v166, %v162
    %v191 = vpack.c.b16 %v167, %v163
    %v192 = vpack.c.b16 %v168, %v164
    %v193 = vpack.c.b16 %v173, %v169
    %v194 = vpack.c.b16 %v174, %v170
    %v195 = vpack.c.b16 %v175, %v171
    %v196 = vpack.c.b16 %v176, %v172
    %v197 = vpack.c.b16 %v181, %v177
    %v198 = vpack.c.b16 %v182, %v178
    %v199 = vpack.c.b16 %v183, %v179
    %v200 = vpack.c.b16 %v184, %v180
    %vm217 = vcmask 523264
    %v219 = vsel %vm217, %v113, 0
    %v222 = vsel %vm217, %v114, 0
    %v225 = vsel %vm217, %v115, 0
    %v228 = vsel %vm217, %v116, 0
    %v231 = vsel %vm217, %v117, 0
    %v234 = vsel %vm217, %v118, 0
    %v237 = vsel %vm217, %v119, 0
    %v240 = vsel %vm217, %v120, 0
    %242 = vmatprep.subr.bf16.mxu0 %v186
    %243 = vmatpush1.bf16.msra.mxu0 %v185
    %244 = vmatprep.subr.bf16.mxu0 %v190
    %245 = vmatpush1.bf16.msra.mxu0 %v189
    %246 = vmatprep.subr.bf16.mxu0 %v194
    %247 = vmatpush1.bf16.msra.mxu0 %v193
    %248 = vmatprep.subr.bf16.mxu0 %v198
    %249 = vmatpush1.bf16.msra.mxu0 %v197
    %250 = vmatprep.subr.bf16.mxu0 0
    %251 = vmatpush1.bf16.msra.mxu0 0
    %252 = vmatprep.subr.bf16.mxu0 0
    %253 = vmatpush1.bf16.msra.mxu0 0
    %254 = vmatprep.subr.bf16.mxu0 0
    %255 = vmatpush1.bf16.msra.mxu0 0
    %256 = vmatprep.subr.bf16.mxu0 0
    %257 = vmatpush1.bf16.msra.mxu0 0
    %258 = vmatprep.subr.bf16.mxu0 0
    %259 = vmatpush1.bf16.msra.mxu0 0
    %260 = vmatprep.subr.bf16.mxu0 0
    %261 = vmatpush1.bf16.msra.mxu0 0
    %262 = vmatprep.subr.bf16.mxu0 0
    %263 = vmatpush1.bf16.msra.mxu0 0
    %264 = vmatprep.subr.bf16.mxu0 0
    %265 = vmatpush1.bf16.msra.mxu0 0
    %266 = vmatprep.subr.bf16.mxu0 0
    %267 = vmatpush1.bf16.msra.mxu0 0
    %268 = vmatprep.subr.bf16.mxu0 0
    %269 = vmatpush1.bf16.msra.mxu0 0
    %270 = vmatprep.subr.bf16.mxu0 0
    %271 = vmatpush1.bf16.msra.mxu0 0
    %272 = vmatprep.subr.bf16.mxu0 0
    %273 = vmatpush1.bf16.msra.mxu0 0
    %274 = vmatprep.mubr.bf16.mxu0 0
    %275 = vmatmul.mubr.bf16.gmra.mrb[0].mxu0 %v219
    %v276 = vpop.f32.mrb[0].mxu0
    %v277 = vadd.f32 %v124, %v276
    %v278 = vpop.f32.mrb[0].mxu0
    %v279 = vadd.f32 %v128, %v278
    %v280 = vpop.f32.mrb[0].mxu0
    %v281 = vadd.f32 %v124, %v280
    %v282 = vpop.f32.mrb[0].mxu0
    %v283 = vadd.f32 %v128, %v282
    %284 = vmatprep.mubr.bf16.mxu0 0
    %285 = vmatmul.mubr.bf16.gmra.mrb[0].mxu0 %v222
    %v286 = vpop.f32.mrb[0].mxu0
    %v287 = vadd.f32 %v124, %v286
    %v288 = vpop.f32.mrb[0].mxu0
    %v289 = vadd.f32 %v128, %v288
    %v290 = vpop.f32.mrb[0].mxu0
    %v291 = vadd.f32 %v124, %v290
    %v292 = vpop.f32.mrb[0].mxu0
    %v293 = vadd.f32 %v128, %v292
    %294 = vmatprep.mubr.bf16.mxu0 0
    %295 = vmatmul.mubr.bf16.gmra.mrb[0].mxu0 %v225
    %v296 = vpop.f32.mrb[0].mxu0
    %v297 = vadd.f32 %v124, %v296
    %v298 = vpop.f32.mrb[0].mxu0
    %v299 = vadd.f32 %v128, %v298
    %v300 = vpop.f32.mrb[0].mxu0
    %v301 = vadd.f32 %v124, %v300
    %v302 = vpop.f32.mrb[0].mxu0
    %v303 = vadd.f32 %v128, %v302
    %304 = vmatprep.mubr.bf16.mxu0 0
    %305 = vmatmul.mubr.bf16.gmra.mrb[0].mxu0 %v228
    %v306 = vpop.f32.mrb[0].mxu0
    %v307 = vadd.f32 %v124, %v306
    %v308 = vpop.f32.mrb[0].mxu0
    %v309 = vadd.f32 %v128, %v308
    %v310 = vpop.f32.mrb[0].mxu0
    %v311 = vadd.f32 %v124, %v310
    %v312 = vpop.f32.mrb[0].mxu0
    %v313 = vadd.f32 %v128, %v312
    %314 = vmatprep.mubr.bf16.mxu0 0
    %315 = vmatmul.mubr.bf16.gmra.mrb[0].mxu0 %v231
    %v316 = vpop.f32.mrb[0].mxu0
    %v317 = vadd.f32 %v124, %v316
    %v318 = vpop.f32.mrb[0].mxu0
    %v319 = vadd.f32 %v128, %v318
    %v320 = vpop.f32.mrb[0].mxu0
    %v321 = vadd.f32 %v124, %v320
    %v322 = vpop.f32.mrb[0].mxu0
    %v323 = vadd.f32 %v128, %v322
    %324 = vmatprep.mubr.bf16.mxu0 0
    %325 = vmatmul.mubr.bf16.gmra.mrb[0].mxu0 %v234
    %v326 = vpop.f32.mrb[0].mxu0
    %v327 = vadd.f32 %v124, %v326
    %v328 = vpop.f32.mrb[0].mxu0
    %v329 = vadd.f32 %v128, %v328
    %v330 = vpop.f32.mrb[0].mxu0
    %v331 = vadd.f32 %v124, %v330
    %v332 = vpop.f32.mrb[0].mxu0
    %v333 = vadd.f32 %v128, %v332
    %334 = vmatprep.mubr.bf16.mxu0 0
    %335 = vmatmul.mubr.bf16.gmra.mrb[0].mxu0 %v237
    %v336 = vpop.f32.mrb[0].mxu0
    %v337 = vadd.f32 %v124, %v336
    %v338 = vpop.f32.mrb[0].mxu0
    %v339 = vadd.f32 %v128, %v338
    %v340 = vpop.f32.mrb[0].mxu0
    %v341 = vadd.f32 %v124, %v340
    %v342 = vpop.f32.mrb[0].mxu0
    %v343 = vadd.f32 %v128, %v342
    %344 = vmatprep.mubr.bf16.mxu0 0
    %345 = vmatmul.mubr.bf16.gmra.mrb[0].mxu0 %v240
    %v346 = vpop.f32.mrb[0].mxu0
    %v347 = vadd.f32 %v124, %v346
    %v348 = vpop.f32.mrb[0].mxu0
    %v349 = vadd.f32 %v128, %v348
    %v350 = vpop.f32.mrb[0].mxu0
    %v351 = vadd.f32 %v124, %v350
    %v352 = vpop.f32.mrb[0].mxu0
    %v353 = vadd.f32 %v128, %v352
    %354 = vdwg.mxu0
    %355 = vmatprep.subr.bf16.mxu0 %v188
    %356 = vmatpush1.bf16.msra.mxu0 %v187
    %357 = vmatprep.subr.bf16.mxu0 %v192
    %358 = vmatpush1.bf16.msra.mxu0 %v191
    %359 = vmatprep.subr.bf16.mxu0 %v196
    %360 = vmatpush1.bf16.msra.mxu0 %v195
    %361 = vmatprep.subr.bf16.mxu0 %v200
    %362 = vmatpush1.bf16.msra.mxu0 %v199
    %363 = vmatprep.subr.bf16.mxu0 0
    %364 = vmatpush1.bf16.msra.mxu0 0
    %365 = vmatprep.subr.bf16.mxu0 0
    %366 = vmatpush1.bf16.msra.mxu0 0
    %367 = vmatprep.subr.bf16.mxu0 0
    %368 = vmatpush1.bf16.msra.mxu0 0
    %369 = vmatprep.subr.bf16.mxu0 0
    %370 = vmatpush1.bf16.msra.mxu0 0
    %371 = vmatprep.subr.bf16.mxu0 0
    %372 = vmatpush1.bf16.msra.mxu0 0
    %373 = vmatprep.subr.bf16.mxu0 0
    %374 = vmatpush1.bf16.msra.mxu0 0
    %375 = vmatprep.subr.bf16.mxu0 0
    %376 = vmatpush1.bf16.msra.mxu0 0
    %377 = vmatprep.subr.bf16.mxu0 0
    %378 = vmatpush1.bf16.msra.mxu0 0
    %379 = vmatprep.subr.bf16.mxu0 0
    %380 = vmatpush1.bf16.msra.mxu0 0
    %381 = vmatprep.subr.bf16.mxu0 0
    %382 = vmatpush1.bf16.msra.mxu0 0
    %383 = vmatprep.subr.bf16.mxu0 0
    %384 = vmatpush1.bf16.msra.mxu0 0
    %385 = vmatprep.subr.bf16.mxu0 0
    %386 = vmatpush1.bf16.msra.mxu0 0
    %387 = vmatprep.mubr.bf16.mxu0 0
    %388 = vmatmul.mubr.bf16.gmra.mrb[0].mxu0 %v219
    %v389 = vpop.f32.mrb[0].mxu0
    %v390 = vadd.f32 %v132, %v389
    %v391 = vpop.f32.mrb[0].mxu0
    %v392 = vadd.f32 %v136, %v391
    %v393 = vpop.f32.mrb[0].mxu0
    %v394 = vadd.f32 %v132, %v393
    %v395 = vpop.f32.mrb[0].mxu0
    %v396 = vadd.f32 %v136, %v395
    %397 = vmatprep.mubr.bf16.mxu0 0
    %398 = vmatmul.mubr.bf16.gmra.mrb[0].mxu0 %v222
    %v399 = vpop.f32.mrb[0].mxu0
    %v400 = vadd.f32 %v132, %v399
    %v401 = vpop.f32.mrb[0].mxu0
    %v402 = vadd.f32 %v136, %v401
    %v403 = vpop.f32.mrb[0].mxu0
    %v404 = vadd.f32 %v132, %v403
    %v405 = vpop.f32.mrb[0].mxu0
    %v406 = vadd.f32 %v136, %v405
    %407 = vmatprep.mubr.bf16.mxu0 0
    %408 = vmatmul.mubr.bf16.gmra.mrb[0].mxu0 %v225
    %v409 = vpop.f32.mrb[0].mxu0
    %v410 = vadd.f32 %v132, %v409
    %v411 = vpop.f32.mrb[0].mxu0
    %v412 = vadd.f32 %v136, %v411
    %v413 = vpop.f32.mrb[0].mxu0
    %v414 = vadd.f32 %v132, %v413
    %v415 = vpop.f32.mrb[0].mxu0
    %v416 = vadd.f32 %v136, %v415
    %417 = vmatprep.mubr.bf16.mxu0 0
    %418 = vmatmul.mubr.bf16.gmra.mrb[0].mxu0 %v228
    %v419 = vpop.f32.mrb[0].mxu0
    %v420 = vadd.f32 %v132, %v419
    %v421 = vpop.f32.mrb[0].mxu0
    %v422 = vadd.f32 %v136, %v421
    %v423 = vpop.f32.mrb[0].mxu0
    %v424 = vadd.f32 %v132, %v423
    %v425 = vpop.f32.mrb[0].mxu0
    %v426 = vadd.f32 %v136, %v425
    %427 = vmatprep.mubr.bf16.mxu0 0
    %428 = vmatmul.mubr.bf16.gmra.mrb[0].mxu0 %v231
    %v429 = vpop.f32.mrb[0].mxu0
    %v430 = vadd.f32 %v132, %v429
    %v431 = vpop.f32.mrb[0].mxu0
    %v432 = vadd.f32 %v136, %v431
    %v433 = vpop.f32.mrb[0].mxu0
    %v434 = vadd.f32 %v132, %v433
    %v435 = vpop.f32.mrb[0].mxu0
    %v436 = vadd.f32 %v136, %v435
    %437 = vmatprep.mubr.bf16.mxu0 0
    %438 = vmatmul.mubr.bf16.gmra.mrb[0].mxu0 %v234
    %v439 = vpop.f32.mrb[0].mxu0
    %v440 = vadd.f32 %v132, %v439
    %v441 = vpop.f32.mrb[0].mxu0
    %v442 = vadd.f32 %v136, %v441
    %v443 = vpop.f32.mrb[0].mxu0
    %v444 = vadd.f32 %v132, %v443
    %v445 = vpop.f32.mrb[0].mxu0
    %v446 = vadd.f32 %v136, %v445
    %447 = vmatprep.mubr.bf16.mxu0 0
    %448 = vmatmul.mubr.bf16.gmra.mrb[0].mxu0 %v237
    %v449 = vpop.f32.mrb[0].mxu0
    %v450 = vadd.f32 %v132, %v449
    %v451 = vpop.f32.mrb[0].mxu0
    %v452 = vadd.f32 %v136, %v451
    %v453 = vpop.f32.mrb[0].mxu0
    %v454 = vadd.f32 %v132, %v453
    %v455 = vpop.f32.mrb[0].mxu0
    %v456 = vadd.f32 %v136, %v455
    %457 = vmatprep.mubr.bf16.mxu0 0
    %458 = vmatmul.mubr.bf16.gmra.mrb[0].mxu0 %v240
    %v459 = vpop.f32.mrb[0].mxu0
    %v460 = vadd.f32 %v132, %v459
    %v461 = vpop.f32.mrb[0].mxu0
    %v462 = vadd.f32 %v136, %v461
    %v463 = vpop.f32.mrb[0].mxu0
    %v464 = vadd.f32 %v132, %v463
    %v465 = vpop.f32.mrb[0].mxu0
    %v466 = vadd.f32 %v136, %v465
    %467 = vdwg.mxu0
    %468 = vst [vmem:[#allocation2] sm:$0xff] %v277
    %469 = vst [vmem:[#allocation2 + $0x8] sm:$0xff] %v279
    %470 = vst [vmem:[#allocation2 + $0x10] sm:$0xff] %v390
    %471 = vst [vmem:[#allocation2 + $0x18] sm:$0xff] %v392
    %472 = vst [vmem:[#allocation2 + $0x20] sm:$0xff] %v281
    %473 = vst [vmem:[#allocation2 + $0x28] sm:$0xff] %v283
    %474 = vst [vmem:[#allocation2 + $0x30] sm:$0xff] %v394
    %475 = vst [vmem:[#allocation2 + $0x38] sm:$0xff] %v396
    %476 = vst [vmem:[#allocation2 + $0x40] sm:$0xff] %v287
    %477 = vst [vmem:[#allocation2 + $0x48] sm:$0xff] %v289
    %478 = vst [vmem:[#allocation2 + $0x50] sm:$0xff] %v400
    %479 = vst [vmem:[#allocation2 + $0x58] sm:$0xff] %v402
    %480 = vst [vmem:[#allocation2 + $0x60] sm:$0xff] %v291
    %481 = vst [vmem:[#allocation2 + $0x68] sm:$0xff] %v293
    %482 = vst [vmem:[#allocation2 + $0x70] sm:$0xff] %v404
    %483 = vst [vmem:[#allocation2 + $0x78] sm:$0xff] %v406
    %484 = vst [vmem:[#allocation2 + $0x80] sm:$0xff] %v297
    %485 = vst [vmem:[#allocation2 + $0x88] sm:$0xff] %v299
    %486 = vst [vmem:[#allocation2 + $0x90] sm:$0xff] %v410
    %487 = vst [vmem:[#allocation2 + $0x98] sm:$0xff] %v412
    %488 = vst [vmem:[#allocation2 + $0xa0] sm:$0xff] %v301
    %489 = vst [vmem:[#allocation2 + $0xa8] sm:$0xff] %v303
    %490 = vst [vmem:[#allocation2 + $0xb0] sm:$0xff] %v414
    %491 = vst [vmem:[#allocation2 + $0xb8] sm:$0xff] %v416
    %492 = vst [vmem:[#allocation2 + $0xc0] sm:$0xff] %v307
    %493 = vst [vmem:[#allocation2 + $0xc8] sm:$0xff] %v309
    %494 = vst [vmem:[#allocation2 + $0xd0] sm:$0xff] %v420
    %495 = vst [vmem:[#allocation2 + $0xd8] sm:$0xff] %v422
    %496 = vst [vmem:[#allocation2 + $0xe0] sm:$0xff] %v311
    %497 = vst [vmem:[#allocation2 + $0xe8] sm:$0xff] %v313
    %498 = vst [vmem:[#allocation2 + $0xf0] sm:$0xff] %v424
    %499 = vst [vmem:[#allocation2 + $0xf8] sm:$0xff] %v426
    %500 = vst [vmem:[#allocation2 + $0x100] sm:$0xff] %v317
    %501 = vst [vmem:[#allocation2 + $0x108] sm:$0xff] %v319
    %502 = vst [vmem:[#allocation2 + $0x110] sm:$0xff] %v430
    %503 = vst [vmem:[#allocation2 + $0x118] sm:$0xff] %v432
    %504 = vst [vmem:[#allocation2 + $0x120] sm:$0xff] %v321
    %505 = vst [vmem:[#allocation2 + $0x128] sm:$0xff] %v323
    %506 = vst [vmem:[#allocation2 + $0x130] sm:$0xff] %v434
    %507 = vst [vmem:[#allocation2 + $0x138] sm:$0xff] %v436
    %508 = vst [vmem:[#allocation2 + $0x140] sm:$0xff] %v327
    %509 = vst [vmem:[#allocation2 + $0x148] sm:$0xff] %v329
    %510 = vst [vmem:[#allocation2 + $0x150] sm:$0xff] %v440
    %511 = vst [vmem:[#allocation2 + $0x158] sm:$0xff] %v442
    %512 = vst [vmem:[#allocation2 + $0x160] sm:$0xff] %v331
    %513 = vst [vmem:[#allocation2 + $0x168] sm:$0xff] %v333
    %514 = vst [vmem:[#allocation2 + $0x170] sm:$0xff] %v444
    %515 = vst [vmem:[#allocation2 + $0x178] sm:$0xff] %v446
    %516 = vst [vmem:[#allocation2 + $0x180] sm:$0xff] %v337
    %517 = vst [vmem:[#allocation2 + $0x188] sm:$0xff] %v339
    %518 = vst [vmem:[#allocation2 + $0x190] sm:$0xff] %v450
    %519 = vst [vmem:[#allocation2 + $0x198] sm:$0xff] %v452
    %520 = vst [vmem:[#allocation2 + $0x1a0] sm:$0xff] %v341
    %521 = vst [vmem:[#allocation2 + $0x1a8] sm:$0xff] %v343
    %522 = vst [vmem:[#allocation2 + $0x1b0] sm:$0xff] %v454
    %523 = vst [vmem:[#allocation2 + $0x1b8] sm:$0xff] %v456
    %524 = vst [vmem:[#allocation2 + $0x1c0] sm:$0xff] %v347
    %525 = vst [vmem:[#allocation2 + $0x1c8] sm:$0xff] %v349
    %526 = vst [vmem:[#allocation2 + $0x1d0] sm:$0xff] %v460
    %527 = vst [vmem:[#allocation2 + $0x1d8] sm:$0xff] %v462
    %528 = vst [vmem:[#allocation2 + $0x1e0] sm:$0xff] %v351
    %529 = vst [vmem:[#allocation2 + $0x1e8] sm:$0xff] %v353
    %530 = vst [vmem:[#allocation2 + $0x1f0] sm:$0xff] %v464
    %531 = vst [vmem:[#allocation2 + $0x1f8] sm:$0xff] %v466
    %v532 = vld [vmem:[#allocation3 + $0x80] sm:$0xff]
    %v533 = vld [vmem:[#allocation3 + $0x88] sm:$0xff]
    %v534 = vld [vmem:[#allocation3 + $0x90] sm:$0xff]
    %v535 = vld [vmem:[#allocation3 + $0x98] sm:$0xff]
    %v536 = vld [vmem:[#allocation3 + $0xa0] sm:$0xff]
    %v537 = vld [vmem:[#allocation3 + $0xa8] sm:$0xff]
    %v538 = vld [vmem:[#allocation3 + $0xb0] sm:$0xff]
    %v539 = vld [vmem:[#allocation3 + $0xb8] sm:$0xff]
    %v540 = vld [vmem:[#allocation3 + $0xc0] sm:$0xff]
    %v541 = vld [vmem:[#allocation3 + $0xc8] sm:$0xff]
    %v542 = vld [vmem:[#allocation3 + $0xd0] sm:$0xff]
    %v543 = vld [vmem:[#allocation3 + $0xd8] sm:$0xff]
    %v544 = vld [vmem:[#allocation3 + $0xe0] sm:$0xff]
    %v545 = vld [vmem:[#allocation3 + $0xe8] sm:$0xff]
    %v546 = vld [vmem:[#allocation3 + $0xf0] sm:$0xff]
    %v547 = vld [vmem:[#allocation3 + $0xf8] sm:$0xff]
    %v548 = vld [vmem:[#allocation3 + $0x100] sm:$0xff]
    %v549 = vld [vmem:[#allocation3 + $0x108] sm:$0xff]
    %v550 = vld [vmem:[#allocation3 + $0x110] sm:$0xff]
    %v551 = vld [vmem:[#allocation3 + $0x118] sm:$0xff]
    %v552 = vld [vmem:[#allocation3 + $0x120] sm:$0xff]
    %v553 = vld [vmem:[#allocation3 + $0x128] sm:$0xff]
    %v554 = vld [vmem:[#allocation3 + $0x130] sm:$0xff]
    %v555 = vld [vmem:[#allocation3 + $0x138] sm:$0xff]
    %v556 = vld [vmem:[#allocation3 + $0x140] sm:$0xff]
    %v557 = vld [vmem:[#allocation3 + $0x148] sm:$0xff]
    %v558 = vld [vmem:[#allocation3 + $0x150] sm:$0xff]
    %v559 = vld [vmem:[#allocation3 + $0x158] sm:$0xff]
    %v560 = vld [vmem:[#allocation3 + $0x160] sm:$0xff]
    %v561 = vld [vmem:[#allocation3 + $0x168] sm:$0xff]
    %v562 = vld [vmem:[#allocation3 + $0x170] sm:$0xff]
    %v563 = vld [vmem:[#allocation3 + $0x178] sm:$0xff]
    %v564 = vld [vmem:[#allocation2] sm:$0xff]
    %v565 = vld [vmem:[#allocation2 + $0x8] sm:$0xff]
    %v566 = vld [vmem:[#allocation2 + $0x10] sm:$0xff]
    %v567 = vld [vmem:[#allocation2 + $0x18] sm:$0xff]
    %v600 = vunpack.c.l.b16 %v532
    %v601 = vunpack.c.h.b16 %v532
    %v602 = vunpack.c.l.b16 %v533
    %v603 = vunpack.c.h.b16 %v533
    %v604 = vunpack.c.l.b16 %v534
    %v605 = vunpack.c.h.b16 %v534
    %v606 = vunpack.c.l.b16 %v535
    %v607 = vunpack.c.h.b16 %v535
    %v608 = vunpack.c.l.b16 %v536
    %v609 = vunpack.c.h.b16 %v536
    %v610 = vunpack.c.l.b16 %v537
    %v611 = vunpack.c.h.b16 %v537
    %v612 = vunpack.c.l.b16 %v538
    %v613 = vunpack.c.h.b16 %v538
    %v614 = vunpack.c.l.b16 %v539
    %v615 = vunpack.c.h.b16 %v539
    %v616 = vunpack.c.l.b16 %v540
    %v617 = vunpack.c.h.b16 %v540
    %v618 = vunpack.c.l.b16 %v541
    %v619 = vunpack.c.h.b16 %v541
    %v620 = vunpack.c.l.b16 %v542
    %v621 = vunpack.c.h.b16 %v542
    %v622 = vunpack.c.l.b16 %v543
    %v623 = vunpack.c.h.b16 %v543
    %v624 = vunpack.c.l.b16 %v544
    %v625 = vunpack.c.h.b16 %v544
    %v626 = vunpack.c.l.b16 %v545
    %v627 = vunpack.c.h.b16 %v545
    %v628 = vunpack.c.l.b16 %v546
    %v629 = vunpack.c.h.b16 %v546
    %v630 = vunpack.c.l.b16 %v547
    %v631 = vunpack.c.h.b16 %v547
    %v632 = vunpack.c.l.b16 %v548
    %v633 = vunpack.c.h.b16 %v548
    %v634 = vunpack.c.l.b16 %v549
    %v635 = vunpack.c.h.b16 %v549
    %v636 = vunpack.c.l.b16 %v550
    %v637 = vunpack.c.h.b16 %v550
    %v638 = vunpack.c.l.b16 %v551
    %v639 = vunpack.c.h.b16 %v551
    %v640 = vunpack.c.l.b16 %v552
    %v641 = vunpack.c.h.b16 %v552
    %v642 = vunpack.c.l.b16 %v553
    %v643 = vunpack.c.h.b16 %v553
    %v644 = vunpack.c.l.b16 %v554
    %v645 = vunpack.c.h.b16 %v554
    %v646 = vunpack.c.l.b16 %v555
    %v647 = vunpack.c.h.b16 %v555
    %v648 = vunpack.c.l.b16 %v556
    %v649 = vunpack.c.h.b16 %v556
    %v650 = vunpack.c.l.b16 %v557
    %v651 = vunpack.c.h.b16 %v557
    %v652 = vunpack.c.l.b16 %v558
    %v653 = vunpack.c.h.b16 %v558
    %v654 = vunpack.c.l.b16 %v559
    %v655 = vunpack.c.h.b16 %v559
    %v656 = vunpack.c.l.b16 %v560
    %v657 = vunpack.c.h.b16 %v560
    %v658 = vunpack.c.l.b16 %v561
    %v659 = vunpack.c.h.b16 %v561
    %v660 = vunpack.c.l.b16 %v562
    %v661 = vunpack.c.h.b16 %v562
    %v662 = vunpack.c.l.b16 %v563
    %v663 = vunpack.c.h.b16 %v563
    %v664 = vpack.c.b16 %v604, %v600
    %v665 = vpack.c.b16 %v605, %v601
    %v666 = vpack.c.b16 %v606, %v602
    %v667 = vpack.c.b16 %v607, %v603
    %v668 = vpack.c.b16 %v612, %v608
    %v669 = vpack.c.b16 %v613, %v609
    %v670 = vpack.c.b16 %v614, %v610
    %v671 = vpack.c.b16 %v615, %v611
    %v672 = vpack.c.b16 %v620, %v616
    %v673 = vpack.c.b16 %v621, %v617
    %v674 = vpack.c.b16 %v622, %v618
    %v675 = vpack.c.b16 %v623, %v619
    %v676 = vpack.c.b16 %v628, %v624
    %v677 = vpack.c.b16 %v629, %v625
    %v678 = vpack.c.b16 %v630, %v626
    %v679 = vpack.c.b16 %v631, %v627
    %v680 = vpack.c.b16 %v636, %v632
    %v681 = vpack.c.b16 %v637, %v633
    %v682 = vpack.c.b16 %v638, %v634
    %v683 = vpack.c.b16 %v639, %v635
    %v684 = vpack.c.b16 %v644, %v640
    %v685 = vpack.c.b16 %v645, %v641
    %v686 = vpack.c.b16 %v646, %v642
    %v687 = vpack.c.b16 %v647, %v643
    %v688 = vpack.c.b16 %v652, %v648
    %v689 = vpack.c.b16 %v653, %v649
    %v690 = vpack.c.b16 %v654, %v650
    %v691 = vpack.c.b16 %v655, %v651
    %v692 = vpack.c.b16 %v660, %v656
    %v693 = vpack.c.b16 %v661, %v657
    %v694 = vpack.c.b16 %v662, %v658
    %v695 = vpack.c.b16 %v663, %v659
    %728 = vmatprep.subr.bf16.mxu0 %v665
    %729 = vmatpush1.bf16.msra.mxu0 %v664
    %730 = vmatprep.subr.bf16.mxu0 %v669
    %731 = vmatpush1.bf16.msra.mxu0 %v668
    %732 = vmatprep.subr.bf16.mxu0 %v673
    %733 = vmatpush1.bf16.msra.mxu0 %v672
    %734 = vmatprep.subr.bf16.mxu0 %v677
    %735 = vmatpush1.bf16.msra.mxu0 %v676
    %736 = vmatprep.subr.bf16.mxu0 %v681
    %737 = vmatpush1.bf16.msra.mxu0 %v680
    %738 = vmatprep.subr.bf16.mxu0 %v685
    %739 = vmatpush1.bf16.msra.mxu0 %v684
    %740 = vmatprep.subr.bf16.mxu0 %v689
    %741 = vmatpush1.bf16.msra.mxu0 %v688
    %742 = vmatprep.subr.bf16.mxu0 %v693
    %743 = vmatpush1.bf16.msra.mxu0 %v692
    %744 = vmatprep.subr.bf16.mxu0 0
    %745 = vmatpush1.bf16.msra.mxu0 0
    %746 = vmatprep.subr.bf16.mxu0 0
    %747 = vmatpush1.bf16.msra.mxu0 0
    %748 = vmatprep.subr.bf16.mxu0 0
    %749 = vmatpush1.bf16.msra.mxu0 0
    %750 = vmatprep.subr.bf16.mxu0 0
    %751 = vmatpush1.bf16.msra.mxu0 0
    %752 = vmatprep.subr.bf16.mxu0 0
    %753 = vmatpush1.bf16.msra.mxu0 0
    %754 = vmatprep.subr.bf16.mxu0 0
    %755 = vmatpush1.bf16.msra.mxu0 0
    %756 = vmatprep.subr.bf16.mxu0 0
    %757 = vmatpush1.bf16.msra.mxu0 0
    %758 = vmatprep.subr.bf16.mxu0 0
    %759 = vmatpush1.bf16.msra.mxu0 0
    %760 = vmatprep.mubr.bf16.mxu0 0
    %761 = vmatmul.mubr.bf16.gmra.mrb[0].mxu0 0
    %v762 = vpop.f32.mrb[0].mxu0
    %v763 = vadd.f32 0.0, %v762
    %v764 = vpop.f32.mrb[0].mxu0
    %v765 = vadd.f32 0.0, %v764
    %v766 = vpop.f32.mrb[0].mxu0
    %v767 = vpop.f32.mrb[0].mxu0
    %768 = vdwg.mxu0
    %769 = vmatprep.subr.bf16.mxu0 %v667
    %770 = vmatpush1.bf16.msra.mxu0 %v666
    %771 = vmatprep.subr.bf16.mxu0 %v671
    %772 = vmatpush1.bf16.msra.mxu0 %v670
    %773 = vmatprep.subr.bf16.mxu0 %v675
    %774 = vmatpush1.bf16.msra.mxu0 %v674
    %775 = vmatprep.subr.bf16.mxu0 %v679
    %776 = vmatpush1.bf16.msra.mxu0 %v678
    %777 = vmatprep.subr.bf16.mxu0 %v683
    %778 = vmatpush1.bf16.msra.mxu0 %v682
    %779 = vmatprep.subr.bf16.mxu0 %v687
    %780 = vmatpush1.bf16.msra.mxu0 %v686
    %781 = vmatprep.subr.bf16.mxu0 %v691
    %782 = vmatpush1.bf16.msra.mxu0 %v690
    %783 = vmatprep.subr.bf16.mxu0 %v695
    %784 = vmatpush1.bf16.msra.mxu0 %v694
    %785 = vmatprep.subr.bf16.mxu0 0
    %786 = vmatpush1.bf16.msra.mxu0 0
    %787 = vmatprep.subr.bf16.mxu0 0
    %788 = vmatpush1.bf16.msra.mxu0 0
    %789 = vmatprep.subr.bf16.mxu0 0
    %790 = vmatpush1.bf16.msra.mxu0 0
    %791 = vmatprep.subr.bf16.mxu0 0
    %792 = vmatpush1.bf16.msra.mxu0 0
    %793 = vmatprep.subr.bf16.mxu0 0
    %794 = vmatpush1.bf16.msra.mxu0 0
    %795 = vmatprep.subr.bf16.mxu0 0
    %796 = vmatpush1.bf16.msra.mxu0 0
    %797 = vmatprep.subr.bf16.mxu0 0
    %798 = vmatpush1.bf16.msra.mxu0 0
    %799 = vmatprep.subr.bf16.mxu0 0
    %800 = vmatpush1.bf16.msra.mxu0 0
    %801 = vmatprep.mubr.bf16.mxu0 0
    %802 = vmatmul.mubr.bf16.gmra.mrb[0].mxu0 0
    %v803 = vpop.f32.mrb[0].mxu0
    %v804 = vadd.f32 0.0, %v803
    %v805 = vpop.f32.mrb[0].mxu0
    %v806 = vadd.f32 0.0, %v805
    %v807 = vpop.f32.mrb[0].mxu0
    %v808 = vpop.f32.mrb[0].mxu0
    %809 = vdwg.mxu0
    %v810 = vadd.f32 %v564, %v763
    %v811 = vadd.f32 %v565, %v765
    %v812 = vadd.f32 %v566, %v804
    %v813 = vadd.f32 %v567, %v806
    %v814 = vxor.u32 %v810, 2147483648
    %v815 = vxor.u32 %v811, 2147483648
    %v816 = vxor.u32 %v812, 2147483648
    %v817 = vxor.u32 %v813, 2147483648
    %v818 = vmul.f32 %v814, 1.442695
    %v819 = vpow.pop %v818
    %v820 = vmul.f32 %v815, 1.442695
    %v821 = vpow.pop %v820
    %v822 = vmul.f32 %v816, 1.442695
    %v823 = vpow.pop %v822
    %v824 = vmul.f32 %v817, 1.442695
    %v825 = vpow.pop %v824
    %v826 = vadd.f32 %v819, 1.0
    %v827 = vadd.f32 %v821, 1.0
    %v828 = vadd.f32 %v823, 1.0
    %v829 = vadd.f32 %v825, 1.0
    %v830 = vrcp.pop %v826
    %v831 = vmul.f32 1.0, %v830
    %v832 = vrcp.pop %v827
    %v833 = vmul.f32 1.0, %v832
    %v834 = vrcp.pop %v828
    %v835 = vmul.f32 1.0, %v834
    %v836 = vrcp.pop %v829
    %v837 = vmul.f32 1.0, %v836
    %v838 = vmul.f32 %v835, 2.0
    %v839 = vsub.f32 %v838, 1.0
    %v840 = vmul.f32 %v833, 0.0
    %v841 = vmul.f32 %v831, %v839
    %v842 = vadd.f32 %v840, %v841
    %v843 = vtanh.pop %v842
    %v844 = vmul.f32 %v837, %v843
    %v845 = vld [vmem:[#allocation2 + $0x20] sm:$0xff]
    %v846 = vld [vmem:[#allocation2 + $0x28] sm:$0xff]
    %v847 = vld [vmem:[#allocation2 + $0x30] sm:$0xff]
    %v848 = vld [vmem:[#allocation2 + $0x38] sm:$0xff]
    %v849 = vpack.c.bf16 %v844, %v844
    %850 = vmatprep.subr.bf16.mxu0 %v665
    %851 = vmatpush1.bf16.msra.mxu0 %v664
    %852 = vmatprep.subr.bf16.mxu0 %v669
    %853 = vmatpush1.bf16.msra.mxu0 %v668
    %854 = vmatprep.subr.bf16.mxu0 %v673
    %855 = vmatpush1.bf16.msra.mxu0 %v672
    %856 = vmatprep.subr.bf16.mxu0 %v677
    %857 = vmatpush1.bf16.msra.mxu0 %v676
    %858 = vmatprep.subr.bf16.mxu0 %v681
    %859 = vmatpush1.bf16.msra.mxu0 %v680
    %860 = vmatprep.subr.bf16.mxu0 %v685
    %861 = vmatpush1.bf16.msra.mxu0 %v684
    %862 = vmatprep.subr.bf16.mxu0 %v689
    %863 = vmatpush1.bf16.msra.mxu0 %v688
    %864 = vmatprep.subr.bf16.mxu0 %v693
    %865 = vmatpush1.bf16.msra.mxu0 %v692
    %866 = vmatprep.subr.bf16.mxu0 0
    %867 = vmatpush1.bf16.msra.mxu0 0
    %868 = vmatprep.subr.bf16.mxu0 0
    %869 = vmatpush1.bf16.msra.mxu0 0
    %870 = vmatprep.subr.bf16.mxu0 0
    %871 = vmatpush1.bf16.msra.mxu0 0
    %872 = vmatprep.subr.bf16.mxu0 0
    %873 = vmatpush1.bf16.msra.mxu0 0
    %874 = vmatprep.subr.bf16.mxu0 0
    %875 = vmatpush1.bf16.msra.mxu0 0
    %876 = vmatprep.subr.bf16.mxu0 0
    %877 = vmatpush1.bf16.msra.mxu0 0
    %878 = vmatprep.subr.bf16.mxu0 0
    %879 = vmatpush1.bf16.msra.mxu0 0
    %880 = vmatprep.subr.bf16.mxu0 0
    %881 = vmatpush1.bf16.msra.mxu0 0
    %882 = vmatprep.mubr.bf16.mxu0 0
    %883 = vmatmul.mubr.bf16.gmra.mrb[0].mxu0 %v849
    %v884 = vpop.f32.mrb[0].mxu0
    %v885 = vadd.f32 0.0, %v884
    %v886 = vpop.f32.mrb[0].mxu0
    %v887 = vadd.f32 0.0, %v886
    %v888 = vpop.f32.mrb[0].mxu0
    %v889 = vpop.f32.mrb[0].mxu0
    %890 = vdwg.mxu0
    %891 = vmatprep.subr.bf16.mxu0 %v667
    %892 = vmatpush1.bf16.msra.mxu0 %v666
    %893 = vmatprep.subr.bf16.mxu0 %v671
    %894 = vmatpush1.bf16.msra.mxu0 %v670
    %895 = vmatprep.subr.bf16.mxu0 %v675
    %896 = vmatpush1.bf16.msra.mxu0 %v674
    %897 = vmatprep.subr.bf16.mxu0 %v679
    %898 = vmatpush1.bf16.msra.mxu0 %v678
    %899 = vmatprep.subr.bf16.mxu0 %v683
    %900 = vmatpush1.bf16.msra.mxu0 %v682
    %901 = vmatprep.subr.bf16.mxu0 %v687
    %902 = vmatpush1.bf16.msra.mxu0 %v686
    %903 = vmatprep.subr.bf16.mxu0 %v691
    %904 = vmatpush1.bf16.msra.mxu0 %v690
    %905 = vmatprep.subr.bf16.mxu0 %v695
    %906 = vmatpush1.bf16.msra.mxu0 %v694
    %907 = vmatprep.subr.bf16.mxu0 0
    %908 = vmatpush1.bf16.msra.mxu0 0
    %909 = vmatprep.subr.bf16.mxu0 0
    %910 = vmatpush1.bf16.msra.mxu0 0
    %911 = vmatprep.subr.bf16.mxu0 0
    %912 = vmatpush1.bf16.msra.mxu0 0
    %913 = vmatprep.subr.bf16.mxu0 0
    %914 = vmatpush1.bf16.msra.mxu0 0
    %915 = vmatprep.subr.bf16.mxu0 0
    %916 = vmatpush1.bf16.msra.mxu0 0
    %917 = vmatprep.subr.bf16.mxu0 0
    %918 = vmatpush1.bf16.msra.mxu0 0
    %919 = vmatprep.subr.bf16.mxu0 0
    %920 = vmatpush1.bf16.msra.mxu0 0
    %921 = vmatprep.subr.bf16.mxu0 0
    %922 = vmatpush1.bf16.msra.mxu0 0
    %923 = vmatprep.mubr.bf16.mxu0 0
    %924 = vmatmul.mubr.bf16.gmra.mrb[0].mxu0 %v849
    %v925 = vpop.f32.mrb[0].mxu0
    %v926 = vadd.f32 0.0, %v925
    %v927 = vpop.f32.mrb[0].mxu0
    %v928 = vadd.f32 0.0, %v927
    %v929 = vpop.f32.mrb[0].mxu0
    %v930 = vpop.f32.mrb[0].mxu0
    %931 = vdwg.mxu0
    %v932 = vadd.f32 %v845, %v885
    %v933 = vadd.f32 %v846, %v887
    %v934 = vadd.f32 %v847, %v926
    %v935 = vadd.f32 %v848, %v928
    %v936 = vxor.u32 %v932, 2147483648
    %v937 = vxor.u32 %v933, 2147483648
    %v938 = vxor.u32 %v934, 2147483648
    %v939 = vxor.u32 %v935, 2147483648
    %v940 = vmul.f32 %v936, 1.442695
    %v941 = vpow.pop %v940
    %v942 = vmul.f32 %v937, 1.442695
    %v943 = vpow.pop %v942
    %v944 = vmul.f32 %v938, 1.442695
    %v945 = vpow.pop %v944
    %v946 = vmul.f32 %v939, 1.442695
    %v947 = vpow.pop %v946
    %v948 = vadd.f32 %v941, 1.0
    %v949 = vadd.f32 %v943, 1.0
    %v950 = vadd.f32 %v945, 1.0
    %v951 = vadd.f32 %v947, 1.0
    %v952 = vrcp.pop %v948
    %v953 = vmul.f32 1.0, %v952
    %v954 = vrcp.pop %v949
    %v955 = vmul.f32 1.0, %v954
    %v956 = vrcp.pop %v950
    %v957 = vmul.f32 1.0, %v956
    %v958 = vrcp.pop %v951
    %v959 = vmul.f32 1.0, %v958
    %v960 = vmul.f32 %v957, 2.0
    %v961 = vsub.f32 %v960, 1.0
    %v962 = vmul.f32 %v955, %v842
    %v963 = vmul.f32 %v953, %v961
    %v964 = vadd.f32 %v962, %v963
    %v965 = vtanh.pop %v964
    %v966 = vmul.f32 %v959, %v965
    %v967 = vld [vmem:[#allocation2 + $0x40] sm:$0xff]
    %v968 = vld [vmem:[#allocation2 + $0x48] sm:$0xff]
    %v969 = vld [vmem:[#allocation2 + $0x50] sm:$0xff]
    %v970 = vld [vmem:[#allocation2 + $0x58] sm:$0xff]
    %v971 = vpack.c.bf16 %v966, %v966
    %972 = vmatprep.subr.bf16.mxu0 %v665
    %973 = vmatpush1.bf16.msra.mxu0 %v664
    %974 = vmatprep.subr.bf16.mxu0 %v669
    %975 = vmatpush1.bf16.msra.mxu0 %v668
    %976 = vmatprep.subr.bf16.mxu0 %v673
    %977 = vmatpush1.bf16.msra.mxu0 %v672
    %978 = vmatprep.subr.bf16.mxu0 %v677
    %979 = vmatpush1.bf16.msra.mxu0 %v676
    %980 = vmatprep.subr.bf16.mxu0 %v681
    %981 = vmatpush1.bf16.msra.mxu0 %v680
    %982 = vmatprep.subr.bf16.mxu0 %v685
    %983 = vmatpush1.bf16.msra.mxu0 %v684
    %984 = vmatprep.subr.bf16.mxu0 %v689
    %985 = vmatpush1.bf16.msra.mxu0 %v688
    %986 = vmatprep.subr.bf16.mxu0 %v693
    %987 = vmatpush1.bf16.msra.mxu0 %v692
    %988 = vmatprep.subr.bf16.mxu0 0
    %989 = vmatpush1.bf16.msra.mxu0 0
    %990 = vmatprep.subr.bf16.mxu0 0
    %991 = vmatpush1.bf16.msra.mxu0 0
    %992 = vmatprep.subr.bf16.mxu0 0
    %993 = vmatpush1.bf16.msra.mxu0 0
    %994 = vmatprep.subr.bf16.mxu0 0
    %995 = vmatpush1.bf16.msra.mxu0 0
    %996 = vmatprep.subr.bf16.mxu0 0
    %997 = vmatpush1.bf16.msra.mxu0 0
    %998 = vmatprep.subr.bf16.mxu0 0
    %999 = vmatpush1.bf16.msra.mxu0 0
    %1000 = vmatprep.subr.bf16.mxu0 0
    %1001 = vmatpush1.bf16.msra.mxu0 0
    %1002 = vmatprep.subr.bf16.mxu0 0
    %1003 = vmatpush1.bf16.msra.mxu0 0
    %1004 = vmatprep.mubr.bf16.mxu0 0
    %1005 = vmatmul.mubr.bf16.gmra.mrb[0].mxu0 %v971
    %v1006 = vpop.f32.mrb[0].mxu0
    %v1007 = vadd.f32 0.0, %v1006
    %v1008 = vpop.f32.mrb[0].mxu0
    %v1009 = vadd.f32 0.0, %v1008
    %v1010 = vpop.f32.mrb[0].mxu0
    %v1011 = vpop.f32.mrb[0].mxu0
    %1012 = vdwg.mxu0
    %1013 = vmatprep.subr.bf16.mxu0 %v667
    %1014 = vmatpush1.bf16.msra.mxu0 %v666
    %1015 = vmatprep.subr.bf16.mxu0 %v671
    %1016 = vmatpush1.bf16.msra.mxu0 %v670
    %1017 = vmatprep.subr.bf16.mxu0 %v675
    %1018 = vmatpush1.bf16.msra.mxu0 %v674
    %1019 = vmatprep.subr.bf16.mxu0 %v679
    %1020 = vmatpush1.bf16.msra.mxu0 %v678
    %1021 = vmatprep.subr.bf16.mxu0 %v683
    %1022 = vmatpush1.bf16.msra.mxu0 %v682
    %1023 = vmatprep.subr.bf16.mxu0 %v687
    %1024 = vmatpush1.bf16.msra.mxu0 %v686
    %1025 = vmatprep.subr.bf16.mxu0 %v691
    %1026 = vmatpush1.bf16.msra.mxu0 %v690
    %1027 = vmatprep.subr.bf16.mxu0 %v695
    %1028 = vmatpush1.bf16.msra.mxu0 %v694
    %1029 = vmatprep.subr.bf16.mxu0 0
    %1030 = vmatpush1.bf16.msra.mxu0 0
    %1031 = vmatprep.subr.bf16.mxu0 0
    %1032 = vmatpush1.bf16.msra.mxu0 0
    %1033 = vmatprep.subr.bf16.mxu0 0
    %1034 = vmatpush1.bf16.msra.mxu0 0
    %1035 = vmatprep.subr.bf16.mxu0 0
    %1036 = vmatpush1.bf16.msra.mxu0 0
    %1037 = vmatprep.subr.bf16.mxu0 0
    %1038 = vmatpush1.bf16.msra.mxu0 0
    %1039 = vmatprep.subr.bf16.mxu0 0
    %1040 = vmatpush1.bf16.msra.mxu0 0
    %1041 = vmatprep.subr.bf16.mxu0 0
    %1042 = vmatpush1.bf16.msra.mxu0 0
    %1043 = vmatprep.subr.bf16.mxu0 0
    %1044 = vmatpush1.bf16.msra.mxu0 0
    %1045 = vmatprep.mubr.bf16.mxu0 0
    %1046 = vmatmul.mubr.bf16.gmra.mrb[0].mxu0 %v971
    %v1047 = vpop.f32.mrb[0].mxu0
    %v1048 = vadd.f32 0.0, %v1047
    %v1049 = vpop.f32.mrb[0].mxu0
    %v1050 = vadd.f32 0.0, %v1049
    %v1051 = vpop.f32.mrb[0].mxu0
    %v1052 = vpop.f32.mrb[0].mxu0
    %1053 = vdwg.mxu0
    %v1054 = vadd.f32 %v967, %v1007
    %v1055 = vadd.f32 %v968, %v1009
    %v1056 = vadd.f32 %v969, %v1048
    %v1057 = vadd.f32 %v970, %v1050
    %v1058 = vxor.u32 %v1054, 2147483648
    %v1059 = vxor.u32 %v1055, 2147483648
    %v1060 = vxor.u32 %v1056, 2147483648
    %v1061 = vxor.u32 %v1057, 2147483648
    %v1062 = vmul.f32 %v1058, 1.442695
    %v1063 = vpow.pop %v1062
    %v1064 = vmul.f32 %v1059, 1.442695
    %v1065 = vpow.pop %v1064
    %v1066 = vmul.f32 %v1060, 1.442695
    %v1067 = vpow.pop %v1066
    %v1068 = vmul.f32 %v1061, 1.442695
    %v1069 = vpow.pop %v1068
    %v1070 = vadd.f32 %v1063, 1.0
    %v1071 = vadd.f32 %v1065, 1.0
    %v1072 = vadd.f32 %v1067, 1.0
    %v1073 = vadd.f32 %v1069, 1.0
    %v1074 = vrcp.pop %v1070
    %v1075 = vmul.f32 1.0, %v1074
    %v1076 = vrcp.pop %v1071
    %v1077 = vmul.f32 1.0, %v1076
    %v1078 = vrcp.pop %v1072
    %v1079 = vmul.f32 1.0, %v1078
    %v1080 = vrcp.pop %v1073
    %v1081 = vmul.f32 1.0, %v1080
    %v1082 = vmul.f32 %v1079, 2.0
    %v1083 = vsub.f32 %v1082, 1.0
    %v1084 = vmul.f32 %v1077, %v964
    %v1085 = vmul.f32 %v1075, %v1083
    %v1086 = vadd.f32 %v1084, %v1085
    %v1087 = vtanh.pop %v1086
    %v1088 = vmul.f32 %v1081, %v1087
    %v1089 = vld [vmem:[#allocation2 + $0x60] sm:$0xff]
    %v1090 = vld [vmem:[#allocation2 + $0x68] sm:$0xff]
    %v1091 = vld [vmem:[#allocation2 + $0x70] sm:$0xff]
    %v1092 = vld [vmem:[#allocation2 + $0x78] sm:$0xff]
    %v1093 = vpack.c.bf16 %v1088, %v1088
    %1094 = vmatprep.subr.bf16.mxu0 %v665
    %1095 = vmatpush1.bf16.msra.mxu0 %v664
    %1096 = vmatprep.subr.bf16.mxu0 %v669
    %1097 = vmatpush1.bf16.msra.mxu0 %v668
    %1098 = vmatprep.subr.bf16.mxu0 %v673
    %1099 = vmatpush1.bf16.msra.mxu0 %v672
    %1100 = vmatprep.subr.bf16.mxu0 %v677
    %1101 = vmatpush1.bf16.msra.mxu0 %v676
    %1102 = vmatprep.subr.bf16.mxu0 %v681
    %1103 = vmatpush1.bf16.msra.mxu0 %v680
    %1104 = vmatprep.subr.bf16.mxu0 %v685
    %1105 = vmatpush1.bf16.msra.mxu0 %v684
    %1106 = vmatprep.subr.bf16.mxu0 %v689
    %1107 = vmatpush1.bf16.msra.mxu0 %v688
    %1108 = vmatprep.subr.bf16.mxu0 %v693
    %1109 = vmatpush1.bf16.msra.mxu0 %v692
    %1110 = vmatprep.subr.bf16.mxu0 0
    %1111 = vmatpush1.bf16.msra.mxu0 0
    %1112 = vmatprep.subr.bf16.mxu0 0
    %1113 = vmatpush1.bf16.msra.mxu0 0
    %1114 = vmatprep.subr.bf16.mxu0 0
    %1115 = vmatpush1.bf16.msra.mxu0 0
    %1116 = vmatprep.subr.bf16.mxu0 0
    %1117 = vmatpush1.bf16.msra.mxu0 0
    %1118 = vmatprep.subr.bf16.mxu0 0
    %1119 = vmatpush1.bf16.msra.mxu0 0
    %1120 = vmatprep.subr.bf16.mxu0 0
    %1121 = vmatpush1.bf16.msra.mxu0 0
    %1122 = vmatprep.subr.bf16.mxu0 0
    %1123 = vmatpush1.bf16.msra.mxu0 0
    %1124 = vmatprep.subr.bf16.mxu0 0
    %1125 = vmatpush1.bf16.msra.mxu0 0
    %1126 = vmatprep.mubr.bf16.mxu0 0
    %1127 = vmatmul.mubr.bf16.gmra.mrb[0].mxu0 %v1093
    %v1128 = vpop.f32.mrb[0].mxu0
    %v1129 = vadd.f32 0.0, %v1128
    %v1130 = vpop.f32.mrb[0].mxu0
    %v1131 = vadd.f32 0.0, %v1130
    %v1132 = vpop.f32.mrb[0].mxu0
    %v1133 = vpop.f32.mrb[0].mxu0
    %1134 = vdwg.mxu0
    %1135 = vmatprep.subr.bf16.mxu0 %v667
    %1136 = vmatpush1.bf16.msra.mxu0 %v666
    %1137 = vmatprep.subr.bf16.mxu0 %v671
    %1138 = vmatpush1.bf16.msra.mxu0 %v670
    %1139 = vmatprep.subr.bf16.mxu0 %v675
    %1140 = vmatpush1.bf16.msra.mxu0 %v674
    %1141 = vmatprep.subr.bf16.mxu0 %v679
    %1142 = vmatpush1.bf16.msra.mxu0 %v678
    %1143 = vmatprep.subr.bf16.mxu0 %v683
    %1144 = vmatpush1.bf16.msra.mxu0 %v682
    %1145 = vmatprep.subr.bf16.mxu0 %v687
    %1146 = vmatpush1.bf16.msra.mxu0 %v686
    %1147 = vmatprep.subr.bf16.mxu0 %v691
    %1148 = vmatpush1.bf16.msra.mxu0 %v690
    %1149 = vmatprep.subr.bf16.mxu0 %v695
    %1150 = vmatpush1.bf16.msra.mxu0 %v694
    %1151 = vmatprep.subr.bf16.mxu0 0
    %1152 = vmatpush1.bf16.msra.mxu0 0
    %1153 = vmatprep.subr.bf16.mxu0 0
    %1154 = vmatpush1.bf16.msra.mxu0 0
    %1155 = vmatprep.subr.bf16.mxu0 0
    %1156 = vmatpush1.bf16.msra.mxu0 0
    %1157 = vmatprep.subr.bf16.mxu0 0
    %1158 = vmatpush1.bf16.msra.mxu0 0
    %1159 = vmatprep.subr.bf16.mxu0 0
    %1160 = vmatpush1.bf16.msra.mxu0 0
    %1161 = vmatprep.subr.bf16.mxu0 0
    %1162 = vmatpush1.bf16.msra.mxu0 0
    %1163 = vmatprep.subr.bf16.mxu0 0
    %1164 = vmatpush1.bf16.msra.mxu0 0
    %1165 = vmatprep.subr.bf16.mxu0 0
    %1166 = vmatpush1.bf16.msra.mxu0 0
    %1167 = vmatprep.mubr.bf16.mxu0 0
    %1168 = vmatmul.mubr.bf16.gmra.mrb[0].mxu0 %v1093
    %v1169 = vpop.f32.mrb[0].mxu0
    %v1170 = vadd.f32 0.0, %v1169
    %v1171 = vpop.f32.mrb[0].mxu0
    %v1172 = vadd.f32 0.0, %v1171
    %v1173 = vpop.f32.mrb[0].mxu0
    %v1174 = vpop.f32.mrb[0].mxu0
    %1175 = vdwg.mxu0
    %v1176 = vadd.f32 %v1089, %v1129
    %v1177 = vadd.f32 %v1090, %v1131
    %v1178 = vadd.f32 %v1091, %v1170
    %v1179 = vadd.f32 %v1092, %v1172
    %v1180 = vxor.u32 %v1176, 2147483648
    %v1181 = vxor.u32 %v1177, 2147483648
    %v1182 = vxor.u32 %v1178, 2147483648
    %v1183 = vxor.u32 %v1179, 2147483648
    %v1184 = vmul.f32 %v1180, 1.442695
    %v1185 = vpow.pop %v1184
    %v1186 = vmul.f32 %v1181, 1.442695
    %v1187 = vpow.pop %v1186
    %v1188 = vmul.f32 %v1182, 1.442695
    %v1189 = vpow.pop %v1188
    %v1190 = vmul.f32 %v1183, 1.442695
    %v1191 = vpow.pop %v1190
    %v1192 = vadd.f32 %v1185, 1.0
    %v1193 = vadd.f32 %v1187, 1.0
    %v1194 = vadd.f32 %v1189, 1.0
    %v1195 = vadd.f32 %v1191, 1.0
    %v1196 = vrcp.pop %v1192
    %v1197 = vmul.f32 1.0, %v1196
    %v1198 = vrcp.pop %v1193
    %v1199 = vmul.f32 1.0, %v1198
    %v1200 = vrcp.pop %v1194
    %v1201 = vmul.f32 1.0, %v1200
    %v1202 = vrcp.pop %v1195
    %v1203 = vmul.f32 1.0, %v1202
    %v1204 = vmul.f32 %v1201, 2.0
    %v1205 = vsub.f32 %v1204, 1.0
    %v1206 = vmul.f32 %v1199, %v1086
    %v1207 = vmul.f32 %v1197, %v1205
    %v1208 = vadd.f32 %v1206, %v1207
    %v1209 = vtanh.pop %v1208
    %v1210 = vmul.f32 %v1203, %v1209
    %v1211 = vld [vmem:[#allocation2 + $0x80] sm:$0xff]
    %v1212 = vld [vmem:[#allocation2 + $0x88] sm:$0xff]
    %v1213 = vld [vmem:[#allocation2 + $0x90] sm:$0xff]
    %v1214 = vld [vmem:[#allocation2 + $0x98] sm:$0xff]
    %v1215 = vpack.c.bf16 %v1210, %v1210
    %1216 = vmatprep.subr.bf16.mxu0 %v665
    %1217 = vmatpush1.bf16.msra.mxu0 %v664
    %1218 = vmatprep.subr.bf16.mxu0 %v669
    %1219 = vmatpush1.bf16.msra.mxu0 %v668
    %1220 = vmatprep.subr.bf16.mxu0 %v673
    %1221 = vmatpush1.bf16.msra.mxu0 %v672
    %1222 = vmatprep.subr.bf16.mxu0 %v677
    %1223 = vmatpush1.bf16.msra.mxu0 %v676
    %1224 = vmatprep.subr.bf16.mxu0 %v681
    %1225 = vmatpush1.bf16.msra.mxu0 %v680
    %1226 = vmatprep.subr.bf16.mxu0 %v685
    %1227 = vmatpush1.bf16.msra.mxu0 %v684
    %1228 = vmatprep.subr.bf16.mxu0 %v689
    %1229 = vmatpush1.bf16.msra.mxu0 %v688
    %1230 = vmatprep.subr.bf16.mxu0 %v693
    %1231 = vmatpush1.bf16.msra.mxu0 %v692
    %1232 = vmatprep.subr.bf16.mxu0 0
    %1233 = vmatpush1.bf16.msra.mxu0 0
    %1234 = vmatprep.subr.bf16.mxu0 0
    %1235 = vmatpush1.bf16.msra.mxu0 0
    %1236 = vmatprep.subr.bf16.mxu0 0
    %1237 = vmatpush1.bf16.msra.mxu0 0
    %1238 = vmatprep.subr.bf16.mxu0 0
    %1239 = vmatpush1.bf16.msra.mxu0 0
    %1240 = vmatprep.subr.bf16.mxu0 0
    %1241 = vmatpush1.bf16.msra.mxu0 0
    %1242 = vmatprep.subr.bf16.mxu0 0
    %1243 = vmatpush1.bf16.msra.mxu0 0
    %1244 = vmatprep.subr.bf16.mxu0 0
    %1245 = vmatpush1.bf16.msra.mxu0 0
    %1246 = vmatprep.subr.bf16.mxu0 0
    %1247 = vmatpush1.bf16.msra.mxu0 0
    %1248 = vmatprep.mubr.bf16.mxu0 0
    %1249 = vmatmul.mubr.bf16.gmra.mrb[0].mxu0 %v1215
    %v1250 = vpop.f32.mrb[0].mxu0
    %v1251 = vadd.f32 0.0, %v1250
    %v1252 = vpop.f32.mrb[0].mxu0
    %v1253 = vadd.f32 0.0, %v1252
    %v1254 = vpop.f32.mrb[0].mxu0
    %v1255 = vpop.f32.mrb[0].mxu0
    %1256 = vdwg.mxu0
    %1257 = vmatprep.subr.bf16.mxu0 %v667
    %1258 = vmatpush1.bf16.msra.mxu0 %v666
    %1259 = vmatprep.subr.bf16.mxu0 %v671
    %1260 = vmatpush1.bf16.msra.mxu0 %v670
    %1261 = vmatprep.subr.bf16.mxu0 %v675
    %1262 = vmatpush1.bf16.msra.mxu0 %v674
    %1263 = vmatprep.subr.bf16.mxu0 %v679
    %1264 = vmatpush1.bf16.msra.mxu0 %v678
    %1265 = vmatprep.subr.bf16.mxu0 %v683
    %1266 = vmatpush1.bf16.msra.mxu0 %v682
    %1267 = vmatprep.subr.bf16.mxu0 %v687
    %1268 = vmatpush1.bf16.msra.mxu0 %v686
    %1269 = vmatprep.subr.bf16.mxu0 %v691
    %1270 = vmatpush1.bf16.msra.mxu0 %v690
    %1271 = vmatprep.subr.bf16.mxu0 %v695
    %1272 = vmatpush1.bf16.msra.mxu0 %v694
    %1273 = vmatprep.subr.bf16.mxu0 0
    %1274 = vmatpush1.bf16.msra.mxu0 0
    %1275 = vmatprep.subr.bf16.mxu0 0
    %1276 = vmatpush1.bf16.msra.mxu0 0
    %1277 = vmatprep.subr.bf16.mxu0 0
    %1278 = vmatpush1.bf16.msra.mxu0 0
    %1279 = vmatprep.subr.bf16.mxu0 0
    %1280 = vmatpush1.bf16.msra.mxu0 0
    %1281 = vmatprep.subr.bf16.mxu0 0
    %1282 = vmatpush1.bf16.msra.mxu0 0
    %1283 = vmatprep.subr.bf16.mxu0 0
    %1284 = vmatpush1.bf16.msra.mxu0 0
    %1285 = vmatprep.subr.bf16.mxu0 0
    %1286 = vmatpush1.bf16.msra.mxu0 0
    %1287 = vmatprep.subr.bf16.mxu0 0
    %1288 = vmatpush1.bf16.msra.mxu0 0
    %1289 = vmatprep.mubr.bf16.mxu0 0
    %1290 = vmatmul.mubr.bf16.gmra.mrb[0].mxu0 %v1215
    %v1291 = vpop.f32.mrb[0].mxu0
    %v1292 = vadd.f32 0.0, %v1291
    %v1293 = vpop.f32.mrb[0].mxu0
    %v1294 = vadd.f32 0.0, %v1293
    %v1295 = vpop.f32.mrb[0].mxu0
    %v1296 = vpop.f32.mrb[0].mxu0
    %1297 = vdwg.mxu0
    %v1298 = vadd.f32 %v1211, %v1251
    %v1299 = vadd.f32 %v1212, %v1253
    %v1300 = vadd.f32 %v1213, %v1292
    %v1301 = vadd.f32 %v1214, %v1294
    %v1302 = vxor.u32 %v1298, 2147483648
    %v1303 = vxor.u32 %v1299, 2147483648
    %v1304 = vxor.u32 %v1300, 2147483648
    %v1305 = vxor.u32 %v1301, 2147483648
    %v1306 = vmul.f32 %v1302, 1.442695
    %v1307 = vpow.pop %v1306
    %v1308 = vmul.f32 %v1303, 1.442695
    %v1309 = vpow.pop %v1308
    %v1310 = vmul.f32 %v1304, 1.442695
    %v1311 = vpow.pop %v1310
    %v1312 = vmul.f32 %v1305, 1.442695
    %v1313 = vpow.pop %v1312
    %v1314 = vadd.f32 %v1307, 1.0
    %v1315 = vadd.f32 %v1309, 1.0
    %v1316 = vadd.f32 %v1311, 1.0
    %v1317 = vadd.f32 %v1313, 1.0
    %v1318 = vrcp.pop %v1314
    %v1319 = vmul.f32 1.0, %v1318
    %v1320 = vrcp.pop %v1315
    %v1321 = vmul.f32 1.0, %v1320
    %v1322 = vrcp.pop %v1316
    %v1323 = vmul.f32 1.0, %v1322
    %v1324 = vrcp.pop %v1317
    %v1325 = vmul.f32 1.0, %v1324
    %v1326 = vmul.f32 %v1323, 2.0
    %v1327 = vsub.f32 %v1326, 1.0
    %v1328 = vmul.f32 %v1321, %v1208
    %v1329 = vmul.f32 %v1319, %v1327
    %v1330 = vadd.f32 %v1328, %v1329
    %v1331 = vtanh.pop %v1330
    %v1332 = vmul.f32 %v1325, %v1331
    %v1333 = vld [vmem:[#allocation2 + $0xa0] sm:$0xff]
    %v1334 = vld [vmem:[#allocation2 + $0xa8] sm:$0xff]
    %v1335 = vld [vmem:[#allocation2 + $0xb0] sm:$0xff]
    %v1336 = vld [vmem:[#allocation2 + $0xb8] sm:$0xff]
    %v1337 = vpack.c.bf16 %v1332, %v1332
    %1338 = vmatprep.subr.bf16.mxu0 %v665
    %1339 = vmatpush1.bf16.msra.mxu0 %v664
    %1340 = vmatprep.subr.bf16.mxu0 %v669
    %1341 = vmatpush1.bf16.msra.mxu0 %v668
    %1342 = vmatprep.subr.bf16.mxu0 %v673
    %1343 = vmatpush1.bf16.msra.mxu0 %v672
    %1344 = vmatprep.subr.bf16.mxu0 %v677
    %1345 = vmatpush1.bf16.msra.mxu0 %v676
    %1346 = vmatprep.subr.bf16.mxu0 %v681
    %1347 = vmatpush1.bf16.msra.mxu0 %v680
    %1348 = vmatprep.subr.bf16.mxu0 %v685
    %1349 = vmatpush1.bf16.msra.mxu0 %v684
    %1350 = vmatprep.subr.bf16.mxu0 %v689
    %1351 = vmatpush1.bf16.msra.mxu0 %v688
    %1352 = vmatprep.subr.bf16.mxu0 %v693
    %1353 = vmatpush1.bf16.msra.mxu0 %v692
    %1354 = vmatprep.subr.bf16.mxu0 0
    %1355 = vmatpush1.bf16.msra.mxu0 0
    %1356 = vmatprep.subr.bf16.mxu0 0
    %1357 = vmatpush1.bf16.msra.mxu0 0
    %1358 = vmatprep.subr.bf16.mxu0 0
    %1359 = vmatpush1.bf16.msra.mxu0 0
    %1360 = vmatprep.subr.bf16.mxu0 0
    %1361 = vmatpush1.bf16.msra.mxu0 0
    %1362 = vmatprep.subr.bf16.mxu0 0
    %1363 = vmatpush1.bf16.msra.mxu0 0
    %1364 = vmatprep.subr.bf16.mxu0 0
    %1365 = vmatpush1.bf16.msra.mxu0 0
    %1366 = vmatprep.subr.bf16.mxu0 0
    %1367 = vmatpush1.bf16.msra.mxu0 0
    %1368 = vmatprep.subr.bf16.mxu0 0
    %1369 = vmatpush1.bf16.msra.mxu0 0
    %1370 = vmatprep.mubr.bf16.mxu0 0
    %1371 = vmatmul.mubr.bf16.gmra.mrb[0].mxu0 %v1337
    %v1372 = vpop.f32.mrb[0].mxu0
    %v1373 = vadd.f32 0.0, %v1372
    %v1374 = vpop.f32.mrb[0].mxu0
    %v1375 = vadd.f32 0.0, %v1374
    %v1376 = vpop.f32.mrb[0].mxu0
    %v1377 = vpop.f32.mrb[0].mxu0
    %1378 = vdwg.mxu0
    %1379 = vmatprep.subr.bf16.mxu0 %v667
    %1380 = vmatpush1.bf16.msra.mxu0 %v666
    %1381 = vmatprep.subr.bf16.mxu0 %v671
    %1382 = vmatpush1.bf16.msra.mxu0 %v670
    %1383 = vmatprep.subr.bf16.mxu0 %v675
    %1384 = vmatpush1.bf16.msra.mxu0 %v674
    %1385 = vmatprep.subr.bf16.mxu0 %v679
    %1386 = vmatpush1.bf16.msra.mxu0 %v678
    %1387 = vmatprep.subr.bf16.mxu0 %v683
    %1388 = vmatpush1.bf16.msra.mxu0 %v682
    %1389 = vmatprep.subr.bf16.mxu0 %v687
    %1390 = vmatpush1.bf16.msra.mxu0 %v686
    %1391 = vmatprep.subr.bf16.mxu0 %v691
    %1392 = vmatpush1.bf16.msra.mxu0 %v690
    %1393 = vmatprep.subr.bf16.mxu0 %v695
    %1394 = vmatpush1.bf16.msra.mxu0 %v694
    %1395 = vmatprep.subr.bf16.mxu0 0
    %1396 = vmatpush1.bf16.msra.mxu0 0
    %1397 = vmatprep.subr.bf16.mxu0 0
    %1398 = vmatpush1.bf16.msra.mxu0 0
    %1399 = vmatprep.subr.bf16.mxu0 0
    %1400 = vmatpush1.bf16.msra.mxu0 0
    %1401 = vmatprep.subr.bf16.mxu0 0
    %1402 = vmatpush1.bf16.msra.mxu0 0
    %1403 = vmatprep.subr.bf16.mxu0 0
    %1404 = vmatpush1.bf16.msra.mxu0 0
    %1405 = vmatprep.subr.bf16.mxu0 0
    %1406 = vmatpush1.bf16.msra.mxu0 0
    %1407 = vmatprep.subr.bf16.mxu0 0
    %1408 = vmatpush1.bf16.msra.mxu0 0
    %1409 = vmatprep.subr.bf16.mxu0 0
    %1410 = vmatpush1.bf16.msra.mxu0 0
    %1411 = vmatprep.mubr.bf16.mxu0 0
    %1412 = vmatmul.mubr.bf16.gmra.mrb[0].mxu0 %v1337
    %v1413 = vpop.f32.mrb[0].mxu0
    %v1414 = vadd.f32 0.0, %v1413
    %v1415 = vpop.f32.mrb[0].mxu0
    %v1416 = vadd.f32 0.0, %v1415
    %v1417 = vpop.f32.mrb[0].mxu0
    %v1418 = vpop.f32.mrb[0].mxu0
    %1419 = vdwg.mxu0
    %v1420 = vadd.f32 %v1333, %v1373
    %v1421 = vadd.f32 %v1334, %v1375
    %v1422 = vadd.f32 %v1335, %v1414
    %v1423 = vadd.f32 %v1336, %v1416
    %v1424 = vxor.u32 %v1420, 2147483648
    %v1425 = vxor.u32 %v1421, 2147483648
    %v1426 = vxor.u32 %v1422, 2147483648
    %v1427 = vxor.u32 %v1423, 2147483648
    %v1428 = vmul.f32 %v1424, 1.442695
    %v1429 = vpow.pop %v1428
    %v1430 = vmul.f32 %v1425, 1.442695
    %v1431 = vpow.pop %v1430
    %v1432 = vmul.f32 %v1426, 1.442695
    %v1433 = vpow.pop %v1432
    %v1434 = vmul.f32 %v1427, 1.442695
    %v1435 = vpow.pop %v1434
    %v1436 = vadd.f32 %v1429, 1.0
    %v1437 = vadd.f32 %v1431, 1.0
    %v1438 = vadd.f32 %v1433, 1.0
    %v1439 = vadd.f32 %v1435, 1.0
    %v1440 = vrcp.pop %v1436
    %v1441 = vmul.f32 1.0, %v1440
    %v1442 = vrcp.pop %v1437
    %v1443 = vmul.f32 1.0, %v1442
    %v1444 = vrcp.pop %v1438
    %v1445 = vmul.f32 1.0, %v1444
    %v1446 = vrcp.pop %v1439
    %v1447 = vmul.f32 1.0, %v1446
    %v1448 = vmul.f32 %v1445, 2.0
    %v1449 = vsub.f32 %v1448, 1.0
    %v1450 = vmul.f32 %v1443, %v1330
    %v1451 = vmul.f32 %v1441, %v1449
    %v1452 = vadd.f32 %v1450, %v1451
    %v1453 = vtanh.pop %v1452
    %v1454 = vmul.f32 %v1447, %v1453
    %v1455 = vld [vmem:[#allocation2 + $0xc0] sm:$0xff]
    %v1456 = vld [vmem:[#allocation2 + $0xc8] sm:$0xff]
    %v1457 = vld [vmem:[#allocation2 + $0xd0] sm:$0xff]
    %v1458 = vld [vmem:[#allocation2 + $0xd8] sm:$0xff]
    %v1459 = vpack.c.bf16 %v1454, %v1454
    %1460 = vmatprep.subr.bf16.mxu0 %v665
    %1461 = vmatpush1.bf16.msra.mxu0 %v664
    %1462 = vmatprep.subr.bf16.mxu0 %v669
    %1463 = vmatpush1.bf16.msra.mxu0 %v668
    %1464 = vmatprep.subr.bf16.mxu0 %v673
    %1465 = vmatpush1.bf16.msra.mxu0 %v672
    %1466 = vmatprep.subr.bf16.mxu0 %v677
    %1467 = vmatpush1.bf16.msra.mxu0 %v676
    %1468 = vmatprep.subr.bf16.mxu0 %v681
    %1469 = vmatpush1.bf16.msra.mxu0 %v680
    %1470 = vmatprep.subr.bf16.mxu0 %v685
    %1471 = vmatpush1.bf16.msra.mxu0 %v684
    %1472 = vmatprep.subr.bf16.mxu0 %v689
    %1473 = vmatpush1.bf16.msra.mxu0 %v688
    %1474 = vmatprep.subr.bf16.mxu0 %v693
    %1475 = vmatpush1.bf16.msra.mxu0 %v692
    %1476 = vmatprep.subr.bf16.mxu0 0
    %1477 = vmatpush1.bf16.msra.mxu0 0
    %1478 = vmatprep.subr.bf16.mxu0 0
    %1479 = vmatpush1.bf16.msra.mxu0 0
    %1480 = vmatprep.subr.bf16.mxu0 0
    %1481 = vmatpush1.bf16.msra.mxu0 0
    %1482 = vmatprep.subr.bf16.mxu0 0
    %1483 = vmatpush1.bf16.msra.mxu0 0
    %1484 = vmatprep.subr.bf16.mxu0 0
    %1485 = vmatpush1.bf16.msra.mxu0 0
    %1486 = vmatprep.subr.bf16.mxu0 0
    %1487 = vmatpush1.bf16.msra.mxu0 0
    %1488 = vmatprep.subr.bf16.mxu0 0
    %1489 = vmatpush1.bf16.msra.mxu0 0
    %1490 = vmatprep.subr.bf16.mxu0 0
    %1491 = vmatpush1.bf16.msra.mxu0 0
    %1492 = vmatprep.mubr.bf16.mxu0 0
    %1493 = vmatmul.mubr.bf16.gmra.mrb[0].mxu0 %v1459
    %v1494 = vpop.f32.mrb[0].mxu0
    %v1495 = vadd.f32 0.0, %v1494
    %v1496 = vpop.f32.mrb[0].mxu0
    %v1497 = vadd.f32 0.0, %v1496
    %v1498 = vpop.f32.mrb[0].mxu0
    %v1499 = vpop.f32.mrb[0].mxu0
    %1500 = vdwg.mxu0
    %1501 = vmatprep.subr.bf16.mxu0 %v667
    %1502 = vmatpush1.bf16.msra.mxu0 %v666
    %1503 = vmatprep.subr.bf16.mxu0 %v671
    %1504 = vmatpush1.bf16.msra.mxu0 %v670
    %1505 = vmatprep.subr.bf16.mxu0 %v675
    %1506 = vmatpush1.bf16.msra.mxu0 %v674
    %1507 = vmatprep.subr.bf16.mxu0 %v679
    %1508 = vmatpush1.bf16.msra.mxu0 %v678
    %1509 = vmatprep.subr.bf16.mxu0 %v683
    %1510 = vmatpush1.bf16.msra.mxu0 %v682
    %1511 = vmatprep.subr.bf16.mxu0 %v687
    %1512 = vmatpush1.bf16.msra.mxu0 %v686
    %1513 = vmatprep.subr.bf16.mxu0 %v691
    %1514 = vmatpush1.bf16.msra.mxu0 %v690
    %1515 = vmatprep.subr.bf16.mxu0 %v695
    %1516 = vmatpush1.bf16.msra.mxu0 %v694
    %1517 = vmatprep.subr.bf16.mxu0 0
    %1518 = vmatpush1.bf16.msra.mxu0 0
    %1519 = vmatprep.subr.bf16.mxu0 0
    %1520 = vmatpush1.bf16.msra.mxu0 0
    %1521 = vmatprep.subr.bf16.mxu0 0
    %1522 = vmatpush1.bf16.msra.mxu0 0
    %1523 = vmatprep.subr.bf16.mxu0 0
    %1524 = vmatpush1.bf16.msra.mxu0 0
    %1525 = vmatprep.subr.bf16.mxu0 0
    %1526 = vmatpush1.bf16.msra.mxu0 0
    %1527 = vmatprep.subr.bf16.mxu0 0
    %1528 = vmatpush1.bf16.msra.mxu0 0
    %1529 = vmatprep.subr.bf16.mxu0 0
    %1530 = vmatpush1.bf16.msra.mxu0 0
    %1531 = vmatprep.subr.bf16.mxu0 0
    %1532 = vmatpush1.bf16.msra.mxu0 0
    %1533 = vmatprep.mubr.bf16.mxu0 0
    %1534 = vmatmul.mubr.bf16.gmra.mrb[0].mxu0 %v1459
    %v1535 = vpop.f32.mrb[0].mxu0
    %v1536 = vadd.f32 0.0, %v1535
    %v1537 = vpop.f32.mrb[0].mxu0
    %v1538 = vadd.f32 0.0, %v1537
    %v1539 = vpop.f32.mrb[0].mxu0
    %v1540 = vpop.f32.mrb[0].mxu0
    %1541 = vdwg.mxu0
    %v1542 = vadd.f32 %v1455, %v1495
    %v1543 = vadd.f32 %v1456, %v1497
    %v1544 = vadd.f32 %v1457, %v1536
    %v1545 = vadd.f32 %v1458, %v1538
    %v1546 = vxor.u32 %v1542, 2147483648
    %v1547 = vxor.u32 %v1543, 2147483648
    %v1548 = vxor.u32 %v1544, 2147483648
    %v1549 = vxor.u32 %v1545, 2147483648
    %v1550 = vmul.f32 %v1546, 1.442695
    %v1551 = vpow.pop %v1550
    %v1552 = vmul.f32 %v1547, 1.442695
    %v1553 = vpow.pop %v1552
    %v1554 = vmul.f32 %v1548, 1.442695
    %v1555 = vpow.pop %v1554
    %v1556 = vmul.f32 %v1549, 1.442695
    %v1557 = vpow.pop %v1556
    %v1558 = vadd.f32 %v1551, 1.0
    %v1559 = vadd.f32 %v1553, 1.0
    %v1560 = vadd.f32 %v1555, 1.0
    %v1561 = vadd.f32 %v1557, 1.0
    %v1562 = vrcp.pop %v1558
    %v1563 = vmul.f32 1.0, %v1562
    %v1564 = vrcp.pop %v1559
    %v1565 = vmul.f32 1.0, %v1564
    %v1566 = vrcp.pop %v1560
    %v1567 = vmul.f32 1.0, %v1566
    %v1568 = vrcp.pop %v1561
    %v1569 = vmul.f32 1.0, %v1568
    %v1570 = vmul.f32 %v1567, 2.0
    %v1571 = vsub.f32 %v1570, 1.0
    %v1572 = vmul.f32 %v1565, %v1452
    %v1573 = vmul.f32 %v1563, %v1571
    %v1574 = vadd.f32 %v1572, %v1573
    %v1575 = vtanh.pop %v1574
    %v1576 = vmul.f32 %v1569, %v1575
    %v1577 = vld [vmem:[#allocation2 + $0xe0] sm:$0xff]
    %v1578 = vld [vmem:[#allocation2 + $0xe8] sm:$0xff]
    %v1579 = vld [vmem:[#allocation2 + $0xf0] sm:$0xff]
    %v1580 = vld [vmem:[#allocation2 + $0xf8] sm:$0xff]
    %v1581 = vpack.c.bf16 %v1576, %v1576
    %1582 = vmatprep.subr.bf16.mxu0 %v665
    %1583 = vmatpush1.bf16.msra.mxu0 %v664
    %1584 = vmatprep.subr.bf16.mxu0 %v669
    %1585 = vmatpush1.bf16.msra.mxu0 %v668
    %1586 = vmatprep.subr.bf16.mxu0 %v673
    %1587 = vmatpush1.bf16.msra.mxu0 %v672
    %1588 = vmatprep.subr.bf16.mxu0 %v677
    %1589 = vmatpush1.bf16.msra.mxu0 %v676
    %1590 = vmatprep.subr.bf16.mxu0 %v681
    %1591 = vmatpush1.bf16.msra.mxu0 %v680
    %1592 = vmatprep.subr.bf16.mxu0 %v685
    %1593 = vmatpush1.bf16.msra.mxu0 %v684
    %1594 = vmatprep.subr.bf16.mxu0 %v689
    %1595 = vmatpush1.bf16.msra.mxu0 %v688
    %1596 = vmatprep.subr.bf16.mxu0 %v693
    %1597 = vmatpush1.bf16.msra.mxu0 %v692
    %1598 = vmatprep.subr.bf16.mxu0 0
    %1599 = vmatpush1.bf16.msra.mxu0 0
    %1600 = vmatprep.subr.bf16.mxu0 0
    %1601 = vmatpush1.bf16.msra.mxu0 0
    %1602 = vmatprep.subr.bf16.mxu0 0
    %1603 = vmatpush1.bf16.msra.mxu0 0
    %1604 = vmatprep.subr.bf16.mxu0 0
    %1605 = vmatpush1.bf16.msra.mxu0 0
    %1606 = vmatprep.subr.bf16.mxu0 0
    %1607 = vmatpush1.bf16.msra.mxu0 0
    %1608 = vmatprep.subr.bf16.mxu0 0
    %1609 = vmatpush1.bf16.msra.mxu0 0
    %1610 = vmatprep.subr.bf16.mxu0 0
    %1611 = vmatpush1.bf16.msra.mxu0 0
    %1612 = vmatprep.subr.bf16.mxu0 0
    %1613 = vmatpush1.bf16.msra.mxu0 0
    %1614 = vmatprep.mubr.bf16.mxu0 0
    %1615 = vmatmul.mubr.bf16.gmra.mrb[0].mxu0 %v1581
    %v1616 = vpop.f32.mrb[0].mxu0
    %v1617 = vadd.f32 0.0, %v1616
    %v1618 = vpop.f32.mrb[0].mxu0
    %v1619 = vadd.f32 0.0, %v1618
    %v1620 = vpop.f32.mrb[0].mxu0
    %v1621 = vpop.f32.mrb[0].mxu0
    %1622 = vdwg.mxu0
    %1623 = vmatprep.subr.bf16.mxu0 %v667
    %1624 = vmatpush1.bf16.msra.mxu0 %v666
    %1625 = vmatprep.subr.bf16.mxu0 %v671
    %1626 = vmatpush1.bf16.msra.mxu0 %v670
    %1627 = vmatprep.subr.bf16.mxu0 %v675
    %1628 = vmatpush1.bf16.msra.mxu0 %v674
    %1629 = vmatprep.subr.bf16.mxu0 %v679
    %1630 = vmatpush1.bf16.msra.mxu0 %v678
    %1631 = vmatprep.subr.bf16.mxu0 %v683
    %1632 = vmatpush1.bf16.msra.mxu0 %v682
    %1633 = vmatprep.subr.bf16.mxu0 %v687
    %1634 = vmatpush1.bf16.msra.mxu0 %v686
    %1635 = vmatprep.subr.bf16.mxu0 %v691
    %1636 = vmatpush1.bf16.msra.mxu0 %v690
    %1637 = vmatprep.subr.bf16.mxu0 %v695
    %1638 = vmatpush1.bf16.msra.mxu0 %v694
    %1639 = vmatprep.subr.bf16.mxu0 0
    %1640 = vmatpush1.bf16.msra.mxu0 0
    %1641 = vmatprep.subr.bf16.mxu0 0
    %1642 = vmatpush1.bf16.msra.mxu0 0
    %1643 = vmatprep.subr.bf16.mxu0 0
    %1644 = vmatpush1.bf16.msra.mxu0 0
    %1645 = vmatprep.subr.bf16.mxu0 0
    %1646 = vmatpush1.bf16.msra.mxu0 0
    %1647 = vmatprep.subr.bf16.mxu0 0
    %1648 = vmatpush1.bf16.msra.mxu0 0
    %1649 = vmatprep.subr.bf16.mxu0 0
    %1650 = vmatpush1.bf16.msra.mxu0 0
    %1651 = vmatprep.subr.bf16.mxu0 0
    %1652 = vmatpush1.bf16.msra.mxu0 0
    %1653 = vmatprep.subr.bf16.mxu0 0
    %1654 = vmatpush1.bf16.msra.mxu0 0
    %1655 = vmatprep.mubr.bf16.mxu0 0
    %1656 = vmatmul.mubr.bf16.gmra.mrb[0].mxu0 %v1581
    %v1657 = vpop.f32.mrb[0].mxu0
    %v1658 = vadd.f32 0.0, %v1657
    %v1659 = vpop.f32.mrb[0].mxu0
    %v1660 = vadd.f32 0.0, %v1659
    %v1661 = vpop.f32.mrb[0].mxu0
    %v1662 = vpop.f32.mrb[0].mxu0
    %1663 = vdwg.mxu0
    %v1664 = vadd.f32 %v1577, %v1617
    %v1665 = vadd.f32 %v1578, %v1619
    %v1666 = vadd.f32 %v1579, %v1658
    %v1667 = vadd.f32 %v1580, %v1660
    %v1668 = vxor.u32 %v1664, 2147483648
    %v1669 = vxor.u32 %v1665, 2147483648
    %v1670 = vxor.u32 %v1666, 2147483648
    %v1671 = vxor.u32 %v1667, 2147483648
    %v1672 = vmul.f32 %v1668, 1.442695
    %v1673 = vpow.pop %v1672
    %v1674 = vmul.f32 %v1669, 1.442695
    %v1675 = vpow.pop %v1674
    %v1676 = vmul.f32 %v1670, 1.442695
    %v1677 = vpow.pop %v1676
    %v1678 = vmul.f32 %v1671, 1.442695
    %v1679 = vpow.pop %v1678
    %v1680 = vadd.f32 %v1673, 1.0
    %v1681 = vadd.f32 %v1675, 1.0
    %v1682 = vadd.f32 %v1677, 1.0
    %v1683 = vadd.f32 %v1679, 1.0
    %v1684 = vrcp.pop %v1680
    %v1685 = vmul.f32 1.0, %v1684
    %v1686 = vrcp.pop %v1681
    %v1687 = vmul.f32 1.0, %v1686
    %v1688 = vrcp.pop %v1682
    %v1689 = vmul.f32 1.0, %v1688
    %v1690 = vrcp.pop %v1683
    %v1691 = vmul.f32 1.0, %v1690
    %v1692 = vmul.f32 %v1689, 2.0
    %v1693 = vsub.f32 %v1692, 1.0
    %v1694 = vmul.f32 %v1687, %v1574
    %v1695 = vmul.f32 %v1685, %v1693
    %v1696 = vadd.f32 %v1694, %v1695
    %v1697 = vtanh.pop %v1696
    %v1698 = vmul.f32 %v1691, %v1697
    %v1699 = vld [vmem:[#allocation2 + $0x100] sm:$0xff]
    %v1700 = vld [vmem:[#allocation2 + $0x108] sm:$0xff]
    %v1701 = vld [vmem:[#allocation2 + $0x110] sm:$0xff]
    %v1702 = vld [vmem:[#allocation2 + $0x118] sm:$0xff]
    %v1703 = vpack.c.bf16 %v1698, %v1698
    %1704 = vmatprep.subr.bf16.mxu0 %v665
    %1705 = vmatpush1.bf16.msra.mxu0 %v664
    %1706 = vmatprep.subr.bf16.mxu0 %v669
    %1707 = vmatpush1.bf16.msra.mxu0 %v668
    %1708 = vmatprep.subr.bf16.mxu0 %v673
    %1709 = vmatpush1.bf16.msra.mxu0 %v672
    %1710 = vmatprep.subr.bf16.mxu0 %v677
    %1711 = vmatpush1.bf16.msra.mxu0 %v676
    %1712 = vmatprep.subr.bf16.mxu0 %v681
    %1713 = vmatpush1.bf16.msra.mxu0 %v680
    %1714 = vmatprep.subr.bf16.mxu0 %v685
    %1715 = vmatpush1.bf16.msra.mxu0 %v684
    %1716 = vmatprep.subr.bf16.mxu0 %v689
    %1717 = vmatpush1.bf16.msra.mxu0 %v688
    %1718 = vmatprep.subr.bf16.mxu0 %v693
    %1719 = vmatpush1.bf16.msra.mxu0 %v692
    %1720 = vmatprep.subr.bf16.mxu0 0
    %1721 = vmatpush1.bf16.msra.mxu0 0
    %1722 = vmatprep.subr.bf16.mxu0 0
    %1723 = vmatpush1.bf16.msra.mxu0 0
    %1724 = vmatprep.subr.bf16.mxu0 0
    %1725 = vmatpush1.bf16.msra.mxu0 0
    %1726 = vmatprep.subr.bf16.mxu0 0
    %1727 = vmatpush1.bf16.msra.mxu0 0
    %1728 = vmatprep.subr.bf16.mxu0 0
    %1729 = vmatpush1.bf16.msra.mxu0 0
    %1730 = vmatprep.subr.bf16.mxu0 0
    %1731 = vmatpush1.bf16.msra.mxu0 0
    %1732 = vmatprep.subr.bf16.mxu0 0
    %1733 = vmatpush1.bf16.msra.mxu0 0
    %1734 = vmatprep.subr.bf16.mxu0 0
    %1735 = vmatpush1.bf16.msra.mxu0 0
    %1736 = vmatprep.mubr.bf16.mxu0 0
    %1737 = vmatmul.mubr.bf16.gmra.mrb[0].mxu0 %v1703
    %v1738 = vpop.f32.mrb[0].mxu0
    %v1739 = vadd.f32 0.0, %v1738
    %v1740 = vpop.f32.mrb[0].mxu0
    %v1741 = vadd.f32 0.0, %v1740
    %v1742 = vpop.f32.mrb[0].mxu0
    %v1743 = vpop.f32.mrb[0].mxu0
    %1744 = vdwg.mxu0
    %1745 = vmatprep.subr.bf16.mxu0 %v667
    %1746 = vmatpush1.bf16.msra.mxu0 %v666
    %1747 = vmatprep.subr.bf16.mxu0 %v671
    %1748 = vmatpush1.bf16.msra.mxu0 %v670
    %1749 = vmatprep.subr.bf16.mxu0 %v675
    %1750 = vmatpush1.bf16.msra.mxu0 %v674
    %1751 = vmatprep.subr.bf16.mxu0 %v679
    %1752 = vmatpush1.bf16.msra.mxu0 %v678
    %1753 = vmatprep.subr.bf16.mxu0 %v683
    %1754 = vmatpush1.bf16.msra.mxu0 %v682
    %1755 = vmatprep.subr.bf16.mxu0 %v687
    %1756 = vmatpush1.bf16.msra.mxu0 %v686
    %1757 = vmatprep.subr.bf16.mxu0 %v691
    %1758 = vmatpush1.bf16.msra.mxu0 %v690
    %1759 = vmatprep.subr.bf16.mxu0 %v695
    %1760 = vmatpush1.bf16.msra.mxu0 %v694
    %1761 = vmatprep.subr.bf16.mxu0 0
    %1762 = vmatpush1.bf16.msra.mxu0 0
    %1763 = vmatprep.subr.bf16.mxu0 0
    %1764 = vmatpush1.bf16.msra.mxu0 0
    %1765 = vmatprep.subr.bf16.mxu0 0
    %1766 = vmatpush1.bf16.msra.mxu0 0
    %1767 = vmatprep.subr.bf16.mxu0 0
    %1768 = vmatpush1.bf16.msra.mxu0 0
    %1769 = vmatprep.subr.bf16.mxu0 0
    %1770 = vmatpush1.bf16.msra.mxu0 0
    %1771 = vmatprep.subr.bf16.mxu0 0
    %1772 = vmatpush1.bf16.msra.mxu0 0
    %1773 = vmatprep.subr.bf16.mxu0 0
    %1774 = vmatpush1.bf16.msra.mxu0 0
    %1775 = vmatprep.subr.bf16.mxu0 0
    %1776 = vmatpush1.bf16.msra.mxu0 0
    %1777 = vmatprep.mubr.bf16.mxu0 0
    %1778 = vmatmul.mubr.bf16.gmra.mrb[0].mxu0 %v1703
    %v1779 = vpop.f32.mrb[0].mxu0
    %v1780 = vadd.f32 0.0, %v1779
    %v1781 = vpop.f32.mrb[0].mxu0
    %v1782 = vadd.f32 0.0, %v1781
    %v1783 = vpop.f32.mrb[0].mxu0
    %v1784 = vpop.f32.mrb[0].mxu0
    %1785 = vdwg.mxu0
    %v1786 = vadd.f32 %v1699, %v1739
    %v1787 = vadd.f32 %v1700, %v1741
    %v1788 = vadd.f32 %v1701, %v1780
    %v1789 = vadd.f32 %v1702, %v1782
    %v1790 = vxor.u32 %v1786, 2147483648
    %v1791 = vxor.u32 %v1787, 2147483648
    %v1792 = vxor.u32 %v1788, 2147483648
    %v1793 = vxor.u32 %v1789, 2147483648
    %v1794 = vmul.f32 %v1790, 1.442695
    %v1795 = vpow.pop %v1794
    %v1796 = vmul.f32 %v1791, 1.442695
    %v1797 = vpow.pop %v1796
    %v1798 = vmul.f32 %v1792, 1.442695
    %v1799 = vpow.pop %v1798
    %v1800 = vmul.f32 %v1793, 1.442695
    %v1801 = vpow.pop %v1800
    %v1802 = vadd.f32 %v1795, 1.0
    %v1803 = vadd.f32 %v1797, 1.0
    %v1804 = vadd.f32 %v1799, 1.0
    %v1805 = vadd.f32 %v1801, 1.0
    %v1806 = vrcp.pop %v1802
    %v1807 = vmul.f32 1.0, %v1806
    %v1808 = vrcp.pop %v1803
    %v1809 = vmul.f32 1.0, %v1808
    %v1810 = vrcp.pop %v1804
    %v1811 = vmul.f32 1.0, %v1810
    %v1812 = vrcp.pop %v1805
    %v1813 = vmul.f32 1.0, %v1812
    %v1814 = vmul.f32 %v1811, 2.0
    %v1815 = vsub.f32 %v1814, 1.0
    %v1816 = vmul.f32 %v1809, %v1696
    %v1817 = vmul.f32 %v1807, %v1815
    %v1818 = vadd.f32 %v1816, %v1817
    %v1819 = vtanh.pop %v1818
    %v1820 = vmul.f32 %v1813, %v1819
    %v1821 = vld [vmem:[#allocation2 + $0x120] sm:$0xff]
    %v1822 = vld [vmem:[#allocation2 + $0x128] sm:$0xff]
    %v1823 = vld [vmem:[#allocation2 + $0x130] sm:$0xff]
    %v1824 = vld [vmem:[#allocation2 + $0x138] sm:$0xff]
    %v1825 = vpack.c.bf16 %v1820, %v1820
    %1826 = vmatprep.subr.bf16.mxu0 %v665
    %1827 = vmatpush1.bf16.msra.mxu0 %v664
    %1828 = vmatprep.subr.bf16.mxu0 %v669
    %1829 = vmatpush1.bf16.msra.mxu0 %v668
    %1830 = vmatprep.subr.bf16.mxu0 %v673
    %1831 = vmatpush1.bf16.msra.mxu0 %v672
    %1832 = vmatprep.subr.bf16.mxu0 %v677
    %1833 = vmatpush1.bf16.msra.mxu0 %v676
    %1834 = vmatprep.subr.bf16.mxu0 %v681
    %1835 = vmatpush1.bf16.msra.mxu0 %v680
    %1836 = vmatprep.subr.bf16.mxu0 %v685
    %1837 = vmatpush1.bf16.msra.mxu0 %v684
    %1838 = vmatprep.subr.bf16.mxu0 %v689
    %1839 = vmatpush1.bf16.msra.mxu0 %v688
    %1840 = vmatprep.subr.bf16.mxu0 %v693
    %1841 = vmatpush1.bf16.msra.mxu0 %v692
    %1842 = vmatprep.subr.bf16.mxu0 0
    %1843 = vmatpush1.bf16.msra.mxu0 0
    %1844 = vmatprep.subr.bf16.mxu0 0
    %1845 = vmatpush1.bf16.msra.mxu0 0
    %1846 = vmatprep.subr.bf16.mxu0 0
    %1847 = vmatpush1.bf16.msra.mxu0 0
    %1848 = vmatprep.subr.bf16.mxu0 0
    %1849 = vmatpush1.bf16.msra.mxu0 0
    %1850 = vmatprep.subr.bf16.mxu0 0
    %1851 = vmatpush1.bf16.msra.mxu0 0
    %1852 = vmatprep.subr.bf16.mxu0 0
    %1853 = vmatpush1.bf16.msra.mxu0 0
    %1854 = vmatprep.subr.bf16.mxu0 0
    %1855 = vmatpush1.bf16.msra.mxu0 0
    %1856 = vmatprep.subr.bf16.mxu0 0
    %1857 = vmatpush1.bf16.msra.mxu0 0
    %1858 = vmatprep.mubr.bf16.mxu0 0
    %1859 = vmatmul.mubr.bf16.gmra.mrb[0].mxu0 %v1825
    %v1860 = vpop.f32.mrb[0].mxu0
    %v1861 = vadd.f32 0.0, %v1860
    %v1862 = vpop.f32.mrb[0].mxu0
    %v1863 = vadd.f32 0.0, %v1862
    %v1864 = vpop.f32.mrb[0].mxu0
    %v1865 = vpop.f32.mrb[0].mxu0
    %1866 = vdwg.mxu0
    %1867 = vmatprep.subr.bf16.mxu0 %v667
    %1868 = vmatpush1.bf16.msra.mxu0 %v666
    %1869 = vmatprep.subr.bf16.mxu0 %v671
    %1870 = vmatpush1.bf16.msra.mxu0 %v670
    %1871 = vmatprep.subr.bf16.mxu0 %v675
    %1872 = vmatpush1.bf16.msra.mxu0 %v674
    %1873 = vmatprep.subr.bf16.mxu0 %v679
    %1874 = vmatpush1.bf16.msra.mxu0 %v678
    %1875 = vmatprep.subr.bf16.mxu0 %v683
    %1876 = vmatpush1.bf16.msra.mxu0 %v682
    %1877 = vmatprep.subr.bf16.mxu0 %v687
    %1878 = vmatpush1.bf16.msra.mxu0 %v686
    %1879 = vmatprep.subr.bf16.mxu0 %v691
    %1880 = vmatpush1.bf16.msra.mxu0 %v690
    %1881 = vmatprep.subr.bf16.mxu0 %v695
    %1882 = vmatpush1.bf16.msra.mxu0 %v694
    %1883 = vmatprep.subr.bf16.mxu0 0
    %1884 = vmatpush1.bf16.msra.mxu0 0
    %1885 = vmatprep.subr.bf16.mxu0 0
    %1886 = vmatpush1.bf16.msra.mxu0 0
    %1887 = vmatprep.subr.bf16.mxu0 0
    %1888 = vmatpush1.bf16.msra.mxu0 0
    %1889 = vmatprep.subr.bf16.mxu0 0
    %1890 = vmatpush1.bf16.msra.mxu0 0
    %1891 = vmatprep.subr.bf16.mxu0 0
    %1892 = vmatpush1.bf16.msra.mxu0 0
    %1893 = vmatprep.subr.bf16.mxu0 0
    %1894 = vmatpush1.bf16.msra.mxu0 0
    %1895 = vmatprep.subr.bf16.mxu0 0
    %1896 = vmatpush1.bf16.msra.mxu0 0
    %1897 = vmatprep.subr.bf16.mxu0 0
    %1898 = vmatpush1.bf16.msra.mxu0 0
    %1899 = vmatprep.mubr.bf16.mxu0 0
    %1900 = vmatmul.mubr.bf16.gmra.mrb[0].mxu0 %v1825
    %v1901 = vpop.f32.mrb[0].mxu0
    %v1902 = vadd.f32 0.0, %v1901
    %v1903 = vpop.f32.mrb[0].mxu0
    %v1904 = vadd.f32 0.0, %v1903
    %v1905 = vpop.f32.mrb[0].mxu0
    %v1906 = vpop.f32.mrb[0].mxu0
    %1907 = vdwg.mxu0
    %v1908 = vadd.f32 %v1821, %v1861
    %v1909 = vadd.f32 %v1822, %v1863
    %v1910 = vadd.f32 %v1823, %v1902
    %v1911 = vadd.f32 %v1824, %v1904
    %v1912 = vxor.u32 %v1908, 2147483648
    %v1913 = vxor.u32 %v1909, 2147483648
    %v1914 = vxor.u32 %v1910, 2147483648
    %v1915 = vxor.u32 %v1911, 2147483648
    %v1916 = vmul.f32 %v1912, 1.442695
    %v1917 = vpow.pop %v1916
    %v1918 = vmul.f32 %v1913, 1.442695
    %v1919 = vpow.pop %v1918
    %v1920 = vmul.f32 %v1914, 1.442695
    %v1921 = vpow.pop %v1920
    %v1922 = vmul.f32 %v1915, 1.442695
    %v1923 = vpow.pop %v1922
    %v1924 = vadd.f32 %v1917, 1.0
    %v1925 = vadd.f32 %v1919, 1.0
    %v1926 = vadd.f32 %v1921, 1.0
    %v1927 = vadd.f32 %v1923, 1.0
    %v1928 = vrcp.pop %v1924
    %v1929 = vmul.f32 1.0, %v1928
    %v1930 = vrcp.pop %v1925
    %v1931 = vmul.f32 1.0, %v1930
    %v1932 = vrcp.pop %v1926
    %v1933 = vmul.f32 1.0, %v1932
    %v1934 = vrcp.pop %v1927
    %v1935 = vmul.f32 1.0, %v1934
    %v1936 = vmul.f32 %v1933, 2.0
    %v1937 = vsub.f32 %v1936, 1.0
    %v1938 = vmul.f32 %v1931, %v1818
    %v1939 = vmul.f32 %v1929, %v1937
    %v1940 = vadd.f32 %v1938, %v1939
    %v1941 = vtanh.pop %v1940
    %v1942 = vmul.f32 %v1935, %v1941
    %v1943 = vld [vmem:[#allocation2 + $0x140] sm:$0xff]
    %v1944 = vld [vmem:[#allocation2 + $0x148] sm:$0xff]
    %v1945 = vld [vmem:[#allocation2 + $0x150] sm:$0xff]
    %v1946 = vld [vmem:[#allocation2 + $0x158] sm:$0xff]
    %v1947 = vpack.c.bf16 %v1942, %v1942
    %1948 = vmatprep.subr.bf16.mxu0 %v665
    %1949 = vmatpush1.bf16.msra.mxu0 %v664
    %1950 = vmatprep.subr.bf16.mxu0 %v669
    %1951 = vmatpush1.bf16.msra.mxu0 %v668
    %1952 = vmatprep.subr.bf16.mxu0 %v673
    %1953 = vmatpush1.bf16.msra.mxu0 %v672
    %1954 = vmatprep.subr.bf16.mxu0 %v677
    %1955 = vmatpush1.bf16.msra.mxu0 %v676
    %1956 = vmatprep.subr.bf16.mxu0 %v681
    %1957 = vmatpush1.bf16.msra.mxu0 %v680
    %1958 = vmatprep.subr.bf16.mxu0 %v685
    %1959 = vmatpush1.bf16.msra.mxu0 %v684
    %1960 = vmatprep.subr.bf16.mxu0 %v689
    %1961 = vmatpush1.bf16.msra.mxu0 %v688
    %1962 = vmatprep.subr.bf16.mxu0 %v693
    %1963 = vmatpush1.bf16.msra.mxu0 %v692
    %1964 = vmatprep.subr.bf16.mxu0 0
    %1965 = vmatpush1.bf16.msra.mxu0 0
    %1966 = vmatprep.subr.bf16.mxu0 0
    %1967 = vmatpush1.bf16.msra.mxu0 0
    %1968 = vmatprep.subr.bf16.mxu0 0
    %1969 = vmatpush1.bf16.msra.mxu0 0
    %1970 = vmatprep.subr.bf16.mxu0 0
    %1971 = vmatpush1.bf16.msra.mxu0 0
    %1972 = vmatprep.subr.bf16.mxu0 0
    %1973 = vmatpush1.bf16.msra.mxu0 0
    %1974 = vmatprep.subr.bf16.mxu0 0
    %1975 = vmatpush1.bf16.msra.mxu0 0
    %1976 = vmatprep.subr.bf16.mxu0 0
    %1977 = vmatpush1.bf16.msra.mxu0 0
    %1978 = vmatprep.subr.bf16.mxu0 0
    %1979 = vmatpush1.bf16.msra.mxu0 0
    %1980 = vmatprep.mubr.bf16.mxu0 0
    %1981 = vmatmul.mubr.bf16.gmra.mrb[0].mxu0 %v1947
    %v1982 = vpop.f32.mrb[0].mxu0
    %v1983 = vadd.f32 0.0, %v1982
    %v1984 = vpop.f32.mrb[0].mxu0
    %v1985 = vadd.f32 0.0, %v1984
    %v1986 = vpop.f32.mrb[0].mxu0
    %v1987 = vpop.f32.mrb[0].mxu0
    %1988 = vdwg.mxu0
    %1989 = vmatprep.subr.bf16.mxu0 %v667
    %1990 = vmatpush1.bf16.msra.mxu0 %v666
    %1991 = vmatprep.subr.bf16.mxu0 %v671
    %1992 = vmatpush1.bf16.msra.mxu0 %v670
    %1993 = vmatprep.subr.bf16.mxu0 %v675
    %1994 = vmatpush1.bf16.msra.mxu0 %v674
    %1995 = vmatprep.subr.bf16.mxu0 %v679
    %1996 = vmatpush1.bf16.msra.mxu0 %v678
    %1997 = vmatprep.subr.bf16.mxu0 %v683
    %1998 = vmatpush1.bf16.msra.mxu0 %v682
    %1999 = vmatprep.subr.bf16.mxu0 %v687
    %2000 = vmatpush1.bf16.msra.mxu0 %v686
    %2001 = vmatprep.subr.bf16.mxu0 %v691
    %2002 = vmatpush1.bf16.msra.mxu0 %v690
    %2003 = vmatprep.subr.bf16.mxu0 %v695
    %2004 = vmatpush1.bf16.msra.mxu0 %v694
    %2005 = vmatprep.subr.bf16.mxu0 0
    %2006 = vmatpush1.bf16.msra.mxu0 0
    %2007 = vmatprep.subr.bf16.mxu0 0
    %2008 = vmatpush1.bf16.msra.mxu0 0
    %2009 = vmatprep.subr.bf16.mxu0 0
    %2010 = vmatpush1.bf16.msra.mxu0 0
    %2011 = vmatprep.subr.bf16.mxu0 0
    %2012 = vmatpush1.bf16.msra.mxu0 0
    %2013 = vmatprep.subr.bf16.mxu0 0
    %2014 = vmatpush1.bf16.msra.mxu0 0
    %2015 = vmatprep.subr.bf16.mxu0 0
    %2016 = vmatpush1.bf16.msra.mxu0 0
    %2017 = vmatprep.subr.bf16.mxu0 0
    %2018 = vmatpush1.bf16.msra.mxu0 0
    %2019 = vmatprep.subr.bf16.mxu0 0
    %2020 = vmatpush1.bf16.msra.mxu0 0
    %2021 = vmatprep.mubr.bf16.mxu0 0
    %2022 = vmatmul.mubr.bf16.gmra.mrb[0].mxu0 %v1947
    %v2023 = vpop.f32.mrb[0].mxu0
    %v2024 = vadd.f32 0.0, %v2023
    %v2025 = vpop.f32.mrb[0].mxu0
    %v2026 = vadd.f32 0.0, %v2025
    %v2027 = vpop.f32.mrb[0].mxu0
    %v2028 = vpop.f32.mrb[0].mxu0
    %2029 = vdwg.mxu0
    %v2030 = vadd.f32 %v1943, %v1983
    %v2031 = vadd.f32 %v1944, %v1985
    %v2032 = vadd.f32 %v1945, %v2024
    %v2033 = vadd.f32 %v1946, %v2026
    %v2034 = vxor.u32 %v2030, 2147483648
    %v2035 = vxor.u32 %v2031, 2147483648
    %v2036 = vxor.u32 %v2032, 2147483648
    %v2037 = vxor.u32 %v2033, 2147483648
    %v2038 = vmul.f32 %v2034, 1.442695
    %v2039 = vpow.pop %v2038
    %v2040 = vmul.f32 %v2035, 1.442695
    %v2041 = vpow.pop %v2040
    %v2042 = vmul.f32 %v2036, 1.442695
    %v2043 = vpow.pop %v2042
    %v2044 = vmul.f32 %v2037, 1.442695
    %v2045 = vpow.pop %v2044
    %v2046 = vadd.f32 %v2039, 1.0
    %v2047 = vadd.f32 %v2041, 1.0
    %v2048 = vadd.f32 %v2043, 1.0
    %v2049 = vadd.f32 %v2045, 1.0
    %v2050 = vrcp.pop %v2046
    %v2051 = vmul.f32 1.0, %v2050
    %v2052 = vrcp.pop %v2047
    %v2053 = vmul.f32 1.0, %v2052
    %v2054 = vrcp.pop %v2048
    %v2055 = vmul.f32 1.0, %v2054
    %v2056 = vrcp.pop %v2049
    %v2057 = vmul.f32 1.0, %v2056
    %v2058 = vmul.f32 %v2055, 2.0
    %v2059 = vsub.f32 %v2058, 1.0
    %v2060 = vmul.f32 %v2053, %v1940
    %v2061 = vmul.f32 %v2051, %v2059
    %v2062 = vadd.f32 %v2060, %v2061
    %v2063 = vtanh.pop %v2062
    %v2064 = vmul.f32 %v2057, %v2063
    %v2065 = vld [vmem:[#allocation2 + $0x160] sm:$0xff]
    %v2066 = vld [vmem:[#allocation2 + $0x168] sm:$0xff]
    %v2067 = vld [vmem:[#allocation2 + $0x170] sm:$0xff]
    %v2068 = vld [vmem:[#allocation2 + $0x178] sm:$0xff]
    %v2069 = vpack.c.bf16 %v2064, %v2064
    %2070 = vmatprep.subr.bf16.mxu0 %v665
    %2071 = vmatpush1.bf16.msra.mxu0 %v664
    %2072 = vmatprep.subr.bf16.mxu0 %v669
    %2073 = vmatpush1.bf16.msra.mxu0 %v668
    %2074 = vmatprep.subr.bf16.mxu0 %v673
    %2075 = vmatpush1.bf16.msra.mxu0 %v672
    %2076 = vmatprep.subr.bf16.mxu0 %v677
    %2077 = vmatpush1.bf16.msra.mxu0 %v676
    %2078 = vmatprep.subr.bf16.mxu0 %v681
    %2079 = vmatpush1.bf16.msra.mxu0 %v680
    %2080 = vmatprep.subr.bf16.mxu0 %v685
    %2081 = vmatpush1.bf16.msra.mxu0 %v684
    %2082 = vmatprep.subr.bf16.mxu0 %v689
    %2083 = vmatpush1.bf16.msra.mxu0 %v688
    %2084 = vmatprep.subr.bf16.mxu0 %v693
    %2085 = vmatpush1.bf16.msra.mxu0 %v692
    %2086 = vmatprep.subr.bf16.mxu0 0
    %2087 = vmatpush1.bf16.msra.mxu0 0
    %2088 = vmatprep.subr.bf16.mxu0 0
    %2089 = vmatpush1.bf16.msra.mxu0 0
    %2090 = vmatprep.subr.bf16.mxu0 0
    %2091 = vmatpush1.bf16.msra.mxu0 0
    %2092 = vmatprep.subr.bf16.mxu0 0
    %2093 = vmatpush1.bf16.msra.mxu0 0
    %2094 = vmatprep.subr.bf16.mxu0 0
    %2095 = vmatpush1.bf16.msra.mxu0 0
    %2096 = vmatprep.subr.bf16.mxu0 0
    %2097 = vmatpush1.bf16.msra.mxu0 0
    %2098 = vmatprep.subr.bf16.mxu0 0
    %2099 = vmatpush1.bf16.msra.mxu0 0
    %2100 = vmatprep.subr.bf16.mxu0 0
    %2101 = vmatpush1.bf16.msra.mxu0 0
    %2102 = vmatprep.mubr.bf16.mxu0 0
    %2103 = vmatmul.mubr.bf16.gmra.mrb[0].mxu0 %v2069
    %v2104 = vpop.f32.mrb[0].mxu0
    %v2105 = vadd.f32 0.0, %v2104
    %v2106 = vpop.f32.mrb[0].mxu0
    %v2107 = vadd.f32 0.0, %v2106
    %v2108 = vpop.f32.mrb[0].mxu0
    %v2109 = vpop.f32.mrb[0].mxu0
    %2110 = vdwg.mxu0
    %2111 = vmatprep.subr.bf16.mxu0 %v667
    %2112 = vmatpush1.bf16.msra.mxu0 %v666
    %2113 = vmatprep.subr.bf16.mxu0 %v671
    %2114 = vmatpush1.bf16.msra.mxu0 %v670
    %2115 = vmatprep.subr.bf16.mxu0 %v675
    %2116 = vmatpush1.bf16.msra.mxu0 %v674
    %2117 = vmatprep.subr.bf16.mxu0 %v679
    %2118 = vmatpush1.bf16.msra.mxu0 %v678
    %2119 = vmatprep.subr.bf16.mxu0 %v683
    %2120 = vmatpush1.bf16.msra.mxu0 %v682
    %2121 = vmatprep.subr.bf16.mxu0 %v687
    %2122 = vmatpush1.bf16.msra.mxu0 %v686
    %2123 = vmatprep.subr.bf16.mxu0 %v691
    %2124 = vmatpush1.bf16.msra.mxu0 %v690
    %2125 = vmatprep.subr.bf16.mxu0 %v695
    %2126 = vmatpush1.bf16.msra.mxu0 %v694
    %2127 = vmatprep.subr.bf16.mxu0 0
    %2128 = vmatpush1.bf16.msra.mxu0 0
    %2129 = vmatprep.subr.bf16.mxu0 0
    %2130 = vmatpush1.bf16.msra.mxu0 0
    %2131 = vmatprep.subr.bf16.mxu0 0
    %2132 = vmatpush1.bf16.msra.mxu0 0
    %2133 = vmatprep.subr.bf16.mxu0 0
    %2134 = vmatpush1.bf16.msra.mxu0 0
    %2135 = vmatprep.subr.bf16.mxu0 0
    %2136 = vmatpush1.bf16.msra.mxu0 0
    %2137 = vmatprep.subr.bf16.mxu0 0
    %2138 = vmatpush1.bf16.msra.mxu0 0
    %2139 = vmatprep.subr.bf16.mxu0 0
    %2140 = vmatpush1.bf16.msra.mxu0 0
    %2141 = vmatprep.subr.bf16.mxu0 0
    %2142 = vmatpush1.bf16.msra.mxu0 0
    %2143 = vmatprep.mubr.bf16.mxu0 0
    %2144 = vmatmul.mubr.bf16.gmra.mrb[0].mxu0 %v2069
    %v2145 = vpop.f32.mrb[0].mxu0
    %v2146 = vadd.f32 0.0, %v2145
    %v2147 = vpop.f32.mrb[0].mxu0
    %v2148 = vadd.f32 0.0, %v2147
    %v2149 = vpop.f32.mrb[0].mxu0
    %v2150 = vpop.f32.mrb[0].mxu0
    %2151 = vdwg.mxu0
    %v2152 = vadd.f32 %v2065, %v2105
    %v2153 = vadd.f32 %v2066, %v2107
    %v2154 = vadd.f32 %v2067, %v2146
    %v2155 = vadd.f32 %v2068, %v2148
    %v2156 = vxor.u32 %v2152, 2147483648
    %v2157 = vxor.u32 %v2153, 2147483648
    %v2158 = vxor.u32 %v2154, 2147483648
    %v2159 = vxor.u32 %v2155, 2147483648
    %v2160 = vmul.f32 %v2156, 1.442695
    %v2161 = vpow.pop %v2160
    %v2162 = vmul.f32 %v2157, 1.442695
    %v2163 = vpow.pop %v2162
    %v2164 = vmul.f32 %v2158, 1.442695
    %v2165 = vpow.pop %v2164
    %v2166 = vmul.f32 %v2159, 1.442695
    %v2167 = vpow.pop %v2166
    %v2168 = vadd.f32 %v2161, 1.0
    %v2169 = vadd.f32 %v2163, 1.0
    %v2170 = vadd.f32 %v2165, 1.0
    %v2171 = vadd.f32 %v2167, 1.0
    %v2172 = vrcp.pop %v2168
    %v2173 = vmul.f32 1.0, %v2172
    %v2174 = vrcp.pop %v2169
    %v2175 = vmul.f32 1.0, %v2174
    %v2176 = vrcp.pop %v2170
    %v2177 = vmul.f32 1.0, %v2176
    %v2178 = vrcp.pop %v2171
    %v2179 = vmul.f32 1.0, %v2178
    %v2180 = vmul.f32 %v2177, 2.0
    %v2181 = vsub.f32 %v2180, 1.0
    %v2182 = vmul.f32 %v2175, %v2062
    %v2183 = vmul.f32 %v2173, %v2181
    %v2184 = vadd.f32 %v2182, %v2183
    %v2185 = vtanh.pop %v2184
    %v2186 = vmul.f32 %v2179, %v2185
    %v2187 = vld [vmem:[#allocation2 + $0x180] sm:$0xff]
    %v2188 = vld [vmem:[#allocation2 + $0x188] sm:$0xff]
    %v2189 = vld [vmem:[#allocation2 + $0x190] sm:$0xff]
    %v2190 = vld [vmem:[#allocation2 + $0x198] sm:$0xff]
    %v2191 = vpack.c.bf16 %v2186, %v2186
    %2192 = vmatprep.subr.bf16.mxu0 %v665
    %2193 = vmatpush1.bf16.msra.mxu0 %v664
    %2194 = vmatprep.subr.bf16.mxu0 %v669
    %2195 = vmatpush1.bf16.msra.mxu0 %v668
    %2196 = vmatprep.subr.bf16.mxu0 %v673
    %2197 = vmatpush1.bf16.msra.mxu0 %v672
    %2198 = vmatprep.subr.bf16.mxu0 %v677
    %2199 = vmatpush1.bf16.msra.mxu0 %v676
    %2200 = vmatprep.subr.bf16.mxu0 %v681
    %2201 = vmatpush1.bf16.msra.mxu0 %v680
    %2202 = vmatprep.subr.bf16.mxu0 %v685
    %2203 = vmatpush1.bf16.msra.mxu0 %v684
    %2204 = vmatprep.subr.bf16.mxu0 %v689
    %2205 = vmatpush1.bf16.msra.mxu0 %v688
    %2206 = vmatprep.subr.bf16.mxu0 %v693
    %2207 = vmatpush1.bf16.msra.mxu0 %v692
    %2208 = vmatprep.subr.bf16.mxu0 0
    %2209 = vmatpush1.bf16.msra.mxu0 0
    %2210 = vmatprep.subr.bf16.mxu0 0
    %2211 = vmatpush1.bf16.msra.mxu0 0
    %2212 = vmatprep.subr.bf16.mxu0 0
    %2213 = vmatpush1.bf16.msra.mxu0 0
    %2214 = vmatprep.subr.bf16.mxu0 0
    %2215 = vmatpush1.bf16.msra.mxu0 0
    %2216 = vmatprep.subr.bf16.mxu0 0
    %2217 = vmatpush1.bf16.msra.mxu0 0
    %2218 = vmatprep.subr.bf16.mxu0 0
    %2219 = vmatpush1.bf16.msra.mxu0 0
    %2220 = vmatprep.subr.bf16.mxu0 0
    %2221 = vmatpush1.bf16.msra.mxu0 0
    %2222 = vmatprep.subr.bf16.mxu0 0
    %2223 = vmatpush1.bf16.msra.mxu0 0
    %2224 = vmatprep.mubr.bf16.mxu0 0
    %2225 = vmatmul.mubr.bf16.gmra.mrb[0].mxu0 %v2191
    %v2226 = vpop.f32.mrb[0].mxu0
    %v2227 = vadd.f32 0.0, %v2226
    %v2228 = vpop.f32.mrb[0].mxu0
    %v2229 = vadd.f32 0.0, %v2228
    %v2230 = vpop.f32.mrb[0].mxu0
    %v2231 = vpop.f32.mrb[0].mxu0
    %2232 = vdwg.mxu0
    %2233 = vmatprep.subr.bf16.mxu0 %v667
    %2234 = vmatpush1.bf16.msra.mxu0 %v666
    %2235 = vmatprep.subr.bf16.mxu0 %v671
    %2236 = vmatpush1.bf16.msra.mxu0 %v670
    %2237 = vmatprep.subr.bf16.mxu0 %v675
    %2238 = vmatpush1.bf16.msra.mxu0 %v674
    %2239 = vmatprep.subr.bf16.mxu0 %v679
    %2240 = vmatpush1.bf16.msra.mxu0 %v678
    %2241 = vmatprep.subr.bf16.mxu0 %v683
    %2242 = vmatpush1.bf16.msra.mxu0 %v682
    %2243 = vmatprep.subr.bf16.mxu0 %v687
    %2244 = vmatpush1.bf16.msra.mxu0 %v686
    %2245 = vmatprep.subr.bf16.mxu0 %v691
    %2246 = vmatpush1.bf16.msra.mxu0 %v690
    %2247 = vmatprep.subr.bf16.mxu0 %v695
    %2248 = vmatpush1.bf16.msra.mxu0 %v694
    %2249 = vmatprep.subr.bf16.mxu0 0
    %2250 = vmatpush1.bf16.msra.mxu0 0
    %2251 = vmatprep.subr.bf16.mxu0 0
    %2252 = vmatpush1.bf16.msra.mxu0 0
    %2253 = vmatprep.subr.bf16.mxu0 0
    %2254 = vmatpush1.bf16.msra.mxu0 0
    %2255 = vmatprep.subr.bf16.mxu0 0
    %2256 = vmatpush1.bf16.msra.mxu0 0
    %2257 = vmatprep.subr.bf16.mxu0 0
    %2258 = vmatpush1.bf16.msra.mxu0 0
    %2259 = vmatprep.subr.bf16.mxu0 0
    %2260 = vmatpush1.bf16.msra.mxu0 0
    %2261 = vmatprep.subr.bf16.mxu0 0
    %2262 = vmatpush1.bf16.msra.mxu0 0
    %2263 = vmatprep.subr.bf16.mxu0 0
    %2264 = vmatpush1.bf16.msra.mxu0 0
    %2265 = vmatprep.mubr.bf16.mxu0 0
    %2266 = vmatmul.mubr.bf16.gmra.mrb[0].mxu0 %v2191
    %v2267 = vpop.f32.mrb[0].mxu0
    %v2268 = vadd.f32 0.0, %v2267
    %v2269 = vpop.f32.mrb[0].mxu0
    %v2270 = vadd.f32 0.0, %v2269
    %v2271 = vpop.f32.mrb[0].mxu0
    %v2272 = vpop.f32.mrb[0].mxu0
    %2273 = vdwg.mxu0
    %v2274 = vadd.f32 %v2187, %v2227
    %v2275 = vadd.f32 %v2188, %v2229
    %v2276 = vadd.f32 %v2189, %v2268
    %v2277 = vadd.f32 %v2190, %v2270
    %v2278 = vxor.u32 %v2274, 2147483648
    %v2279 = vxor.u32 %v2275, 2147483648
    %v2280 = vxor.u32 %v2276, 2147483648
    %v2281 = vxor.u32 %v2277, 2147483648
    %v2282 = vmul.f32 %v2278, 1.442695
    %v2283 = vpow.pop %v2282
    %v2284 = vmul.f32 %v2279, 1.442695
    %v2285 = vpow.pop %v2284
    %v2286 = vmul.f32 %v2280, 1.442695
    %v2287 = vpow.pop %v2286
    %v2288 = vmul.f32 %v2281, 1.442695
    %v2289 = vpow.pop %v2288
    %v2290 = vadd.f32 %v2283, 1.0
    %v2291 = vadd.f32 %v2285, 1.0
    %v2292 = vadd.f32 %v2287, 1.0
    %v2293 = vadd.f32 %v2289, 1.0
    %v2294 = vrcp.pop %v2290
    %v2295 = vmul.f32 1.0, %v2294
    %v2296 = vrcp.pop %v2291
    %v2297 = vmul.f32 1.0, %v2296
    %v2298 = vrcp.pop %v2292
    %v2299 = vmul.f32 1.0, %v2298
    %v2300 = vrcp.pop %v2293
    %v2301 = vmul.f32 1.0, %v2300
    %v2302 = vmul.f32 %v2299, 2.0
    %v2303 = vsub.f32 %v2302, 1.0
    %v2304 = vmul.f32 %v2297, %v2184
    %v2305 = vmul.f32 %v2295, %v2303
    %v2306 = vadd.f32 %v2304, %v2305
    %v2307 = vtanh.pop %v2306
    %v2308 = vmul.f32 %v2301, %v2307
    %v2309 = vld [vmem:[#allocation2 + $0x1a0] sm:$0xff]
    %v2310 = vld [vmem:[#allocation2 + $0x1a8] sm:$0xff]
    %v2311 = vld [vmem:[#allocation2 + $0x1b0] sm:$0xff]
    %v2312 = vld [vmem:[#allocation2 + $0x1b8] sm:$0xff]
    %v2313 = vpack.c.bf16 %v2308, %v2308
    %2314 = vmatprep.subr.bf16.mxu0 %v665
    %2315 = vmatpush1.bf16.msra.mxu0 %v664
    %2316 = vmatprep.subr.bf16.mxu0 %v669
    %2317 = vmatpush1.bf16.msra.mxu0 %v668
    %2318 = vmatprep.subr.bf16.mxu0 %v673
    %2319 = vmatpush1.bf16.msra.mxu0 %v672
    %2320 = vmatprep.subr.bf16.mxu0 %v677
    %2321 = vmatpush1.bf16.msra.mxu0 %v676
    %2322 = vmatprep.subr.bf16.mxu0 %v681
    %2323 = vmatpush1.bf16.msra.mxu0 %v680
    %2324 = vmatprep.subr.bf16.mxu0 %v685
    %2325 = vmatpush1.bf16.msra.mxu0 %v684
    %2326 = vmatprep.subr.bf16.mxu0 %v689
    %2327 = vmatpush1.bf16.msra.mxu0 %v688
    %2328 = vmatprep.subr.bf16.mxu0 %v693
    %2329 = vmatpush1.bf16.msra.mxu0 %v692
    %2330 = vmatprep.subr.bf16.mxu0 0
    %2331 = vmatpush1.bf16.msra.mxu0 0
    %2332 = vmatprep.subr.bf16.mxu0 0
    %2333 = vmatpush1.bf16.msra.mxu0 0
    %2334 = vmatprep.subr.bf16.mxu0 0
    %2335 = vmatpush1.bf16.msra.mxu0 0
    %2336 = vmatprep.subr.bf16.mxu0 0
    %2337 = vmatpush1.bf16.msra.mxu0 0
    %2338 = vmatprep.subr.bf16.mxu0 0
    %2339 = vmatpush1.bf16.msra.mxu0 0
    %2340 = vmatprep.subr.bf16.mxu0 0
    %2341 = vmatpush1.bf16.msra.mxu0 0
    %2342 = vmatprep.subr.bf16.mxu0 0
    %2343 = vmatpush1.bf16.msra.mxu0 0
    %2344 = vmatprep.subr.bf16.mxu0 0
    %2345 = vmatpush1.bf16.msra.mxu0 0
    %2346 = vmatprep.mubr.bf16.mxu0 0
    %2347 = vmatmul.mubr.bf16.gmra.mrb[0].mxu0 %v2313
    %v2348 = vpop.f32.mrb[0].mxu0
    %v2349 = vadd.f32 0.0, %v2348
    %v2350 = vpop.f32.mrb[0].mxu0
    %v2351 = vadd.f32 0.0, %v2350
    %v2352 = vpop.f32.mrb[0].mxu0
    %v2353 = vpop.f32.mrb[0].mxu0
    %2354 = vdwg.mxu0
    %2355 = vmatprep.subr.bf16.mxu0 %v667
    %2356 = vmatpush1.bf16.msra.mxu0 %v666
    %2357 = vmatprep.subr.bf16.mxu0 %v671
    %2358 = vmatpush1.bf16.msra.mxu0 %v670
    %2359 = vmatprep.subr.bf16.mxu0 %v675
    %2360 = vmatpush1.bf16.msra.mxu0 %v674
    %2361 = vmatprep.subr.bf16.mxu0 %v679
    %2362 = vmatpush1.bf16.msra.mxu0 %v678
    %2363 = vmatprep.subr.bf16.mxu0 %v683
    %2364 = vmatpush1.bf16.msra.mxu0 %v682
    %2365 = vmatprep.subr.bf16.mxu0 %v687
    %2366 = vmatpush1.bf16.msra.mxu0 %v686
    %2367 = vmatprep.subr.bf16.mxu0 %v691
    %2368 = vmatpush1.bf16.msra.mxu0 %v690
    %2369 = vmatprep.subr.bf16.mxu0 %v695
    %2370 = vmatpush1.bf16.msra.mxu0 %v694
    %2371 = vmatprep.subr.bf16.mxu0 0
    %2372 = vmatpush1.bf16.msra.mxu0 0
    %2373 = vmatprep.subr.bf16.mxu0 0
    %2374 = vmatpush1.bf16.msra.mxu0 0
    %2375 = vmatprep.subr.bf16.mxu0 0
    %2376 = vmatpush1.bf16.msra.mxu0 0
    %2377 = vmatprep.subr.bf16.mxu0 0
    %2378 = vmatpush1.bf16.msra.mxu0 0
    %2379 = vmatprep.subr.bf16.mxu0 0
    %2380 = vmatpush1.bf16.msra.mxu0 0
    %2381 = vmatprep.subr.bf16.mxu0 0
    %2382 = vmatpush1.bf16.msra.mxu0 0
    %2383 = vmatprep.subr.bf16.mxu0 0
    %2384 = vmatpush1.bf16.msra.mxu0 0
    %2385 = vmatprep.subr.bf16.mxu0 0
    %2386 = vmatpush1.bf16.msra.mxu0 0
    %2387 = vmatprep.mubr.bf16.mxu0 0
    %2388 = vmatmul.mubr.bf16.gmra.mrb[0].mxu0 %v2313
    %v2389 = vpop.f32.mrb[0].mxu0
    %v2390 = vadd.f32 0.0, %v2389
    %v2391 = vpop.f32.mrb[0].mxu0
    %v2392 = vadd.f32 0.0, %v2391
    %v2393 = vpop.f32.mrb[0].mxu0
    %v2394 = vpop.f32.mrb[0].mxu0
    %2395 = vdwg.mxu0
    %v2396 = vadd.f32 %v2309, %v2349
    %v2397 = vadd.f32 %v2310, %v2351
    %v2398 = vadd.f32 %v2311, %v2390
    %v2399 = vadd.f32 %v2312, %v2392
    %v2400 = vxor.u32 %v2396, 2147483648
    %v2401 = vxor.u32 %v2397, 2147483648
    %v2402 = vxor.u32 %v2398, 2147483648
    %v2403 = vxor.u32 %v2399, 2147483648
    %v2404 = vmul.f32 %v2400, 1.442695
    %v2405 = vpow.pop %v2404
    %v2406 = vmul.f32 %v2401, 1.442695
    %v2407 = vpow.pop %v2406
    %v2408 = vmul.f32 %v2402, 1.442695
    %v2409 = vpow.pop %v2408
    %v2410 = vmul.f32 %v2403, 1.442695
    %v2411 = vpow.pop %v2410
    %v2412 = vadd.f32 %v2405, 1.0
    %v2413 = vadd.f32 %v2407, 1.0
    %v2414 = vadd.f32 %v2409, 1.0
    %v2415 = vadd.f32 %v2411, 1.0
    %v2416 = vrcp.pop %v2412
    %v2417 = vmul.f32 1.0, %v2416
    %v2418 = vrcp.pop %v2413
    %v2419 = vmul.f32 1.0, %v2418
    %v2420 = vrcp.pop %v2414
    %v2421 = vmul.f32 1.0, %v2420
    %v2422 = vrcp.pop %v2415
    %v2423 = vmul.f32 1.0, %v2422
    %v2424 = vmul.f32 %v2421, 2.0
    %v2425 = vsub.f32 %v2424, 1.0
    %v2426 = vmul.f32 %v2419, %v2306
    %v2427 = vmul.f32 %v2417, %v2425
    %v2428 = vadd.f32 %v2426, %v2427
    %v2429 = vtanh.pop %v2428
    %v2430 = vmul.f32 %v2423, %v2429
    %v2431 = vld [vmem:[#allocation2 + $0x1c0] sm:$0xff]
    %v2432 = vld [vmem:[#allocation2 + $0x1c8] sm:$0xff]
    %v2433 = vld [vmem:[#allocation2 + $0x1d0] sm:$0xff]
    %v2434 = vld [vmem:[#allocation2 + $0x1d8] sm:$0xff]
    %v2435 = vpack.c.bf16 %v2430, %v2430
    %2436 = vmatprep.subr.bf16.mxu0 %v665
    %2437 = vmatpush1.bf16.msra.mxu0 %v664
    %2438 = vmatprep.subr.bf16.mxu0 %v669
    %2439 = vmatpush1.bf16.msra.mxu0 %v668
    %2440 = vmatprep.subr.bf16.mxu0 %v673
    %2441 = vmatpush1.bf16.msra.mxu0 %v672
    %2442 = vmatprep.subr.bf16.mxu0 %v677
    %2443 = vmatpush1.bf16.msra.mxu0 %v676
    %2444 = vmatprep.subr.bf16.mxu0 %v681
    %2445 = vmatpush1.bf16.msra.mxu0 %v680
    %2446 = vmatprep.subr.bf16.mxu0 %v685
    %2447 = vmatpush1.bf16.msra.mxu0 %v684
    %2448 = vmatprep.subr.bf16.mxu0 %v689
    %2449 = vmatpush1.bf16.msra.mxu0 %v688
    %2450 = vmatprep.subr.bf16.mxu0 %v693
    %2451 = vmatpush1.bf16.msra.mxu0 %v692
    %2452 = vmatprep.subr.bf16.mxu0 0
    %2453 = vmatpush1.bf16.msra.mxu0 0
    %2454 = vmatprep.subr.bf16.mxu0 0
    %2455 = vmatpush1.bf16.msra.mxu0 0
    %2456 = vmatprep.subr.bf16.mxu0 0
    %2457 = vmatpush1.bf16.msra.mxu0 0
    %2458 = vmatprep.subr.bf16.mxu0 0
    %2459 = vmatpush1.bf16.msra.mxu0 0
    %2460 = vmatprep.subr.bf16.mxu0 0
    %2461 = vmatpush1.bf16.msra.mxu0 0
    %2462 = vmatprep.subr.bf16.mxu0 0
    %2463 = vmatpush1.bf16.msra.mxu0 0
    %2464 = vmatprep.subr.bf16.mxu0 0
    %2465 = vmatpush1.bf16.msra.mxu0 0
    %2466 = vmatprep.subr.bf16.mxu0 0
    %2467 = vmatpush1.bf16.msra.mxu0 0
    %2468 = vmatprep.mubr.bf16.mxu0 0
    %2469 = vmatmul.mubr.bf16.gmra.mrb[0].mxu0 %v2435
    %v2470 = vpop.f32.mrb[0].mxu0
    %v2471 = vadd.f32 0.0, %v2470
    %v2472 = vpop.f32.mrb[0].mxu0
    %v2473 = vadd.f32 0.0, %v2472
    %v2474 = vpop.f32.mrb[0].mxu0
    %v2475 = vpop.f32.mrb[0].mxu0
    %2476 = vdwg.mxu0
    %2477 = vmatprep.subr.bf16.mxu0 %v667
    %2478 = vmatpush1.bf16.msra.mxu0 %v666
    %2479 = vmatprep.subr.bf16.mxu0 %v671
    %2480 = vmatpush1.bf16.msra.mxu0 %v670
    %2481 = vmatprep.subr.bf16.mxu0 %v675
    %2482 = vmatpush1.bf16.msra.mxu0 %v674
    %2483 = vmatprep.subr.bf16.mxu0 %v679
    %2484 = vmatpush1.bf16.msra.mxu0 %v678
    %2485 = vmatprep.subr.bf16.mxu0 %v683
    %2486 = vmatpush1.bf16.msra.mxu0 %v682
    %2487 = vmatprep.subr.bf16.mxu0 %v687
    %2488 = vmatpush1.bf16.msra.mxu0 %v686
    %2489 = vmatprep.subr.bf16.mxu0 %v691
    %2490 = vmatpush1.bf16.msra.mxu0 %v690
    %2491 = vmatprep.subr.bf16.mxu0 %v695
    %2492 = vmatpush1.bf16.msra.mxu0 %v694
    %2493 = vmatprep.subr.bf16.mxu0 0
    %2494 = vmatpush1.bf16.msra.mxu0 0
    %2495 = vmatprep.subr.bf16.mxu0 0
    %2496 = vmatpush1.bf16.msra.mxu0 0
    %2497 = vmatprep.subr.bf16.mxu0 0
    %2498 = vmatpush1.bf16.msra.mxu0 0
    %2499 = vmatprep.subr.bf16.mxu0 0
    %2500 = vmatpush1.bf16.msra.mxu0 0
    %2501 = vmatprep.subr.bf16.mxu0 0
    %2502 = vmatpush1.bf16.msra.mxu0 0
    %2503 = vmatprep.subr.bf16.mxu0 0
    %2504 = vmatpush1.bf16.msra.mxu0 0
    %2505 = vmatprep.subr.bf16.mxu0 0
    %2506 = vmatpush1.bf16.msra.mxu0 0
    %2507 = vmatprep.subr.bf16.mxu0 0
    %2508 = vmatpush1.bf16.msra.mxu0 0
    %2509 = vmatprep.mubr.bf16.mxu0 0
    %2510 = vmatmul.mubr.bf16.gmra.mrb[0].mxu0 %v2435
    %v2511 = vpop.f32.mrb[0].mxu0
    %v2512 = vadd.f32 0.0, %v2511
    %v2513 = vpop.f32.mrb[0].mxu0
    %v2514 = vadd.f32 0.0, %v2513
    %v2515 = vpop.f32.mrb[0].mxu0
    %v2516 = vpop.f32.mrb[0].mxu0
    %2517 = vdwg.mxu0
    %v2518 = vadd.f32 %v2431, %v2471
    %v2519 = vadd.f32 %v2432, %v2473
    %v2520 = vadd.f32 %v2433, %v2512
    %v2521 = vadd.f32 %v2434, %v2514
    %v2522 = vxor.u32 %v2518, 2147483648
    %v2523 = vxor.u32 %v2519, 2147483648
    %v2524 = vxor.u32 %v2520, 2147483648
    %v2525 = vxor.u32 %v2521, 2147483648
    %v2526 = vmul.f32 %v2522, 1.442695
    %v2527 = vpow.pop %v2526
    %v2528 = vmul.f32 %v2523, 1.442695
    %v2529 = vpow.pop %v2528
    %v2530 = vmul.f32 %v2524, 1.442695
    %v2531 = vpow.pop %v2530
    %v2532 = vmul.f32 %v2525, 1.442695
    %v2533 = vpow.pop %v2532
    %v2534 = vadd.f32 %v2527, 1.0
    %v2535 = vadd.f32 %v2529, 1.0
    %v2536 = vadd.f32 %v2531, 1.0
    %v2537 = vadd.f32 %v2533, 1.0
    %v2538 = vrcp.pop %v2534
    %v2539 = vmul.f32 1.0, %v2538
    %v2540 = vrcp.pop %v2535
    %v2541 = vmul.f32 1.0, %v2540
    %v2542 = vrcp.pop %v2536
    %v2543 = vmul.f32 1.0, %v2542
    %v2544 = vrcp.pop %v2537
    %v2545 = vmul.f32 1.0, %v2544
    %v2546 = vmul.f32 %v2543, 2.0
    %v2547 = vsub.f32 %v2546, 1.0
    %v2548 = vmul.f32 %v2541, %v2428
    %v2549 = vmul.f32 %v2539, %v2547
    %v2550 = vadd.f32 %v2548, %v2549
    %v2551 = vtanh.pop %v2550
    %v2552 = vmul.f32 %v2545, %v2551
    %v2553 = vld [vmem:[#allocation2 + $0x1e0] sm:$0xff]
    %v2554 = vld [vmem:[#allocation2 + $0x1e8] sm:$0xff]
    %v2555 = vld [vmem:[#allocation2 + $0x1f0] sm:$0xff]
    %v2556 = vld [vmem:[#allocation2 + $0x1f8] sm:$0xff]
    %v2557 = vpack.c.bf16 %v2552, %v2552
    %2558 = vmatprep.subr.bf16.mxu0 %v665
    %2559 = vmatpush1.bf16.msra.mxu0 %v664
    %2560 = vmatprep.subr.bf16.mxu0 %v669
    %2561 = vmatpush1.bf16.msra.mxu0 %v668
    %2562 = vmatprep.subr.bf16.mxu0 %v673
    %2563 = vmatpush1.bf16.msra.mxu0 %v672
    %2564 = vmatprep.subr.bf16.mxu0 %v677
    %2565 = vmatpush1.bf16.msra.mxu0 %v676
    %2566 = vmatprep.subr.bf16.mxu0 %v681
    %2567 = vmatpush1.bf16.msra.mxu0 %v680
    %2568 = vmatprep.subr.bf16.mxu0 %v685
    %2569 = vmatpush1.bf16.msra.mxu0 %v684
    %2570 = vmatprep.subr.bf16.mxu0 %v689
    %2571 = vmatpush1.bf16.msra.mxu0 %v688
    %2572 = vmatprep.subr.bf16.mxu0 %v693
    %2573 = vmatpush1.bf16.msra.mxu0 %v692
    %2574 = vmatprep.subr.bf16.mxu0 0
    %2575 = vmatpush1.bf16.msra.mxu0 0
    %2576 = vmatprep.subr.bf16.mxu0 0
    %2577 = vmatpush1.bf16.msra.mxu0 0
    %2578 = vmatprep.subr.bf16.mxu0 0
    %2579 = vmatpush1.bf16.msra.mxu0 0
    %2580 = vmatprep.subr.bf16.mxu0 0
    %2581 = vmatpush1.bf16.msra.mxu0 0
    %2582 = vmatprep.subr.bf16.mxu0 0
    %2583 = vmatpush1.bf16.msra.mxu0 0
    %2584 = vmatprep.subr.bf16.mxu0 0
    %2585 = vmatpush1.bf16.msra.mxu0 0
    %2586 = vmatprep.subr.bf16.mxu0 0
    %2587 = vmatpush1.bf16.msra.mxu0 0
    %2588 = vmatprep.subr.bf16.mxu0 0
    %2589 = vmatpush1.bf16.msra.mxu0 0
    %2590 = vmatprep.mubr.bf16.mxu0 0
    %2591 = vmatmul.mubr.bf16.gmra.mrb[0].mxu0 %v2557
    %v2592 = vpop.f32.mrb[0].mxu0
    %v2593 = vadd.f32 0.0, %v2592
    %v2594 = vpop.f32.mrb[0].mxu0
    %v2595 = vadd.f32 0.0, %v2594
    %v2596 = vpop.f32.mrb[0].mxu0
    %v2597 = vpop.f32.mrb[0].mxu0
    %2598 = vdwg.mxu0
    %2599 = vmatprep.subr.bf16.mxu0 %v667
    %2600 = vmatpush1.bf16.msra.mxu0 %v666
    %2601 = vmatprep.subr.bf16.mxu0 %v671
    %2602 = vmatpush1.bf16.msra.mxu0 %v670
    %2603 = vmatprep.subr.bf16.mxu0 %v675
    %2604 = vmatpush1.bf16.msra.mxu0 %v674
    %2605 = vmatprep.subr.bf16.mxu0 %v679
    %2606 = vmatpush1.bf16.msra.mxu0 %v678
    %2607 = vmatprep.subr.bf16.mxu0 %v683
    %2608 = vmatpush1.bf16.msra.mxu0 %v682
    %2609 = vmatprep.subr.bf16.mxu0 %v687
    %2610 = vmatpush1.bf16.msra.mxu0 %v686
    %2611 = vmatprep.subr.bf16.mxu0 %v691
    %2612 = vmatpush1.bf16.msra.mxu0 %v690
    %2613 = vmatprep.subr.bf16.mxu0 %v695
    %2614 = vmatpush1.bf16.msra.mxu0 %v694
    %2615 = vmatprep.subr.bf16.mxu0 0
    %2616 = vmatpush1.bf16.msra.mxu0 0
    %2617 = vmatprep.subr.bf16.mxu0 0
    %2618 = vmatpush1.bf16.msra.mxu0 0
    %2619 = vmatprep.subr.bf16.mxu0 0
    %2620 = vmatpush1.bf16.msra.mxu0 0
    %2621 = vmatprep.subr.bf16.mxu0 0
    %2622 = vmatpush1.bf16.msra.mxu0 0
    %2623 = vmatprep.subr.bf16.mxu0 0
    %2624 = vmatpush1.bf16.msra.mxu0 0
    %2625 = vmatprep.subr.bf16.mxu0 0
    %2626 = vmatpush1.bf16.msra.mxu0 0
    %2627 = vmatprep.subr.bf16.mxu0 0
    %2628 = vmatpush1.bf16.msra.mxu0 0
    %2629 = vmatprep.subr.bf16.mxu0 0
    %2630 = vmatpush1.bf16.msra.mxu0 0
    %2631 = vmatprep.mubr.bf16.mxu0 0
    %2632 = vmatmul.mubr.bf16.gmra.mrb[0].mxu0 %v2557
    %v2633 = vpop.f32.mrb[0].mxu0
    %v2634 = vadd.f32 0.0, %v2633
    %v2635 = vpop.f32.mrb[0].mxu0
    %v2636 = vadd.f32 0.0, %v2635
    %v2637 = vpop.f32.mrb[0].mxu0
    %v2638 = vpop.f32.mrb[0].mxu0
    %2639 = vdwg.mxu0
    %v2640 = vadd.f32 %v2553, %v2593
    %v2641 = vadd.f32 %v2554, %v2595
    %v2642 = vadd.f32 %v2555, %v2634
    %v2643 = vadd.f32 %v2556, %v2636
    %v2644 = vxor.u32 %v2640, 2147483648
    %v2645 = vxor.u32 %v2641, 2147483648
    %v2646 = vxor.u32 %v2642, 2147483648
    %v2647 = vxor.u32 %v2643, 2147483648
    %v2648 = vmul.f32 %v2644, 1.442695
    %v2649 = vpow.pop %v2648
    %v2650 = vmul.f32 %v2645, 1.442695
    %v2651 = vpow.pop %v2650
    %v2652 = vmul.f32 %v2646, 1.442695
    %v2653 = vpow.pop %v2652
    %v2654 = vmul.f32 %v2647, 1.442695
    %v2655 = vpow.pop %v2654
    %v2656 = vadd.f32 %v2649, 1.0
    %v2657 = vadd.f32 %v2651, 1.0
    %v2658 = vadd.f32 %v2653, 1.0
    %v2659 = vadd.f32 %v2655, 1.0
    %v2660 = vrcp.pop %v2656
    %v2661 = vmul.f32 1.0, %v2660
    %v2662 = vrcp.pop %v2657
    %v2663 = vmul.f32 1.0, %v2662
    %v2664 = vrcp.pop %v2658
    %v2665 = vmul.f32 1.0, %v2664
    %v2666 = vrcp.pop %v2659
    %v2667 = vmul.f32 1.0, %v2666
    %v2668 = vmul.f32 %v2665, 2.0
    %v2669 = vsub.f32 %v2668, 1.0
    %v2670 = vmul.f32 %v2663, %v2550
    %v2671 = vmul.f32 %v2661, %v2669
    %v2672 = vadd.f32 %v2670, %v2671
    %v2673 = vtanh.pop %v2672
    %v2674 = vmul.f32 %v2667, %v2673
    %v2675 = vld [vmem:[%s8] sm:$0xff]
    %v2676 = vld [vmem:[%s8 + $0x8] sm:$0xff]
    %v2677 = vld [vmem:[%s8 + $0x10] sm:$0xff]
    %v2678 = vld [vmem:[%s9] sm:$0xff]
    %v2679 = vld [vmem:[%s9 + $0x8] sm:$0xff]
    %v2680 = vld [vmem:[%s9 + $0x10] sm:$0xff]
    %v2681 = vld [vmem:[%s9 + $0x18] sm:$0xff]
    %v2682 = vld [vmem:[%s9 + $0x20] sm:$0xff]
    %v2683 = vld [vmem:[%s0 + $0x80] sm:$0xff]
    %v2684 = vld [vmem:[%s0 + $0x88] sm:$0xff]
    %v2685 = vld [vmem:[%s0 + $0x90] sm:$0x3]
    %v2686 = vld [vmem:[%s3] sm:$0xf]
    %v2687 = vld [vmem:[%s3 + $0x4] sm:$0xf]
    %v2688 = vld [vmem:[%s3 + $0x8] sm:$0xf]
    %v2689 = vld [vmem:[%s3 + $0xc] sm:$0xf]
    %v2690 = vld [vmem:[%s3 + $0x10] sm:$0xf]
    %v2691 = vld [vmem:[%s3 + $0x14] sm:$0xf]
    %v2692 = vld [vmem:[%s3 + $0x18] sm:$0xf]
    %v2693 = vld [vmem:[%s3 + $0x1c] sm:$0xf]
    %v2694 = vpack.c.bf16 %v2684, %v2683
    %v2695 = vpack.c.bf16 %v2685, %v2685
    %v2704 = vunpack.c.l.b16 %v2686
    %v2705 = vunpack.c.l.b16 %v2687
    %v2706 = vunpack.c.l.b16 %v2688
    %v2707 = vunpack.c.l.b16 %v2689
    %v2708 = vunpack.c.l.b16 %v2690
    %v2709 = vunpack.c.l.b16 %v2691
    %v2710 = vunpack.c.l.b16 %v2692
    %v2711 = vunpack.c.l.b16 %v2693
    %v2712 = vpack.c.b16 %v2705, %v2704
    %v2713 = vpack.c.b16 %v2707, %v2706
    %v2714 = vpack.c.b16 %v2709, %v2708
    %v2715 = vpack.c.b16 %v2711, %v2710
    %v2721 = vsel %vm217, %v2694, 0
    %v2724 = vsel %vm217, %v2695, 0
    %2726 = vmatprep.subr.bf16.mxu0 0
    %2727 = vmatpush1.bf16.msra.mxu0 %v2712
    %2728 = vmatprep.subr.bf16.mxu0 0
    %2729 = vmatpush1.bf16.msra.mxu0 %v2713
    %2730 = vmatprep.subr.bf16.mxu0 0
    %2731 = vmatpush1.bf16.msra.mxu0 %v2714
    %2732 = vmatprep.subr.bf16.mxu0 0
    %2733 = vmatpush1.bf16.msra.mxu0 %v2715
    %2734 = vmatprep.subr.bf16.mxu0 0
    %2735 = vmatpush1.bf16.msra.mxu0 0
    %2736 = vmatprep.subr.bf16.mxu0 0
    %2737 = vmatpush1.bf16.msra.mxu0 0
    %2738 = vmatprep.subr.bf16.mxu0 0
    %2739 = vmatpush1.bf16.msra.mxu0 0
    %2740 = vmatprep.subr.bf16.mxu0 0
    %2741 = vmatpush1.bf16.msra.mxu0 0
    %2742 = vmatprep.subr.bf16.mxu0 0
    %2743 = vmatpush1.bf16.msra.mxu0 0
    %2744 = vmatprep.subr.bf16.mxu0 0
    %2745 = vmatpush1.bf16.msra.mxu0 0
    %2746 = vmatprep.subr.bf16.mxu0 0
    %2747 = vmatpush1.bf16.msra.mxu0 0
    %2748 = vmatprep.subr.bf16.mxu0 0
    %2749 = vmatpush1.bf16.msra.mxu0 0
    %2750 = vmatprep.subr.bf16.mxu0 0
    %2751 = vmatpush1.bf16.msra.mxu0 0
    %2752 = vmatprep.subr.bf16.mxu0 0
    %2753 = vmatpush1.bf16.msra.mxu0 0
    %2754 = vmatprep.subr.bf16.mxu0 0
    %2755 = vmatpush1.bf16.msra.mxu0 0
    %2756 = vmatprep.subr.bf16.mxu0 0
    %2757 = vmatpush1.bf16.msra.mxu0 0
    %2758 = vmatprep.mubr.bf16.mxu0 0
    %2759 = vmatmul.mubr.bf16.gmra.mrb[0].mxu0 %v2721
    %v2760 = vpop.f32.mrb[0].mxu0
    %v2761 = vadd.f32 0.0, %v2760
    %v2762 = vpop.f32.mrb[0].mxu0
    %v2763 = vpop.f32.mrb[0].mxu0
    %v2764 = vadd.f32 0.0, %v2763
    %v2765 = vpop.f32.mrb[0].mxu0
    %2766 = vmatprep.mubr.bf16.mxu0 0
    %2767 = vmatmul.mubr.bf16.gmra.mrb[0].mxu0 %v2724
    %v2768 = vpop.f32.mrb[0].mxu0
    %v2769 = vadd.f32 0.0, %v2768
    %v2770 = vpop.f32.mrb[0].mxu0
    %v2771 = vpop.f32.mrb[0].mxu0
    %v2772 = vpop.f32.mrb[0].mxu0
    %2773 = vdwg.mxu0
    %v2774 = vlaneseq
    %v2775 = vshrl.u32 %v2774, 7
    %v2776 = vsub.s32 1, %v2775
    %v2777 = vrot.slane %v77, %v2776
    %v2778 = vmul.f32 %v2761, %v2777
    %v2779 = vmul.f32 %v2764, %v2777
    %v2780 = vmul.f32 %v2769, %v2777
    %v2781 = vlaneseq
    %v2782 = vshrl.u32 %v2781, 7
    %v2783 = vsub.s32 2, %v2782
    %v2784 = vrot.slane %v77, %v2783
    %v2785 = vadd.f32 %v2778, %v2784
    %v2786 = vadd.f32 %v2779, %v2784
    %v2787 = vadd.f32 %v2780, %v2784
    %v2788 = vmax.f32 %v2785, 0.0
    %v2789 = vmax.f32 %v2786, 0.0
    %v2790 = vmax.f32 %v2787, 0.0
    %v2791 = vld [vmem:[%s6] sm:$0xff]
    %v2792 = vld [vmem:[%s6 + $0x8] sm:$0xff]
    %v2793 = vld [vmem:[%s6 + $0x10] sm:$0xff]
    %v2794 = vld [vmem:[%s6 + $0x18] sm:$0xff]
    %v2795 = vld [vmem:[%s6 + $0x20] sm:$0xff]
    %v2796 = vld [vmem:[%s6 + $0x28] sm:$0xff]
    %v2797 = vld [vmem:[%s6 + $0x30] sm:$0xff]
    %v2798 = vld [vmem:[%s6 + $0x38] sm:$0xff]
    %v2799 = vld [vmem:[%s6 + $0x40] sm:$0xff]
    %v2800 = vld [vmem:[%s6 + $0x48] sm:$0xff]
    %v2801 = vld [vmem:[%s6 + $0x50] sm:$0xff]
    %v2802 = vld [vmem:[%s6 + $0x58] sm:$0xff]
    %v2803 = vld [vmem:[%s6 + $0x60] sm:$0xff]
    %v2804 = vld [vmem:[%s6 + $0x68] sm:$0xff]
    %v2805 = vld [vmem:[%s6 + $0x70] sm:$0xff]
    %v2806 = vld [vmem:[%s6 + $0x78] sm:$0xff]
    %v2807 = vld [vmem:[%s6 + $0x80] sm:$0xff]
    %v2808 = vld [vmem:[%s6 + $0x88] sm:$0xff]
    %v2809 = vld [vmem:[%s6 + $0x90] sm:$0xff]
    %v2810 = vld [vmem:[%s6 + $0x98] sm:$0xff]
    %v2811 = vld [vmem:[%s6 + $0xa0] sm:$0xff]
    %v2812 = vld [vmem:[%s6 + $0xa8] sm:$0xff]
    %v2813 = vld [vmem:[%s6 + $0xb0] sm:$0xff]
    %v2814 = vld [vmem:[%s6 + $0xb8] sm:$0xff]
    %v2815 = vld [vmem:[%s6 + $0xc0] sm:$0xff]
    %v2816 = vld [vmem:[%s6 + $0xc8] sm:$0xff]
    %v2817 = vld [vmem:[%s6 + $0xd0] sm:$0xff]
    %v2818 = vld [vmem:[%s6 + $0xd8] sm:$0xff]
    %v2819 = vld [vmem:[%s6 + $0xe0] sm:$0xff]
    %v2820 = vld [vmem:[%s6 + $0xe8] sm:$0xff]
    %v2821 = vld [vmem:[%s6 + $0xf0] sm:$0xff]
    %v2822 = vld [vmem:[%s6 + $0xf8] sm:$0xff]
    %v2823 = vld [vmem:[%s6 + $0x100] sm:$0xff]
    %v2824 = vld [vmem:[%s6 + $0x108] sm:$0xff]
    %v2825 = vld [vmem:[%s6 + $0x110] sm:$0xff]
    %v2826 = vld [vmem:[%s6 + $0x118] sm:$0xff]
    %v2827 = vld [vmem:[%s6 + $0x120] sm:$0xff]
    %v2828 = vld [vmem:[%s6 + $0x128] sm:$0xff]
    %v2829 = vld [vmem:[%s6 + $0x130] sm:$0xff]
    %v2830 = vld [vmem:[%s6 + $0x138] sm:$0xff]
    %v2831 = vld [vmem:[%s6 + $0x140] sm:$0xff]
    %v2832 = vld [vmem:[%s6 + $0x148] sm:$0xff]
    %v2833 = vld [vmem:[%s6 + $0x150] sm:$0xff]
    %v2834 = vld [vmem:[%s6 + $0x158] sm:$0xff]
    %v2835 = vld [vmem:[%s6 + $0x160] sm:$0xff]
    %v2836 = vld [vmem:[%s6 + $0x168] sm:$0xff]
    %v2837 = vld [vmem:[%s6 + $0x170] sm:$0xff]
    %v2838 = vld [vmem:[%s6 + $0x178] sm:$0xff]
    %v2839 = vpack.c.bf16 %v2675, %v2675
    %v2840 = vpack.c.bf16 %v2789, %v2788
    %v2841 = vpack.c.bf16 %v2790, %v2790
    %vm2842 = vcmask 146432
    %v2844 = vsel %vm2842, %v2839, 0
    %vm2846 = vcmask 1040384
    %v2848 = vsel %vm2846, %v2841, 0
    %2850 = vmatprep.subr.bf16.mxu0 0
    %2851 = vmatpush1.bf16.msra.mxu0 %v2840
    %2852 = vmatprep.subr.bf16.mxu0 0
    %2853 = vmatpush1.bf16.msra.mxu0 %v2848
    %2854 = vmatprep.subr.bf16.mxu0 0
    %2855 = vmatpush1.bf16.msra.mxu0 0
    %2856 = vmatprep.subr.bf16.mxu0 0
    %2857 = vmatpush1.bf16.msra.mxu0 0
    %2858 = vmatprep.subr.bf16.mxu0 0
    %2859 = vmatpush1.bf16.msra.mxu0 0
    %2860 = vmatprep.subr.bf16.mxu0 0
    %2861 = vmatpush1.bf16.msra.mxu0 0
    %2862 = vmatprep.subr.bf16.mxu0 0
    %2863 = vmatpush1.bf16.msra.mxu0 0
    %2864 = vmatprep.subr.bf16.mxu0 0
    %2865 = vmatpush1.bf16.msra.mxu0 0
    %2866 = vmatprep.subr.bf16.mxu0 0
    %2867 = vmatpush1.bf16.msra.mxu0 0
    %2868 = vmatprep.subr.bf16.mxu0 0
    %2869 = vmatpush1.bf16.msra.mxu0 0
    %2870 = vmatprep.subr.bf16.mxu0 0
    %2871 = vmatpush1.bf16.msra.mxu0 0
    %2872 = vmatprep.subr.bf16.mxu0 0
    %2873 = vmatpush1.bf16.msra.mxu0 0
    %2874 = vmatprep.subr.bf16.mxu0 0
    %2875 = vmatpush1.bf16.msra.mxu0 0
    %2876 = vmatprep.subr.bf16.mxu0 0
    %2877 = vmatpush1.bf16.msra.mxu0 0
    %2878 = vmatprep.subr.bf16.mxu0 0
    %2879 = vmatpush1.bf16.msra.mxu0 0
    %2880 = vmatprep.subr.bf16.mxu0 0
    %2881 = vmatpush1.bf16.msra.mxu0 0
    %2882 = vmatprep.mubr.bf16.mxu0 0
    %2883 = vmatmul.mubr.bf16.gmra.mrb[0].mxu0 %v2844
    %v2884 = vpop.f32.mrb[0].mxu0
    %v2885 = vadd.f32 0.0, %v2884
    %v2886 = vpop.f32.mrb[0].mxu0
    %v2887 = vpop.f32.mrb[0].mxu0
    %v2888 = vpop.f32.mrb[0].mxu0
    %2889 = vdwg.mxu0
    %v2890 = vmul.f32 %v2885, 0.11111111
    %v2891 = vpack.c.bf16 %v2890, %v2890
    %v2908 = vunpack.c.l.b16 %v2791
    %v2909 = vunpack.c.h.b16 %v2791
    %v2910 = vunpack.c.l.b16 %v2792
    %v2911 = vunpack.c.h.b16 %v2792
    %v2912 = vunpack.c.l.b16 %v2793
    %v2913 = vunpack.c.h.b16 %v2793
    %v2914 = vunpack.c.l.b16 %v2794
    %v2915 = vunpack.c.h.b16 %v2794
    %v2916 = vunpack.c.l.b16 %v2795
    %v2917 = vunpack.c.h.b16 %v2795
    %v2918 = vunpack.c.l.b16 %v2796
    %v2919 = vunpack.c.h.b16 %v2796
    %v2920 = vunpack.c.l.b16 %v2797
    %v2921 = vunpack.c.h.b16 %v2797
    %v2922 = vunpack.c.l.b16 %v2798
    %v2923 = vunpack.c.h.b16 %v2798
    %v2924 = vunpack.c.l.b16 %v2799
    %v2925 = vunpack.c.h.b16 %v2799
    %v2926 = vunpack.c.l.b16 %v2800
    %v2927 = vunpack.c.h.b16 %v2800
    %v2928 = vunpack.c.l.b16 %v2801
    %v2929 = vunpack.c.h.b16 %v2801
    %v2930 = vunpack.c.l.b16 %v2802
    %v2931 = vunpack.c.h.b16 %v2802
    %v2932 = vunpack.c.l.b16 %v2803
    %v2933 = vunpack.c.h.b16 %v2803
    %v2934 = vunpack.c.l.b16 %v2804
    %v2935 = vunpack.c.h.b16 %v2804
    %v2936 = vunpack.c.l.b16 %v2805
    %v2937 = vunpack.c.h.b16 %v2805
    %v2938 = vunpack.c.l.b16 %v2806
    %v2939 = vunpack.c.h.b16 %v2806
    %v2940 = vpack.c.b16 %v2910, %v2908
    %v2941 = vpack.c.b16 %v2911, %v2909
    %v2942 = vpack.c.b16 %v2914, %v2912
    %v2943 = vpack.c.b16 %v2915, %v2913
    %v2944 = vpack.c.b16 %v2918, %v2916
    %v2945 = vpack.c.b16 %v2919, %v2917
    %v2946 = vpack.c.b16 %v2922, %v2920
    %v2947 = vpack.c.b16 %v2923, %v2921
    %v2948 = vpack.c.b16 %v2926, %v2924
    %v2949 = vpack.c.b16 %v2927, %v2925
    %v2950 = vpack.c.b16 %v2930, %v2928
    %v2951 = vpack.c.b16 %v2931, %v2929
    %v2952 = vpack.c.b16 %v2934, %v2932
    %v2953 = vpack.c.b16 %v2935, %v2933
    %v2954 = vpack.c.b16 %v2938, %v2936
    %v2955 = vpack.c.b16 %v2939, %v2937
    %2972 = vmatprep.subr.bf16.mxu0 %v2941
    %2973 = vmatpush1.bf16.msra.mxu0 %v2940
    %2974 = vmatprep.subr.bf16.mxu0 %v2943
    %2975 = vmatpush1.bf16.msra.mxu0 %v2942
    %2976 = vmatprep.subr.bf16.mxu0 %v2945
    %2977 = vmatpush1.bf16.msra.mxu0 %v2944
    %2978 = vmatprep.subr.bf16.mxu0 %v2947
    %2979 = vmatpush1.bf16.msra.mxu0 %v2946
    %2980 = vmatprep.subr.bf16.mxu0 %v2949
    %2981 = vmatpush1.bf16.msra.mxu0 %v2948
    %2982 = vmatprep.subr.bf16.mxu0 %v2951
    %2983 = vmatpush1.bf16.msra.mxu0 %v2950
    %2984 = vmatprep.subr.bf16.mxu0 %v2953
    %2985 = vmatpush1.bf16.msra.mxu0 %v2952
    %2986 = vmatprep.subr.bf16.mxu0 %v2955
    %2987 = vmatpush1.bf16.msra.mxu0 %v2954
    %2988 = vmatprep.subr.bf16.mxu0 0
    %2989 = vmatpush1.bf16.msra.mxu0 0
    %2990 = vmatprep.subr.bf16.mxu0 0
    %2991 = vmatpush1.bf16.msra.mxu0 0
    %2992 = vmatprep.subr.bf16.mxu0 0
    %2993 = vmatpush1.bf16.msra.mxu0 0
    %2994 = vmatprep.subr.bf16.mxu0 0
    %2995 = vmatpush1.bf16.msra.mxu0 0
    %2996 = vmatprep.subr.bf16.mxu0 0
    %2997 = vmatpush1.bf16.msra.mxu0 0
    %2998 = vmatprep.subr.bf16.mxu0 0
    %2999 = vmatpush1.bf16.msra.mxu0 0
    %3000 = vmatprep.subr.bf16.mxu0 0
    %3001 = vmatpush1.bf16.msra.mxu0 0
    %3002 = vmatprep.subr.bf16.mxu0 0
    %3003 = vmatpush1.bf16.msra.mxu0 0
    %3004 = vmatprep.mubr.bf16.mxu0 0
    %3005 = vmatmul.mubr.bf16.gmra.mrb[0].mxu0 %v2891
    %v3006 = vpop.f32.mrb[0].mxu0
    %v3007 = vadd.f32 0.0, %v3006
    %v3008 = vpop.f32.mrb[0].mxu0
    %v3009 = vadd.f32 0.0, %v3008
    %v3010 = vpop.f32.mrb[0].mxu0
    %v3011 = vpop.f32.mrb[0].mxu0
    %3012 = vdwg.mxu0
    %v3013 = vmax.f32 %v3007, 0.0
    %v3014 = vmax.f32 %v3009, 0.0
    %v3015 = vpack.c.bf16 %v3013, %v3013
    %v3016 = vpack.c.bf16 %v3014, %v3014
    %v3049 = vunpack.c.l.b16 %v2807
    %v3050 = vunpack.c.h.b16 %v2807
    %v3051 = vunpack.c.l.b16 %v2808
    %v3052 = vunpack.c.h.b16 %v2808
    %v3053 = vunpack.c.l.b16 %v2809
    %v3054 = vunpack.c.h.b16 %v2809
    %v3055 = vunpack.c.l.b16 %v2810
    %v3056 = vunpack.c.h.b16 %v2810
    %v3057 = vunpack.c.l.b16 %v2811
    %v3058 = vunpack.c.h.b16 %v2811
    %v3059 = vunpack.c.l.b16 %v2812
    %v3060 = vunpack.c.h.b16 %v2812
    %v3061 = vunpack.c.l.b16 %v2813
    %v3062 = vunpack.c.h.b16 %v2813
    %v3063 = vunpack.c.l.b16 %v2814
    %v3064 = vunpack.c.h.b16 %v2814
    %v3065 = vunpack.c.l.b16 %v2815
    %v3066 = vunpack.c.h.b16 %v2815
    %v3067 = vunpack.c.l.b16 %v2816
    %v3068 = vunpack.c.h.b16 %v2816
    %v3069 = vunpack.c.l.b16 %v2817
    %v3070 = vunpack.c.h.b16 %v2817
    %v3071 = vunpack.c.l.b16 %v2818
    %v3072 = vunpack.c.h.b16 %v2818
    %v3073 = vunpack.c.l.b16 %v2819
    %v3074 = vunpack.c.h.b16 %v2819
    %v3075 = vunpack.c.l.b16 %v2820
    %v3076 = vunpack.c.h.b16 %v2820
    %v3077 = vunpack.c.l.b16 %v2821
    %v3078 = vunpack.c.h.b16 %v2821
    %v3079 = vunpack.c.l.b16 %v2822
    %v3080 = vunpack.c.h.b16 %v2822
    %v3081 = vunpack.c.l.b16 %v2823
    %v3082 = vunpack.c.h.b16 %v2823
    %v3083 = vunpack.c.l.b16 %v2824
    %v3084 = vunpack.c.h.b16 %v2824
    %v3085 = vunpack.c.l.b16 %v2825
    %v3086 = vunpack.c.h.b16 %v2825
    %v3087 = vunpack.c.l.b16 %v2826
    %v3088 = vunpack.c.h.b16 %v2826
    %v3089 = vunpack.c.l.b16 %v2827
    %v3090 = vunpack.c.h.b16 %v2827
    %v3091 = vunpack.c.l.b16 %v2828
    %v3092 = vunpack.c.h.b16 %v2828
    %v3093 = vunpack.c.l.b16 %v2829
    %v3094 = vunpack.c.h.b16 %v2829
    %v3095 = vunpack.c.l.b16 %v2830
    %v3096 = vunpack.c.h.b16 %v2830
    %v3097 = vunpack.c.l.b16 %v2831
    %v3098 = vunpack.c.h.b16 %v2831
    %v3099 = vunpack.c.l.b16 %v2832
    %v3100 = vunpack.c.h.b16 %v2832
    %v3101 = vunpack.c.l.b16 %v2833
    %v3102 = vunpack.c.h.b16 %v2833
    %v3103 = vunpack.c.l.b16 %v2834
    %v3104 = vunpack.c.h.b16 %v2834
    %v3105 = vunpack.c.l.b16 %v2835
    %v3106 = vunpack.c.h.b16 %v2835
    %v3107 = vunpack.c.l.b16 %v2836
    %v3108 = vunpack.c.h.b16 %v2836
    %v3109 = vunpack.c.l.b16 %v2837
    %v3110 = vunpack.c.h.b16 %v2837
    %v3111 = vunpack.c.l.b16 %v2838
    %v3112 = vunpack.c.h.b16 %v2838
    %v3113 = vpack.c.b16 %v3051, %v3049
    %v3114 = vpack.c.b16 %v3052, %v3050
    %v3115 = vpack.c.b16 %v3055, %v3053
    %v3116 = vpack.c.b16 %v3056, %v3054
    %v3117 = vpack.c.b16 %v3059, %v3057
    %v3118 = vpack.c.b16 %v3060, %v3058
    %v3119 = vpack.c.b16 %v3063, %v3061
    %v3120 = vpack.c.b16 %v3064, %v3062
    %v3121 = vpack.c.b16 %v3067, %v3065
    %v3122 = vpack.c.b16 %v3068, %v3066
    %v3123 = vpack.c.b16 %v3071, %v3069
    %v3124 = vpack.c.b16 %v3072, %v3070
    %v3125 = vpack.c.b16 %v3075, %v3073
    %v3126 = vpack.c.b16 %v3076, %v3074
    %v3127 = vpack.c.b16 %v3079, %v3077
    %v3128 = vpack.c.b16 %v3080, %v3078
    %v3129 = vpack.c.b16 %v3083, %v3081
    %v3130 = vpack.c.b16 %v3084, %v3082
    %v3131 = vpack.c.b16 %v3087, %v3085
    %v3132 = vpack.c.b16 %v3088, %v3086
    %v3133 = vpack.c.b16 %v3091, %v3089
    %v3134 = vpack.c.b16 %v3092, %v3090
    %v3135 = vpack.c.b16 %v3095, %v3093
    %v3136 = vpack.c.b16 %v3096, %v3094
    %v3137 = vpack.c.b16 %v3099, %v3097
    %v3138 = vpack.c.b16 %v3100, %v3098
    %v3139 = vpack.c.b16 %v3103, %v3101
    %v3140 = vpack.c.b16 %v3104, %v3102
    %v3141 = vpack.c.b16 %v3107, %v3105
    %v3142 = vpack.c.b16 %v3108, %v3106
    %v3143 = vpack.c.b16 %v3111, %v3109
    %v3144 = vpack.c.b16 %v3112, %v3110
    %3177 = vmatprep.subr.bf16.mxu0 %v3114
    %3178 = vmatpush1.bf16.msra.mxu0 %v3113
    %3179 = vmatprep.subr.bf16.mxu0 %v3116
    %3180 = vmatpush1.bf16.msra.mxu0 %v3115
    %3181 = vmatprep.subr.bf16.mxu0 %v3118
    %3182 = vmatpush1.bf16.msra.mxu0 %v3117
    %3183 = vmatprep.subr.bf16.mxu0 %v3120
    %3184 = vmatpush1.bf16.msra.mxu0 %v3119
    %3185 = vmatprep.subr.bf16.mxu0 %v3122
    %3186 = vmatpush1.bf16.msra.mxu0 %v3121
    %3187 = vmatprep.subr.bf16.mxu0 %v3124
    %3188 = vmatpush1.bf16.msra.mxu0 %v3123
    %3189 = vmatprep.subr.bf16.mxu0 %v3126
    %3190 = vmatpush1.bf16.msra.mxu0 %v3125
    %3191 = vmatprep.subr.bf16.mxu0 %v3128
    %3192 = vmatpush1.bf16.msra.mxu0 %v3127
    %3193 = vmatprep.subr.bf16.mxu0 %v3130
    %3194 = vmatpush1.bf16.msra.mxu0 %v3129
    %3195 = vmatprep.subr.bf16.mxu0 %v3132
    %3196 = vmatpush1.bf16.msra.mxu0 %v3131
    %3197 = vmatprep.subr.bf16.mxu0 %v3134
    %3198 = vmatpush1.bf16.msra.mxu0 %v3133
    %3199 = vmatprep.subr.bf16.mxu0 %v3136
    %3200 = vmatpush1.bf16.msra.mxu0 %v3135
    %3201 = vmatprep.subr.bf16.mxu0 %v3138
    %3202 = vmatpush1.bf16.msra.mxu0 %v3137
    %3203 = vmatprep.subr.bf16.mxu0 %v3140
    %3204 = vmatpush1.bf16.msra.mxu0 %v3139
    %3205 = vmatprep.subr.bf16.mxu0 %v3142
    %3206 = vmatpush1.bf16.msra.mxu0 %v3141
    %3207 = vmatprep.subr.bf16.mxu0 %v3144
    %3208 = vmatpush1.bf16.msra.mxu0 %v3143
    %3209 = vmatprep.mubr.bf16.mxu0 %v3016
    %3210 = vmatmul.mubr.bf16.gmra.mrb[0].mxu0 %v3015
    %v3211 = vpop.f32.mrb[0].mxu0
    %v3212 = vadd.f32 0.0, %v3211
    %v3213 = vpop.f32.mrb[0].mxu0
    %v3214 = vpop.f32.mrb[0].mxu0
    %v3215 = vpop.f32.mrb[0].mxu0
    %3216 = vdwg.mxu0
    %v3217 = vxor.u32 %v3212, 2147483648
    %v3218 = vmul.f32 %v3217, 1.442695
    %v3219 = vpow.pop %v3218
    %v3220 = vadd.f32 %v3219, 1.0
    %v3221 = vrcp.pop %v3220
    %v3222 = vmul.f32 1.0, %v3221
    %v3223 = vpack.c.bf16 %v2679, %v2678
    %v3224 = vpack.c.bf16 %v2680, %v2680
    %v3225 = vpack.c.bf16 %v3222, %v3222
    %vm3226 = vcmask 64512
    %v3228 = vsel %vm3226, %v3223, 0
    %v3231 = vsel %vm3226, %v3224, 0
    %vm3233 = vcmask 1043456
    %v3235 = vsel %vm3233, %v3225, 0
    %3237 = vmatprep.subr.bf16.mxu0 0
    %3238 = vmatpush1.bf16.msra.mxu0 %v3235
    %3239 = vmatprep.subr.bf16.mxu0 0
    %3240 = vmatpush1.bf16.msra.mxu0 0
    %3241 = vmatprep.subr.bf16.mxu0 0
    %3242 = vmatpush1.bf16.msra.mxu0 0
    %3243 = vmatprep.subr.bf16.mxu0 0
    %3244 = vmatpush1.bf16.msra.mxu0 0
    %3245 = vmatprep.subr.bf16.mxu0 0
    %3246 = vmatpush1.bf16.msra.mxu0 0
    %3247 = vmatprep.subr.bf16.mxu0 0
    %3248 = vmatpush1.bf16.msra.mxu0 0
    %3249 = vmatprep.subr.bf16.mxu0 0
    %3250 = vmatpush1.bf16.msra.mxu0 0
    %3251 = vmatprep.subr.bf16.mxu0 0
    %3252 = vmatpush1.bf16.msra.mxu0 0
    %3253 = vmatprep.subr.bf16.mxu0 0
    %3254 = vmatpush1.bf16.msra.mxu0 0
    %3255 = vmatprep.subr.bf16.mxu0 0
    %3256 = vmatpush1.bf16.msra.mxu0 0
    %3257 = vmatprep.subr.bf16.mxu0 0
    %3258 = vmatpush1.bf16.msra.mxu0 0
    %3259 = vmatprep.subr.bf16.mxu0 0
    %3260 = vmatpush1.bf16.msra.mxu0 0
    %3261 = vmatprep.subr.bf16.mxu0 0
    %3262 = vmatpush1.bf16.msra.mxu0 0
    %3263 = vmatprep.subr.bf16.mxu0 0
    %3264 = vmatpush1.bf16.msra.mxu0 0
    %3265 = vmatprep.subr.bf16.mxu0 0
    %3266 = vmatpush1.bf16.msra.mxu0 0
    %3267 = vmatprep.subr.bf16.mxu0 0
    %3268 = vmatpush1.bf16.msra.mxu0 0
    %3269 = vmatprep.mubr.bf16.mxu0 0
    %3270 = vmatmul.mubr.bf16.gmra.mrb[0].mxu0 %v3228
    %v3271 = vpop.f32.mrb[0].mxu0
    %v3272 = vadd.f32 0.0, %v3271
    %v3273 = vpop.f32.mrb[0].mxu0
    %v3274 = vpop.f32.mrb[0].mxu0
    %v3275 = vadd.f32 0.0, %v3274
    %v3276 = vpop.f32.mrb[0].mxu0
    %3277 = vmatprep.mubr.bf16.mxu0 0
    %3278 = vmatmul.mubr.bf16.gmra.mrb[0].mxu0 %v3231
    %v3279 = vpop.f32.mrb[0].mxu0
    %v3280 = vadd.f32 0.0, %v3279
    %v3281 = vpop.f32.mrb[0].mxu0
    %v3282 = vpop.f32.mrb[0].mxu0
    %v3283 = vpop.f32.mrb[0].mxu0
    %3284 = vdwg.mxu0
    %v3285 = vmul.f32 %v2788, %v3272
    %v3286 = vmul.f32 %v2789, %v3275
    %v3287 = vmul.f32 %v2790, %v3280
    %v3288 = vld [vmem:[#allocation5] sm:$0xff]
    %v3289 = vld [vmem:[#allocation5 + $0x8] sm:$0xff]
    %v3290 = vld [vmem:[#allocation5 + $0x10] sm:$0xff]
    %v3291 = vld [vmem:[#allocation5 + $0x18] sm:$0xff]
    %v3292 = vld [vmem:[#allocation5 + $0x20] sm:$0xff]
    %v3293 = vld [vmem:[#allocation5 + $0x28] sm:$0xff]
    %v3294 = vld [vmem:[#allocation5 + $0x30] sm:$0xff]
    %v3295 = vld [vmem:[#allocation5 + $0x38] sm:$0xff]
    %v3296 = vld [vmem:[#allocation5 + $0x40] sm:$0xff]
    %v3297 = vld [vmem:[#allocation5 + $0x48] sm:$0xff]
    %v3298 = vld [vmem:[#allocation5 + $0x50] sm:$0xff]
    %v3299 = vld [vmem:[#allocation5 + $0x58] sm:$0xff]
    %v3300 = vld [vmem:[#allocation5 + $0x60] sm:$0xff]
    %v3301 = vld [vmem:[#allocation5 + $0x68] sm:$0xff]
    %v3302 = vld [vmem:[#allocation5 + $0x70] sm:$0xff]
    %v3303 = vld [vmem:[#allocation5 + $0x78] sm:$0xff]
    %v3304 = vpack.c.bf16 %v3286, %v3285
    %s3305 = scalar_lea.vmem [#allocation5], 128
    %v3306 = vld [vmem:[%s3305] sm:$0xff]
    %v3307 = vld [vmem:[%s3305 + $0x8] sm:$0xff]
    %v3308 = vld [vmem:[%s3305 + $0x10] sm:$0xff]
    %v3309 = vld [vmem:[%s3305 + $0x18] sm:$0xff]
    %v3310 = vld [vmem:[%s3305 + $0x20] sm:$0xff]
    %v3311 = vld [vmem:[%s3305 + $0x28] sm:$0xff]
    %v3312 = vld [vmem:[%s3305 + $0x30] sm:$0xff]
    %v3313 = vld [vmem:[%s3305 + $0x38] sm:$0xff]
    %v3314 = vld [vmem:[%s3305 + $0x40] sm:$0xff]
    %v3315 = vld [vmem:[%s3305 + $0x48] sm:$0xff]
    %v3316 = vld [vmem:[%s3305 + $0x50] sm:$0xff]
    %v3317 = vld [vmem:[%s3305 + $0x58] sm:$0xff]
    %v3318 = vld [vmem:[%s3305 + $0x60] sm:$0xff]
    %v3319 = vld [vmem:[%s3305 + $0x68] sm:$0xff]
    %v3320 = vld [vmem:[%s3305 + $0x70] sm:$0xff]
    %v3321 = vld [vmem:[%s3305 + $0x78] sm:$0xff]
    %v3323 = vshrl.u32 %v3304, 16
    %v3325 = vshll.u32 %v3304, 16
    %v3327 = vrot.slane %v3325, 1
    %v3328 = vor.u32 %v3323, %v3327
    %v3346 = vunpack.c.l.b16 %v3306
    %v3347 = vunpack.c.h.b16 %v3306
    %v3348 = vunpack.c.l.b16 %v3307
    %v3349 = vunpack.c.h.b16 %v3307
    %v3350 = vunpack.c.l.b16 %v3308
    %v3351 = vunpack.c.h.b16 %v3308
    %v3352 = vunpack.c.l.b16 %v3309
    %v3353 = vunpack.c.h.b16 %v3309
    %v3354 = vunpack.c.l.b16 %v3310
    %v3355 = vunpack.c.h.b16 %v3310
    %v3356 = vunpack.c.l.b16 %v3311
    %v3357 = vunpack.c.h.b16 %v3311
    %v3358 = vunpack.c.l.b16 %v3312
    %v3359 = vunpack.c.h.b16 %v3312
    %v3360 = vunpack.c.l.b16 %v3313
    %v3361 = vunpack.c.h.b16 %v3313
    %v3362 = vunpack.c.l.b16 %v3314
    %v3363 = vunpack.c.h.b16 %v3314
    %v3364 = vunpack.c.l.b16 %v3315
    %v3365 = vunpack.c.h.b16 %v3315
    %v3366 = vunpack.c.l.b16 %v3316
    %v3367 = vunpack.c.h.b16 %v3316
    %v3368 = vunpack.c.l.b16 %v3317
    %v3369 = vunpack.c.h.b16 %v3317
    %v3370 = vunpack.c.l.b16 %v3318
    %v3371 = vunpack.c.h.b16 %v3318
    %v3372 = vunpack.c.l.b16 %v3319
    %v3373 = vunpack.c.h.b16 %v3319
    %v3374 = vunpack.c.l.b16 %v3320
    %v3375 = vunpack.c.h.b16 %v3320
    %v3376 = vunpack.c.l.b16 %v3321
    %v3377 = vunpack.c.h.b16 %v3321
    %v3378 = vpack.c.b16 %v3348, %v3346
    %v3379 = vpack.c.b16 %v3349, %v3347
    %v3380 = vpack.c.b16 %v3352, %v3350
    %v3381 = vpack.c.b16 %v3353, %v3351
    %v3382 = vpack.c.b16 %v3356, %v3354
    %v3383 = vpack.c.b16 %v3357, %v3355
    %v3384 = vpack.c.b16 %v3360, %v3358
    %v3385 = vpack.c.b16 %v3361, %v3359
    %v3386 = vpack.c.b16 %v3364, %v3362
    %v3387 = vpack.c.b16 %v3365, %v3363
    %v3388 = vpack.c.b16 %v3368, %v3366
    %v3389 = vpack.c.b16 %v3369, %v3367
    %v3390 = vpack.c.b16 %v3372, %v3370
    %v3391 = vpack.c.b16 %v3373, %v3371
    %v3392 = vpack.c.b16 %v3376, %v3374
    %v3393 = vpack.c.b16 %v3377, %v3375
    %3410 = vmatprep.subr.bf16.mxu0 %v3379
    %3411 = vmatpush1.bf16.msra.mxu0 %v3378
    %3412 = vmatprep.subr.bf16.mxu0 %v3381
    %3413 = vmatpush1.bf16.msra.mxu0 %v3380
    %3414 = vmatprep.subr.bf16.mxu0 %v3383
    %3415 = vmatpush1.bf16.msra.mxu0 %v3382
    %3416 = vmatprep.subr.bf16.mxu0 %v3385
    %3417 = vmatpush1.bf16.msra.mxu0 %v3384
    %3418 = vmatprep.subr.bf16.mxu0 %v3387
    %3419 = vmatpush1.bf16.msra.mxu0 %v3386
    %3420 = vmatprep.subr.bf16.mxu0 %v3389
    %3421 = vmatpush1.bf16.msra.mxu0 %v3388
    %3422 = vmatprep.subr.bf16.mxu0 %v3391
    %3423 = vmatpush1.bf16.msra.mxu0 %v3390
    %3424 = vmatprep.subr.bf16.mxu0 %v3393
    %3425 = vmatpush1.bf16.msra.mxu0 %v3392
    %3426 = vmatprep.subr.bf16.mxu0 0
    %3427 = vmatpush1.bf16.msra.mxu0 0
    %3428 = vmatprep.subr.bf16.mxu0 0
    %3429 = vmatpush1.bf16.msra.mxu0 0
    %3430 = vmatprep.subr.bf16.mxu0 0
    %3431 = vmatpush1.bf16.msra.mxu0 0
    %3432 = vmatprep.subr.bf16.mxu0 0
    %3433 = vmatpush1.bf16.msra.mxu0 0
    %3434 = vmatprep.subr.bf16.mxu0 0
    %3435 = vmatpush1.bf16.msra.mxu0 0
    %3436 = vmatprep.subr.bf16.mxu0 0
    %3437 = vmatpush1.bf16.msra.mxu0 0
    %3438 = vmatprep.subr.bf16.mxu0 0
    %3439 = vmatpush1.bf16.msra.mxu0 0
    %3440 = vmatprep.subr.bf16.mxu0 0
    %3441 = vmatpush1.bf16.msra.mxu0 0
    %3442 = vmatprep.mubr.bf16.mxu0 0
    %3443 = vmatmul.mubr.bf16.gmra.mrb[0].mxu0 %v3328
    %v3444 = vpop.f32.mrb[0].mxu0
    %v3445 = vadd.f32 0.0, %v3444
    %v3446 = vpop.f32.mrb[0].mxu0
    %v3447 = vadd.f32 0.0, %v3446
    %v3448 = vpop.f32.mrb[0].mxu0
    %v3449 = vadd.f32 0.0, %v3448
    %v3450 = vpop.f32.mrb[0].mxu0
    %v3451 = vadd.f32 0.0, %v3450
    %3452 = vdwg.mxu0
    %v3469 = vunpack.c.l.b16 %v3288
    %v3470 = vunpack.c.h.b16 %v3288
    %v3471 = vunpack.c.l.b16 %v3289
    %v3472 = vunpack.c.h.b16 %v3289
    %v3473 = vunpack.c.l.b16 %v3290
    %v3474 = vunpack.c.h.b16 %v3290
    %v3475 = vunpack.c.l.b16 %v3291
    %v3476 = vunpack.c.h.b16 %v3291
    %v3477 = vunpack.c.l.b16 %v3292
    %v3478 = vunpack.c.h.b16 %v3292
    %v3479 = vunpack.c.l.b16 %v3293
    %v3480 = vunpack.c.h.b16 %v3293
    %v3481 = vunpack.c.l.b16 %v3294
    %v3482 = vunpack.c.h.b16 %v3294
    %v3483 = vunpack.c.l.b16 %v3295
    %v3484 = vunpack.c.h.b16 %v3295
    %v3485 = vunpack.c.l.b16 %v3296
    %v3486 = vunpack.c.h.b16 %v3296
    %v3487 = vunpack.c.l.b16 %v3297
    %v3488 = vunpack.c.h.b16 %v3297
    %v3489 = vunpack.c.l.b16 %v3298
    %v3490 = vunpack.c.h.b16 %v3298
    %v3491 = vunpack.c.l.b16 %v3299
    %v3492 = vunpack.c.h.b16 %v3299
    %v3493 = vunpack.c.l.b16 %v3300
    %v3494 = vunpack.c.h.b16 %v3300
    %v3495 = vunpack.c.l.b16 %v3301
    %v3496 = vunpack.c.h.b16 %v3301
    %v3497 = vunpack.c.l.b16 %v3302
    %v3498 = vunpack.c.h.b16 %v3302
    %v3499 = vunpack.c.l.b16 %v3303
    %v3500 = vunpack.c.h.b16 %v3303
    %v3501 = vpack.c.b16 %v3471, %v3469
    %v3502 = vpack.c.b16 %v3472, %v3470
    %v3503 = vpack.c.b16 %v3475, %v3473
    %v3504 = vpack.c.b16 %v3476, %v3474
    %v3505 = vpack.c.b16 %v3479, %v3477
    %v3506 = vpack.c.b16 %v3480, %v3478
    %v3507 = vpack.c.b16 %v3483, %v3481
    %v3508 = vpack.c.b16 %v3484, %v3482
    %v3509 = vpack.c.b16 %v3487, %v3485
    %v3510 = vpack.c.b16 %v3488, %v3486
    %v3511 = vpack.c.b16 %v3491, %v3489
    %v3512 = vpack.c.b16 %v3492, %v3490
    %v3513 = vpack.c.b16 %v3495, %v3493
    %v3514 = vpack.c.b16 %v3496, %v3494
    %v3515 = vpack.c.b16 %v3499, %v3497
    %v3516 = vpack.c.b16 %v3500, %v3498
    %3533 = vmatprep.subr.bf16.mxu0 %v3502
    %3534 = vmatpush1.bf16.msra.mxu0 %v3501
    %3535 = vmatprep.subr.bf16.mxu0 %v3504
    %3536 = vmatpush1.bf16.msra.mxu0 %v3503
    %3537 = vmatprep.subr.bf16.mxu0 %v3506
    %3538 = vmatpush1.bf16.msra.mxu0 %v3505
    %3539 = vmatprep.subr.bf16.mxu0 %v3508
    %3540 = vmatpush1.bf16.msra.mxu0 %v3507
    %3541 = vmatprep.subr.bf16.mxu0 %v3510
    %3542 = vmatpush1.bf16.msra.mxu0 %v3509
    %3543 = vmatprep.subr.bf16.mxu0 %v3512
    %3544 = vmatpush1.bf16.msra.mxu0 %v3511
    %3545 = vmatprep.subr.bf16.mxu0 %v3514
    %3546 = vmatpush1.bf16.msra.mxu0 %v3513
    %3547 = vmatprep.subr.bf16.mxu0 %v3516
    %3548 = vmatpush1.bf16.msra.mxu0 %v3515
    %3549 = vmatprep.subr.bf16.mxu0 0
    %3550 = vmatpush1.bf16.msra.mxu0 0
    %3551 = vmatprep.subr.bf16.mxu0 0
    %3552 = vmatpush1.bf16.msra.mxu0 0
    %3553 = vmatprep.subr.bf16.mxu0 0
    %3554 = vmatpush1.bf16.msra.mxu0 0
    %3555 = vmatprep.subr.bf16.mxu0 0
    %3556 = vmatpush1.bf16.msra.mxu0 0
    %3557 = vmatprep.subr.bf16.mxu0 0
    %3558 = vmatpush1.bf16.msra.mxu0 0
    %3559 = vmatprep.subr.bf16.mxu0 0
    %3560 = vmatpush1.bf16.msra.mxu0 0
    %3561 = vmatprep.subr.bf16.mxu0 0
    %3562 = vmatpush1.bf16.msra.mxu0 0
    %3563 = vmatprep.subr.bf16.mxu0 0
    %3564 = vmatpush1.bf16.msra.mxu0 0
    %3565 = vmatprep.mubr.bf16.mxu0 0
    %3566 = vmatmul.mubr.bf16.gmra.mrb[0].mxu0 %v3304
    %v3567 = vpop.f32.mrb[0].mxu0
    %v3568 = vadd.f32 %v3445, %v3567
    %v3569 = vpop.f32.mrb[0].mxu0
    %v3570 = vadd.f32 %v3447, %v3569
    %v3571 = vpop.f32.mrb[0].mxu0
    %v3572 = vadd.f32 %v3449, %v3571
    %v3573 = vpop.f32.mrb[0].mxu0
    %v3574 = vadd.f32 %v3451, %v3573
    %3575 = vdwg.mxu0
    %s3576 = scalar_lea.vmem [#allocation5], 256
    %v3577 = vld [vmem:[%s3576] sm:$0xff]
    %v3578 = vld [vmem:[%s3576 + $0x8] sm:$0xff]
    %v3579 = vld [vmem:[%s3576 + $0x10] sm:$0xff]
    %v3580 = vld [vmem:[%s3576 + $0x18] sm:$0xff]
    %v3581 = vld [vmem:[%s3576 + $0x20] sm:$0xff]
    %v3582 = vld [vmem:[%s3576 + $0x28] sm:$0xff]
    %v3583 = vld [vmem:[%s3576 + $0x30] sm:$0xff]
    %v3584 = vld [vmem:[%s3576 + $0x38] sm:$0xff]
    %v3585 = vld [vmem:[%s3576 + $0x40] sm:$0xff]
    %v3586 = vld [vmem:[%s3576 + $0x48] sm:$0xff]
    %v3587 = vld [vmem:[%s3576 + $0x50] sm:$0xff]
    %v3588 = vld [vmem:[%s3576 + $0x58] sm:$0xff]
    %v3589 = vld [vmem:[%s3576 + $0x60] sm:$0xff]
    %v3590 = vld [vmem:[%s3576 + $0x68] sm:$0xff]
    %v3591 = vld [vmem:[%s3576 + $0x70] sm:$0xff]
    %v3592 = vld [vmem:[%s3576 + $0x78] sm:$0xff]
    %v3594 = vrot.slane %v3304, 1
    %v3612 = vunpack.c.l.b16 %v3577
    %v3613 = vunpack.c.h.b16 %v3577
    %v3614 = vunpack.c.l.b16 %v3578
    %v3615 = vunpack.c.h.b16 %v3578
    %v3616 = vunpack.c.l.b16 %v3579
    %v3617 = vunpack.c.h.b16 %v3579
    %v3618 = vunpack.c.l.b16 %v3580
    %v3619 = vunpack.c.h.b16 %v3580
    %v3620 = vunpack.c.l.b16 %v3581
    %v3621 = vunpack.c.h.b16 %v3581
    %v3622 = vunpack.c.l.b16 %v3582
    %v3623 = vunpack.c.h.b16 %v3582
    %v3624 = vunpack.c.l.b16 %v3583
    %v3625 = vunpack.c.h.b16 %v3583
    %v3626 = vunpack.c.l.b16 %v3584
    %v3627 = vunpack.c.h.b16 %v3584
    %v3628 = vunpack.c.l.b16 %v3585
    %v3629 = vunpack.c.h.b16 %v3585
    %v3630 = vunpack.c.l.b16 %v3586
    %v3631 = vunpack.c.h.b16 %v3586
    %v3632 = vunpack.c.l.b16 %v3587
    %v3633 = vunpack.c.h.b16 %v3587
    %v3634 = vunpack.c.l.b16 %v3588
    %v3635 = vunpack.c.h.b16 %v3588
    %v3636 = vunpack.c.l.b16 %v3589
    %v3637 = vunpack.c.h.b16 %v3589
    %v3638 = vunpack.c.l.b16 %v3590
    %v3639 = vunpack.c.h.b16 %v3590
    %v3640 = vunpack.c.l.b16 %v3591
    %v3641 = vunpack.c.h.b16 %v3591
    %v3642 = vunpack.c.l.b16 %v3592
    %v3643 = vunpack.c.h.b16 %v3592
    %v3644 = vpack.c.b16 %v3614, %v3612
    %v3645 = vpack.c.b16 %v3615, %v3613
    %v3646 = vpack.c.b16 %v3618, %v3616
    %v3647 = vpack.c.b16 %v3619, %v3617
    %v3648 = vpack.c.b16 %v3622, %v3620
    %v3649 = vpack.c.b16 %v3623, %v3621
    %v3650 = vpack.c.b16 %v3626, %v3624
    %v3651 = vpack.c.b16 %v3627, %v3625
    %v3652 = vpack.c.b16 %v3630, %v3628
    %v3653 = vpack.c.b16 %v3631, %v3629
    %v3654 = vpack.c.b16 %v3634, %v3632
    %v3655 = vpack.c.b16 %v3635, %v3633
    %v3656 = vpack.c.b16 %v3638, %v3636
    %v3657 = vpack.c.b16 %v3639, %v3637
    %v3658 = vpack.c.b16 %v3642, %v3640
    %v3659 = vpack.c.b16 %v3643, %v3641
    %3676 = vmatprep.subr.bf16.mxu0 %v3645
    %3677 = vmatpush1.bf16.msra.mxu0 %v3644
    %3678 = vmatprep.subr.bf16.mxu0 %v3647
    %3679 = vmatpush1.bf16.msra.mxu0 %v3646
    %3680 = vmatprep.subr.bf16.mxu0 %v3649
    %3681 = vmatpush1.bf16.msra.mxu0 %v3648
    %3682 = vmatprep.subr.bf16.mxu0 %v3651
    %3683 = vmatpush1.bf16.msra.mxu0 %v3650
    %3684 = vmatprep.subr.bf16.mxu0 %v3653
    %3685 = vmatpush1.bf16.msra.mxu0 %v3652
    %3686 = vmatprep.subr.bf16.mxu0 %v3655
    %3687 = vmatpush1.bf16.msra.mxu0 %v3654
    %3688 = vmatprep.subr.bf16.mxu0 %v3657
    %3689 = vmatpush1.bf16.msra.mxu0 %v3656
    %3690 = vmatprep.subr.bf16.mxu0 %v3659
    %3691 = vmatpush1.bf16.msra.mxu0 %v3658
    %3692 = vmatprep.subr.bf16.mxu0 0
    %3693 = vmatpush1.bf16.msra.mxu0 0
    %3694 = vmatprep.subr.bf16.mxu0 0
    %3695 = vmatpush1.bf16.msra.mxu0 0
    %3696 = vmatprep.subr.bf16.mxu0 0
    %3697 = vmatpush1.bf16.msra.mxu0 0
    %3698 = vmatprep.subr.bf16.mxu0 0
    %3699 = vmatpush1.bf16.msra.mxu0 0
    %3700 = vmatprep.subr.bf16.mxu0 0
    %3701 = vmatpush1.bf16.msra.mxu0 0
    %3702 = vmatprep.subr.bf16.mxu0 0
    %3703 = vmatpush1.bf16.msra.mxu0 0
    %3704 = vmatprep.subr.bf16.mxu0 0
    %3705 = vmatpush1.bf16.msra.mxu0 0
    %3706 = vmatprep.subr.bf16.mxu0 0
    %3707 = vmatpush1.bf16.msra.mxu0 0
    %3708 = vmatprep.mubr.bf16.mxu0 0
    %3709 = vmatmul.mubr.bf16.gmra.mrb[0].mxu0 %v3594
    %v3710 = vpop.f32.mrb[0].mxu0
    %v3711 = vadd.f32 0.0, %v3710
    %v3712 = vpop.f32.mrb[0].mxu0
    %v3713 = vadd.f32 0.0, %v3712
    %v3714 = vpop.f32.mrb[0].mxu0
    %v3715 = vadd.f32 0.0, %v3714
    %v3716 = vpop.f32.mrb[0].mxu0
    %v3717 = vadd.f32 0.0, %v3716
    %3718 = vdwg.mxu0
    %v3719 = vadd.f32 %v3568, %v3711
    %v3720 = vadd.f32 %v3570, %v3713
    %v3721 = vadd.f32 %v3572, %v3715
    %v3722 = vadd.f32 %v3574, %v3717
    %s3723 = scalar_lea.vmem [#allocation5], 384
    %v3724 = vld [vmem:[%s3723] sm:$0xff]
    %v3725 = vld [vmem:[%s3723 + $0x8] sm:$0xff]
    %v3726 = vld [vmem:[%s3723 + $0x10] sm:$0xff]
    %v3727 = vld [vmem:[%s3723 + $0x18] sm:$0xff]
    %v3728 = vld [vmem:[%s3723 + $0x20] sm:$0xff]
    %v3729 = vld [vmem:[%s3723 + $0x28] sm:$0xff]
    %v3730 = vld [vmem:[%s3723 + $0x30] sm:$0xff]
    %v3731 = vld [vmem:[%s3723 + $0x38] sm:$0xff]
    %v3732 = vld [vmem:[%s3723 + $0x40] sm:$0xff]
    %v3733 = vld [vmem:[%s3723 + $0x48] sm:$0xff]
    %v3734 = vld [vmem:[%s3723 + $0x50] sm:$0xff]
    %v3735 = vld [vmem:[%s3723 + $0x58] sm:$0xff]
    %v3736 = vld [vmem:[%s3723 + $0x60] sm:$0xff]
    %v3737 = vld [vmem:[%s3723 + $0x68] sm:$0xff]
    %v3738 = vld [vmem:[%s3723 + $0x70] sm:$0xff]
    %v3739 = vld [vmem:[%s3723 + $0x78] sm:$0xff]
    %v3740 = vpack.c.bf16 %v3287, %v3287
    %vm3741 = vsmask.f32 6400
    %v3742 = vrot.slane %v3323, 1
    %v3743 = vrot.slane %v3325, 2
    %v3744 = vor.u32 %v3742, %v3743
    %v3746 = vshll.u32 %v3740, 16
    %v3748 = vrot.slane %v3746, 2
    %v3749 = vsel %vm3741, %v3744, %v3748
    %v3767 = vunpack.c.l.b16 %v3724
    %v3768 = vunpack.c.h.b16 %v3724
    %v3769 = vunpack.c.l.b16 %v3725
    %v3770 = vunpack.c.h.b16 %v3725
    %v3771 = vunpack.c.l.b16 %v3726
    %v3772 = vunpack.c.h.b16 %v3726
    %v3773 = vunpack.c.l.b16 %v3727
    %v3774 = vunpack.c.h.b16 %v3727
    %v3775 = vunpack.c.l.b16 %v3728
    %v3776 = vunpack.c.h.b16 %v3728
    %v3777 = vunpack.c.l.b16 %v3729
    %v3778 = vunpack.c.h.b16 %v3729
    %v3779 = vunpack.c.l.b16 %v3730
    %v3780 = vunpack.c.h.b16 %v3730
    %v3781 = vunpack.c.l.b16 %v3731
    %v3782 = vunpack.c.h.b16 %v3731
    %v3783 = vunpack.c.l.b16 %v3732
    %v3784 = vunpack.c.h.b16 %v3732
    %v3785 = vunpack.c.l.b16 %v3733
    %v3786 = vunpack.c.h.b16 %v3733
    %v3787 = vunpack.c.l.b16 %v3734
    %v3788 = vunpack.c.h.b16 %v3734
    %v3789 = vunpack.c.l.b16 %v3735
    %v3790 = vunpack.c.h.b16 %v3735
    %v3791 = vunpack.c.l.b16 %v3736
    %v3792 = vunpack.c.h.b16 %v3736
    %v3793 = vunpack.c.l.b16 %v3737
    %v3794 = vunpack.c.h.b16 %v3737
    %v3795 = vunpack.c.l.b16 %v3738
    %v3796 = vunpack.c.h.b16 %v3738
    %v3797 = vunpack.c.l.b16 %v3739
    %v3798 = vunpack.c.h.b16 %v3739
    %v3799 = vpack.c.b16 %v3769, %v3767
    %v3800 = vpack.c.b16 %v3770, %v3768
    %v3801 = vpack.c.b16 %v3773, %v3771
    %v3802 = vpack.c.b16 %v3774, %v3772
    %v3803 = vpack.c.b16 %v3777, %v3775
    %v3804 = vpack.c.b16 %v3778, %v3776
    %v3805 = vpack.c.b16 %v3781, %v3779
    %v3806 = vpack.c.b16 %v3782, %v3780
    %v3807 = vpack.c.b16 %v3785, %v3783
    %v3808 = vpack.c.b16 %v3786, %v3784
    %v3809 = vpack.c.b16 %v3789, %v3787
    %v3810 = vpack.c.b16 %v3790, %v3788
    %v3811 = vpack.c.b16 %v3793, %v3791
    %v3812 = vpack.c.b16 %v3794, %v3792
    %v3813 = vpack.c.b16 %v3797, %v3795
    %v3814 = vpack.c.b16 %v3798, %v3796
    %3831 = vmatprep.subr.bf16.mxu0 %v3800
    %3832 = vmatpush1.bf16.msra.mxu0 %v3799
    %3833 = vmatprep.subr.bf16.mxu0 %v3802
    %3834 = vmatpush1.bf16.msra.mxu0 %v3801
    %3835 = vmatprep.subr.bf16.mxu0 %v3804
    %3836 = vmatpush1.bf16.msra.mxu0 %v3803
    %3837 = vmatprep.subr.bf16.mxu0 %v3806
    %3838 = vmatpush1.bf16.msra.mxu0 %v3805
    %3839 = vmatprep.subr.bf16.mxu0 %v3808
    %3840 = vmatpush1.bf16.msra.mxu0 %v3807
    %3841 = vmatprep.subr.bf16.mxu0 %v3810
    %3842 = vmatpush1.bf16.msra.mxu0 %v3809
    %3843 = vmatprep.subr.bf16.mxu0 %v3812
    %3844 = vmatpush1.bf16.msra.mxu0 %v3811
    %3845 = vmatprep.subr.bf16.mxu0 %v3814
    %3846 = vmatpush1.bf16.msra.mxu0 %v3813
    %3847 = vmatprep.subr.bf16.mxu0 0
    %3848 = vmatpush1.bf16.msra.mxu0 0
    %3849 = vmatprep.subr.bf16.mxu0 0
    %3850 = vmatpush1.bf16.msra.mxu0 0
    %3851 = vmatprep.subr.bf16.mxu0 0
    %3852 = vmatpush1.bf16.msra.mxu0 0
    %3853 = vmatprep.subr.bf16.mxu0 0
    %3854 = vmatpush1.bf16.msra.mxu0 0
    %3855 = vmatprep.subr.bf16.mxu0 0
    %3856 = vmatpush1.bf16.msra.mxu0 0
    %3857 = vmatprep.subr.bf16.mxu0 0
    %3858 = vmatpush1.bf16.msra.mxu0 0
    %3859 = vmatprep.subr.bf16.mxu0 0
    %3860 = vmatpush1.bf16.msra.mxu0 0
    %3861 = vmatprep.subr.bf16.mxu0 0
    %3862 = vmatpush1.bf16.msra.mxu0 0
    %3863 = vmatprep.mubr.bf16.mxu0 0
    %3864 = vmatmul.mubr.bf16.gmra.mrb[0].mxu0 %v3749
    %v3865 = vpop.f32.mrb[0].mxu0
    %v3866 = vadd.f32 0.0, %v3865
    %v3867 = vpop.f32.mrb[0].mxu0
    %v3868 = vadd.f32 0.0, %v3867
    %v3869 = vpop.f32.mrb[0].mxu0
    %v3870 = vadd.f32 0.0, %v3869
    %v3871 = vpop.f32.mrb[0].mxu0
    %v3872 = vadd.f32 0.0, %v3871
    %3873 = vdwg.mxu0
    %v3874 = vadd.f32 %v3719, %v3866
    %v3875 = vadd.f32 %v3720, %v3868
    %v3876 = vadd.f32 %v3721, %v3870
    %v3877 = vadd.f32 %v3722, %v3872
    %s3878 = scalar_lea.vmem [#allocation5], 512
    %v3879 = vld [vmem:[%s3878] sm:$0xff]
    %v3880 = vld [vmem:[%s3878 + $0x8] sm:$0xff]
    %v3881 = vld [vmem:[%s3878 + $0x10] sm:$0xff]
    %v3882 = vld [vmem:[%s3878 + $0x18] sm:$0xff]
    %v3883 = vld [vmem:[%s3878 + $0x20] sm:$0xff]
    %v3884 = vld [vmem:[%s3878 + $0x28] sm:$0xff]
    %v3885 = vld [vmem:[%s3878 + $0x30] sm:$0xff]
    %v3886 = vld [vmem:[%s3878 + $0x38] sm:$0xff]
    %v3887 = vld [vmem:[%s3878 + $0x40] sm:$0xff]
    %v3888 = vld [vmem:[%s3878 + $0x48] sm:$0xff]
    %v3889 = vld [vmem:[%s3878 + $0x50] sm:$0xff]
    %v3890 = vld [vmem:[%s3878 + $0x58] sm:$0xff]
    %v3891 = vld [vmem:[%s3878 + $0x60] sm:$0xff]
    %v3892 = vld [vmem:[%s3878 + $0x68] sm:$0xff]
    %v3893 = vld [vmem:[%s3878 + $0x70] sm:$0xff]
    %v3894 = vld [vmem:[%s3878 + $0x78] sm:$0xff]
    %vm3896 = vcmask 1045504
    %v3897 = vrot.slane %v3304, 2
    %v3898 = vrot.slane %v3740, 2
    %v3899 = vsel %vm3896, %v3897, %v3898
    %v3917 = vunpack.c.l.b16 %v3879
    %v3918 = vunpack.c.h.b16 %v3879
    %v3919 = vunpack.c.l.b16 %v3880
    %v3920 = vunpack.c.h.b16 %v3880
    %v3921 = vunpack.c.l.b16 %v3881
    %v3922 = vunpack.c.h.b16 %v3881
    %v3923 = vunpack.c.l.b16 %v3882
    %v3924 = vunpack.c.h.b16 %v3882
    %v3925 = vunpack.c.l.b16 %v3883
    %v3926 = vunpack.c.h.b16 %v3883
    %v3927 = vunpack.c.l.b16 %v3884
    %v3928 = vunpack.c.h.b16 %v3884
    %v3929 = vunpack.c.l.b16 %v3885
    %v3930 = vunpack.c.h.b16 %v3885
    %v3931 = vunpack.c.l.b16 %v3886
    %v3932 = vunpack.c.h.b16 %v3886
    %v3933 = vunpack.c.l.b16 %v3887
    %v3934 = vunpack.c.h.b16 %v3887
    %v3935 = vunpack.c.l.b16 %v3888
    %v3936 = vunpack.c.h.b16 %v3888
    %v3937 = vunpack.c.l.b16 %v3889
    %v3938 = vunpack.c.h.b16 %v3889
    %v3939 = vunpack.c.l.b16 %v3890
    %v3940 = vunpack.c.h.b16 %v3890
    %v3941 = vunpack.c.l.b16 %v3891
    %v3942 = vunpack.c.h.b16 %v3891
    %v3943 = vunpack.c.l.b16 %v3892
    %v3944 = vunpack.c.h.b16 %v3892
    %v3945 = vunpack.c.l.b16 %v3893
    %v3946 = vunpack.c.h.b16 %v3893
    %v3947 = vunpack.c.l.b16 %v3894
    %v3948 = vunpack.c.h.b16 %v3894
    %v3949 = vpack.c.b16 %v3919, %v3917
    %v3950 = vpack.c.b16 %v3920, %v3918
    %v3951 = vpack.c.b16 %v3923, %v3921
    %v3952 = vpack.c.b16 %v3924, %v3922
    %v3953 = vpack.c.b16 %v3927, %v3925
    %v3954 = vpack.c.b16 %v3928, %v3926
    %v3955 = vpack.c.b16 %v3931, %v3929
    %v3956 = vpack.c.b16 %v3932, %v3930
    %v3957 = vpack.c.b16 %v3935, %v3933
    %v3958 = vpack.c.b16 %v3936, %v3934
    %v3959 = vpack.c.b16 %v3939, %v3937
    %v3960 = vpack.c.b16 %v3940, %v3938
    %v3961 = vpack.c.b16 %v3943, %v3941
    %v3962 = vpack.c.b16 %v3944, %v3942
    %v3963 = vpack.c.b16 %v3947, %v3945
    %v3964 = vpack.c.b16 %v3948, %v3946
    %3981 = vmatprep.subr.bf16.mxu0 %v3950
    %3982 = vmatpush1.bf16.msra.mxu0 %v3949
    %3983 = vmatprep.subr.bf16.mxu0 %v3952
    %3984 = vmatpush1.bf16.msra.mxu0 %v3951
    %3985 = vmatprep.subr.bf16.mxu0 %v3954
    %3986 = vmatpush1.bf16.msra.mxu0 %v3953
    %3987 = vmatprep.subr.bf16.mxu0 %v3956
    %3988 = vmatpush1.bf16.msra.mxu0 %v3955
    %3989 = vmatprep.subr.bf16.mxu0 %v3958
    %3990 = vmatpush1.bf16.msra.mxu0 %v3957
    %3991 = vmatprep.subr.bf16.mxu0 %v3960
    %3992 = vmatpush1.bf16.msra.mxu0 %v3959
    %3993 = vmatprep.subr.bf16.mxu0 %v3962
    %3994 = vmatpush1.bf16.msra.mxu0 %v3961
    %3995 = vmatprep.subr.bf16.mxu0 %v3964
    %3996 = vmatpush1.bf16.msra.mxu0 %v3963
    %3997 = vmatprep.subr.bf16.mxu0 0
    %3998 = vmatpush1.bf16.msra.mxu0 0
    %3999 = vmatprep.subr.bf16.mxu0 0
    %4000 = vmatpush1.bf16.msra.mxu0 0
    %4001 = vmatprep.subr.bf16.mxu0 0
    %4002 = vmatpush1.bf16.msra.mxu0 0
    %4003 = vmatprep.subr.bf16.mxu0 0
    %4004 = vmatpush1.bf16.msra.mxu0 0
    %4005 = vmatprep.subr.bf16.mxu0 0
    %4006 = vmatpush1.bf16.msra.mxu0 0
    %4007 = vmatprep.subr.bf16.mxu0 0
    %4008 = vmatpush1.bf16.msra.mxu0 0
    %4009 = vmatprep.subr.bf16.mxu0 0
    %4010 = vmatpush1.bf16.msra.mxu0 0
    %4011 = vmatprep.subr.bf16.mxu0 0
    %4012 = vmatpush1.bf16.msra.mxu0 0
    %4013 = vmatprep.mubr.bf16.mxu0 0
    %4014 = vmatmul.mubr.bf16.gmra.mrb[0].mxu0 %v3899
    %v4015 = vpop.f32.mrb[0].mxu0
    %v4016 = vadd.f32 0.0, %v4015
    %v4017 = vpop.f32.mrb[0].mxu0
    %v4018 = vadd.f32 0.0, %v4017
    %v4019 = vpop.f32.mrb[0].mxu0
    %v4020 = vadd.f32 0.0, %v4019
    %v4021 = vpop.f32.mrb[0].mxu0
    %v4022 = vadd.f32 0.0, %v4021
    %4023 = vdwg.mxu0
    %v4024 = vadd.f32 %v3874, %v4016
    %v4025 = vadd.f32 %v3875, %v4018
    %v4026 = vadd.f32 %v3876, %v4020
    %v4027 = vadd.f32 %v3877, %v4022
    %v4028 = vlaneseq
    %v4029 = vshrl.u32 %v4028, 7
    %v4030 = vsub.s32 3, %v4029
    %v4031 = vrot.slane %v77, %v4030
    %v4032 = vlaneseq
    %v4033 = vshrl.u32 %v4032, 7
    %v4034 = vsub.s32 3, %v4033
    %v4035 = vrot.slane %v78, %v4034
    %v4036 = vmul.f32 %v4024, %v4031
    %v4037 = vmul.f32 %v4025, %v4035
    %v4038 = vmul.f32 %v4026, %v4031
    %v4039 = vmul.f32 %v4027, %v4035
    %v4040 = vlaneseq
    %v4041 = vshrl.u32 %v4040, 7
    %v4042 = vsub.s32 4, %v4041
    %v4043 = vrot.slane %v77, %v4042
    %v4044 = vlaneseq
    %v4045 = vshrl.u32 %v4044, 7
    %v4046 = vsub.s32 4, %v4045
    %v4047 = vrot.slane %v78, %v4046
    %v4048 = vadd.f32 %v4036, %v4043
    %v4049 = vadd.f32 %v4037, %v4047
    %v4050 = vadd.f32 %v4038, %v4043
    %v4051 = vadd.f32 %v4039, %v4047
    %v4052 = vmax.f32 %v4048, 0.0
    %v4053 = vmax.f32 %v4049, 0.0
    %v4054 = vmax.f32 %v4050, 0.0
    %v4055 = vmax.f32 %v4051, 0.0
    %v4056 = vld [vmem:[%s6 + $0x180] sm:$0xff]
    %v4057 = vld [vmem:[%s6 + $0x188] sm:$0xff]
    %v4058 = vld [vmem:[%s6 + $0x190] sm:$0xff]
    %v4059 = vld [vmem:[%s6 + $0x198] sm:$0xff]
    %v4060 = vld [vmem:[%s6 + $0x1a0] sm:$0xff]
    %v4061 = vld [vmem:[%s6 + $0x1a8] sm:$0xff]
    %v4062 = vld [vmem:[%s6 + $0x1b0] sm:$0xff]
    %v4063 = vld [vmem:[%s6 + $0x1b8] sm:$0xff]
    %v4064 = vld [vmem:[%s6 + $0x1c0] sm:$0xff]
    %v4065 = vld [vmem:[%s6 + $0x1c8] sm:$0xff]
    %v4066 = vld [vmem:[%s6 + $0x1d0] sm:$0xff]
    %v4067 = vld [vmem:[%s6 + $0x1d8] sm:$0xff]
    %v4068 = vld [vmem:[%s6 + $0x1e0] sm:$0xff]
    %v4069 = vld [vmem:[%s6 + $0x1e8] sm:$0xff]
    %v4070 = vld [vmem:[%s6 + $0x1f0] sm:$0xff]
    %v4071 = vld [vmem:[%s6 + $0x1f8] sm:$0xff]
    %v4072 = vld [vmem:[%s6 + $0x200] sm:$0xff]
    %v4073 = vld [vmem:[%s6 + $0x208] sm:$0xff]
    %v4074 = vld [vmem:[%s6 + $0x210] sm:$0xff]
    %v4075 = vld [vmem:[%s6 + $0x218] sm:$0xff]
    %v4076 = vld [vmem:[%s6 + $0x220] sm:$0xff]
    %v4077 = vld [vmem:[%s6 + $0x228] sm:$0xff]
    %v4078 = vld [vmem:[%s6 + $0x230] sm:$0xff]
    %v4079 = vld [vmem:[%s6 + $0x238] sm:$0xff]
    %v4080 = vld [vmem:[%s6 + $0x240] sm:$0xff]
    %v4081 = vld [vmem:[%s6 + $0x248] sm:$0xff]
    %v4082 = vld [vmem:[%s6 + $0x250] sm:$0xff]
    %v4083 = vld [vmem:[%s6 + $0x258] sm:$0xff]
    %v4084 = vld [vmem:[%s6 + $0x260] sm:$0xff]
    %v4085 = vld [vmem:[%s6 + $0x268] sm:$0xff]
    %v4086 = vld [vmem:[%s6 + $0x270] sm:$0xff]
    %v4087 = vld [vmem:[%s6 + $0x278] sm:$0xff]
    %v4088 = vld [vmem:[%s6 + $0x280] sm:$0xff]
    %v4089 = vld [vmem:[%s6 + $0x288] sm:$0xff]
    %v4090 = vld [vmem:[%s6 + $0x290] sm:$0xff]
    %v4091 = vld [vmem:[%s6 + $0x298] sm:$0xff]
    %v4092 = vld [vmem:[%s6 + $0x2a0] sm:$0xff]
    %v4093 = vld [vmem:[%s6 + $0x2a8] sm:$0xff]
    %v4094 = vld [vmem:[%s6 + $0x2b0] sm:$0xff]
    %v4095 = vld [vmem:[%s6 + $0x2b8] sm:$0xff]
    %v4096 = vld [vmem:[%s6 + $0x2c0] sm:$0xff]
    %v4097 = vld [vmem:[%s6 + $0x2c8] sm:$0xff]
    %v4098 = vld [vmem:[%s6 + $0x2d0] sm:$0xff]
    %v4099 = vld [vmem:[%s6 + $0x2d8] sm:$0xff]
    %v4100 = vld [vmem:[%s6 + $0x2e0] sm:$0xff]
    %v4101 = vld [vmem:[%s6 + $0x2e8] sm:$0xff]
    %v4102 = vld [vmem:[%s6 + $0x2f0] sm:$0xff]
    %v4103 = vld [vmem:[%s6 + $0x2f8] sm:$0xff]
    %v4104 = vld [vmem:[%s6 + $0x300] sm:$0xff]
    %v4105 = vld [vmem:[%s6 + $0x308] sm:$0xff]
    %v4106 = vld [vmem:[%s6 + $0x310] sm:$0xff]
    %v4107 = vld [vmem:[%s6 + $0x318] sm:$0xff]
    %v4108 = vld [vmem:[%s6 + $0x320] sm:$0xff]
    %v4109 = vld [vmem:[%s6 + $0x328] sm:$0xff]
    %v4110 = vld [vmem:[%s6 + $0x330] sm:$0xff]
    %v4111 = vld [vmem:[%s6 + $0x338] sm:$0xff]
    %v4112 = vld [vmem:[%s6 + $0x340] sm:$0xff]
    %v4113 = vld [vmem:[%s6 + $0x348] sm:$0xff]
    %v4114 = vld [vmem:[%s6 + $0x350] sm:$0xff]
    %v4115 = vld [vmem:[%s6 + $0x358] sm:$0xff]
    %v4116 = vld [vmem:[%s6 + $0x360] sm:$0xff]
    %v4117 = vld [vmem:[%s6 + $0x368] sm:$0xff]
    %v4118 = vld [vmem:[%s6 + $0x370] sm:$0xff]
    %v4119 = vld [vmem:[%s6 + $0x378] sm:$0xff]
    %v4120 = vpack.c.bf16 %v2676, %v2676
    %v4121 = vpack.c.bf16 %v4054, %v4052
    %v4122 = vpack.c.bf16 %v4055, %v4053
    %vm4123 = vcmask 113664
    %v4125 = vsel %vm4123, %v4120, 0
    %vm4127 = vcmask 1046528
    %v4129 = vsel %vm4127, %v4121, 0
    %v4132 = vsel %vm4127, %v4122, 0
    %4134 = vmatprep.subr.bf16.mxu0 %v4132
    %4135 = vmatpush1.bf16.msra.mxu0 %v4129
    %4136 = vmatprep.subr.bf16.mxu0 0
    %4137 = vmatpush1.bf16.msra.mxu0 0
    %4138 = vmatprep.subr.bf16.mxu0 0
    %4139 = vmatpush1.bf16.msra.mxu0 0
    %4140 = vmatprep.subr.bf16.mxu0 0
    %4141 = vmatpush1.bf16.msra.mxu0 0
    %4142 = vmatprep.subr.bf16.mxu0 0
    %4143 = vmatpush1.bf16.msra.mxu0 0
    %4144 = vmatprep.subr.bf16.mxu0 0
    %4145 = vmatpush1.bf16.msra.mxu0 0
    %4146 = vmatprep.subr.bf16.mxu0 0
    %4147 = vmatpush1.bf16.msra.mxu0 0
    %4148 = vmatprep.subr.bf16.mxu0 0
    %4149 = vmatpush1.bf16.msra.mxu0 0
    %4150 = vmatprep.subr.bf16.mxu0 0
    %4151 = vmatpush1.bf16.msra.mxu0 0
    %4152 = vmatprep.subr.bf16.mxu0 0
    %4153 = vmatpush1.bf16.msra.mxu0 0
    %4154 = vmatprep.subr.bf16.mxu0 0
    %4155 = vmatpush1.bf16.msra.mxu0 0
    %4156 = vmatprep.subr.bf16.mxu0 0
    %4157 = vmatpush1.bf16.msra.mxu0 0
    %4158 = vmatprep.subr.bf16.mxu0 0
    %4159 = vmatpush1.bf16.msra.mxu0 0
    %4160 = vmatprep.subr.bf16.mxu0 0
    %4161 = vmatpush1.bf16.msra.mxu0 0
    %4162 = vmatprep.subr.bf16.mxu0 0
    %4163 = vmatpush1.bf16.msra.mxu0 0
    %4164 = vmatprep.subr.bf16.mxu0 0
    %4165 = vmatpush1.bf16.msra.mxu0 0
    %4166 = vmatprep.mubr.bf16.mxu0 0
    %4167 = vmatmul.mubr.bf16.gmra.mrb[0].mxu0 %v4125
    %v4168 = vpop.f32.mrb[0].mxu0
    %v4169 = vadd.f32 0.0, %v4168
    %v4170 = vpop.f32.mrb[0].mxu0
    %v4171 = vadd.f32 0.0, %v4170
    %v4172 = vpop.f32.mrb[0].mxu0
    %v4173 = vpop.f32.mrb[0].mxu0
    %4174 = vdwg.mxu0
    %v4175 = vmul.f32 %v4169, 0.2
    %v4176 = vmul.f32 %v4171, 0.2
    %v4177 = vpack.c.bf16 %v4175, %v4175
    %v4178 = vpack.c.bf16 %v4176, %v4176
    %v4211 = vunpack.c.l.b16 %v4056
    %v4212 = vunpack.c.h.b16 %v4056
    %v4213 = vunpack.c.l.b16 %v4057
    %v4214 = vunpack.c.h.b16 %v4057
    %v4215 = vunpack.c.l.b16 %v4058
    %v4216 = vunpack.c.h.b16 %v4058
    %v4217 = vunpack.c.l.b16 %v4059
    %v4218 = vunpack.c.h.b16 %v4059
    %v4219 = vunpack.c.l.b16 %v4060
    %v4220 = vunpack.c.h.b16 %v4060
    %v4221 = vunpack.c.l.b16 %v4061
    %v4222 = vunpack.c.h.b16 %v4061
    %v4223 = vunpack.c.l.b16 %v4062
    %v4224 = vunpack.c.h.b16 %v4062
    %v4225 = vunpack.c.l.b16 %v4063
    %v4226 = vunpack.c.h.b16 %v4063
    %v4227 = vunpack.c.l.b16 %v4064
    %v4228 = vunpack.c.h.b16 %v4064
    %v4229 = vunpack.c.l.b16 %v4065
    %v4230 = vunpack.c.h.b16 %v4065
    %v4231 = vunpack.c.l.b16 %v4066
    %v4232 = vunpack.c.h.b16 %v4066
    %v4233 = vunpack.c.l.b16 %v4067
    %v4234 = vunpack.c.h.b16 %v4067
    %v4235 = vunpack.c.l.b16 %v4068
    %v4236 = vunpack.c.h.b16 %v4068
    %v4237 = vunpack.c.l.b16 %v4069
    %v4238 = vunpack.c.h.b16 %v4069
    %v4239 = vunpack.c.l.b16 %v4070
    %v4240 = vunpack.c.h.b16 %v4070
    %v4241 = vunpack.c.l.b16 %v4071
    %v4242 = vunpack.c.h.b16 %v4071
    %v4243 = vunpack.c.l.b16 %v4072
    %v4244 = vunpack.c.h.b16 %v4072
    %v4245 = vunpack.c.l.b16 %v4073
    %v4246 = vunpack.c.h.b16 %v4073
    %v4247 = vunpack.c.l.b16 %v4074
    %v4248 = vunpack.c.h.b16 %v4074
    %v4249 = vunpack.c.l.b16 %v4075
    %v4250 = vunpack.c.h.b16 %v4075
    %v4251 = vunpack.c.l.b16 %v4076
    %v4252 = vunpack.c.h.b16 %v4076
    %v4253 = vunpack.c.l.b16 %v4077
    %v4254 = vunpack.c.h.b16 %v4077
    %v4255 = vunpack.c.l.b16 %v4078
    %v4256 = vunpack.c.h.b16 %v4078
    %v4257 = vunpack.c.l.b16 %v4079
    %v4258 = vunpack.c.h.b16 %v4079
    %v4259 = vunpack.c.l.b16 %v4080
    %v4260 = vunpack.c.h.b16 %v4080
    %v4261 = vunpack.c.l.b16 %v4081
    %v4262 = vunpack.c.h.b16 %v4081
    %v4263 = vunpack.c.l.b16 %v4082
    %v4264 = vunpack.c.h.b16 %v4082
    %v4265 = vunpack.c.l.b16 %v4083
    %v4266 = vunpack.c.h.b16 %v4083
    %v4267 = vunpack.c.l.b16 %v4084
    %v4268 = vunpack.c.h.b16 %v4084
    %v4269 = vunpack.c.l.b16 %v4085
    %v4270 = vunpack.c.h.b16 %v4085
    %v4271 = vunpack.c.l.b16 %v4086
    %v4272 = vunpack.c.h.b16 %v4086
    %v4273 = vunpack.c.l.b16 %v4087
    %v4274 = vunpack.c.h.b16 %v4087
    %v4275 = vpack.c.b16 %v4213, %v4211
    %v4276 = vpack.c.b16 %v4214, %v4212
    %v4277 = vpack.c.b16 %v4217, %v4215
    %v4278 = vpack.c.b16 %v4218, %v4216
    %v4279 = vpack.c.b16 %v4221, %v4219
    %v4280 = vpack.c.b16 %v4222, %v4220
    %v4281 = vpack.c.b16 %v4225, %v4223
    %v4282 = vpack.c.b16 %v4226, %v4224
    %v4283 = vpack.c.b16 %v4229, %v4227
    %v4284 = vpack.c.b16 %v4230, %v4228
    %v4285 = vpack.c.b16 %v4233, %v4231
    %v4286 = vpack.c.b16 %v4234, %v4232
    %v4287 = vpack.c.b16 %v4237, %v4235
    %v4288 = vpack.c.b16 %v4238, %v4236
    %v4289 = vpack.c.b16 %v4241, %v4239
    %v4290 = vpack.c.b16 %v4242, %v4240
    %v4291 = vpack.c.b16 %v4245, %v4243
    %v4292 = vpack.c.b16 %v4246, %v4244
    %v4293 = vpack.c.b16 %v4249, %v4247
    %v4294 = vpack.c.b16 %v4250, %v4248
    %v4295 = vpack.c.b16 %v4253, %v4251
    %v4296 = vpack.c.b16 %v4254, %v4252
    %v4297 = vpack.c.b16 %v4257, %v4255
    %v4298 = vpack.c.b16 %v4258, %v4256
    %v4299 = vpack.c.b16 %v4261, %v4259
    %v4300 = vpack.c.b16 %v4262, %v4260
    %v4301 = vpack.c.b16 %v4265, %v4263
    %v4302 = vpack.c.b16 %v4266, %v4264
    %v4303 = vpack.c.b16 %v4269, %v4267
    %v4304 = vpack.c.b16 %v4270, %v4268
    %v4305 = vpack.c.b16 %v4273, %v4271
    %v4306 = vpack.c.b16 %v4274, %v4272
    %4339 = vmatprep.subr.bf16.mxu0 %v4276
    %4340 = vmatpush1.bf16.msra.mxu0 %v4275
    %4341 = vmatprep.subr.bf16.mxu0 %v4278
    %4342 = vmatpush1.bf16.msra.mxu0 %v4277
    %4343 = vmatprep.subr.bf16.mxu0 %v4280
    %4344 = vmatpush1.bf16.msra.mxu0 %v4279
    %4345 = vmatprep.subr.bf16.mxu0 %v4282
    %4346 = vmatpush1.bf16.msra.mxu0 %v4281
    %4347 = vmatprep.subr.bf16.mxu0 %v4284
    %4348 = vmatpush1.bf16.msra.mxu0 %v4283
    %4349 = vmatprep.subr.bf16.mxu0 %v4286
    %4350 = vmatpush1.bf16.msra.mxu0 %v4285
    %4351 = vmatprep.subr.bf16.mxu0 %v4288
    %4352 = vmatpush1.bf16.msra.mxu0 %v4287
    %4353 = vmatprep.subr.bf16.mxu0 %v4290
    %4354 = vmatpush1.bf16.msra.mxu0 %v4289
    %4355 = vmatprep.subr.bf16.mxu0 %v4292
    %4356 = vmatpush1.bf16.msra.mxu0 %v4291
    %4357 = vmatprep.subr.bf16.mxu0 %v4294
    %4358 = vmatpush1.bf16.msra.mxu0 %v4293
    %4359 = vmatprep.subr.bf16.mxu0 %v4296
    %4360 = vmatpush1.bf16.msra.mxu0 %v4295
    %4361 = vmatprep.subr.bf16.mxu0 %v4298
    %4362 = vmatpush1.bf16.msra.mxu0 %v4297
    %4363 = vmatprep.subr.bf16.mxu0 %v4300
    %4364 = vmatpush1.bf16.msra.mxu0 %v4299
    %4365 = vmatprep.subr.bf16.mxu0 %v4302
    %4366 = vmatpush1.bf16.msra.mxu0 %v4301
    %4367 = vmatprep.subr.bf16.mxu0 %v4304
    %4368 = vmatpush1.bf16.msra.mxu0 %v4303
    %4369 = vmatprep.subr.bf16.mxu0 %v4306
    %4370 = vmatpush1.bf16.msra.mxu0 %v4305
    %4371 = vmatprep.mubr.bf16.mxu0 %v4178
    %4372 = vmatmul.mubr.bf16.gmra.mrb[0].mxu0 %v4177
    %v4373 = vpop.f32.mrb[0].mxu0
    %v4374 = vadd.f32 0.0, %v4373
    %v4375 = vpop.f32.mrb[0].mxu0
    %v4376 = vadd.f32 0.0, %v4375
    %v4377 = vpop.f32.mrb[0].mxu0
    %v4378 = vpop.f32.mrb[0].mxu0
    %4379 = vdwg.mxu0
    %v4380 = vmax.f32 %v4374, 0.0
    %v4381 = vmax.f32 %v4376, 0.0
    %v4382 = vpack.c.bf16 %v4380, %v4380
    %v4383 = vpack.c.bf16 %v4381, %v4381
    %v4416 = vunpack.c.l.b16 %v4088
    %v4417 = vunpack.c.h.b16 %v4088
    %v4418 = vunpack.c.l.b16 %v4089
    %v4419 = vunpack.c.h.b16 %v4089
    %v4420 = vunpack.c.l.b16 %v4090
    %v4421 = vunpack.c.h.b16 %v4090
    %v4422 = vunpack.c.l.b16 %v4091
    %v4423 = vunpack.c.h.b16 %v4091
    %v4424 = vunpack.c.l.b16 %v4092
    %v4425 = vunpack.c.h.b16 %v4092
    %v4426 = vunpack.c.l.b16 %v4093
    %v4427 = vunpack.c.h.b16 %v4093
    %v4428 = vunpack.c.l.b16 %v4094
    %v4429 = vunpack.c.h.b16 %v4094
    %v4430 = vunpack.c.l.b16 %v4095
    %v4431 = vunpack.c.h.b16 %v4095
    %v4432 = vunpack.c.l.b16 %v4096
    %v4433 = vunpack.c.h.b16 %v4096
    %v4434 = vunpack.c.l.b16 %v4097
    %v4435 = vunpack.c.h.b16 %v4097
    %v4436 = vunpack.c.l.b16 %v4098
    %v4437 = vunpack.c.h.b16 %v4098
    %v4438 = vunpack.c.l.b16 %v4099
    %v4439 = vunpack.c.h.b16 %v4099
    %v4440 = vunpack.c.l.b16 %v4100
    %v4441 = vunpack.c.h.b16 %v4100
    %v4442 = vunpack.c.l.b16 %v4101
    %v4443 = vunpack.c.h.b16 %v4101
    %v4444 = vunpack.c.l.b16 %v4102
    %v4445 = vunpack.c.h.b16 %v4102
    %v4446 = vunpack.c.l.b16 %v4103
    %v4447 = vunpack.c.h.b16 %v4103
    %v4448 = vunpack.c.l.b16 %v4104
    %v4449 = vunpack.c.h.b16 %v4104
    %v4450 = vunpack.c.l.b16 %v4105
    %v4451 = vunpack.c.h.b16 %v4105
    %v4452 = vunpack.c.l.b16 %v4106
    %v4453 = vunpack.c.h.b16 %v4106
    %v4454 = vunpack.c.l.b16 %v4107
    %v4455 = vunpack.c.h.b16 %v4107
    %v4456 = vunpack.c.l.b16 %v4108
    %v4457 = vunpack.c.h.b16 %v4108
    %v4458 = vunpack.c.l.b16 %v4109
    %v4459 = vunpack.c.h.b16 %v4109
    %v4460 = vunpack.c.l.b16 %v4110
    %v4461 = vunpack.c.h.b16 %v4110
    %v4462 = vunpack.c.l.b16 %v4111
    %v4463 = vunpack.c.h.b16 %v4111
    %v4464 = vunpack.c.l.b16 %v4112
    %v4465 = vunpack.c.h.b16 %v4112
    %v4466 = vunpack.c.l.b16 %v4113
    %v4467 = vunpack.c.h.b16 %v4113
    %v4468 = vunpack.c.l.b16 %v4114
    %v4469 = vunpack.c.h.b16 %v4114
    %v4470 = vunpack.c.l.b16 %v4115
    %v4471 = vunpack.c.h.b16 %v4115
    %v4472 = vunpack.c.l.b16 %v4116
    %v4473 = vunpack.c.h.b16 %v4116
    %v4474 = vunpack.c.l.b16 %v4117
    %v4475 = vunpack.c.h.b16 %v4117
    %v4476 = vunpack.c.l.b16 %v4118
    %v4477 = vunpack.c.h.b16 %v4118
    %v4478 = vunpack.c.l.b16 %v4119
    %v4479 = vunpack.c.h.b16 %v4119
    %v4480 = vpack.c.b16 %v4418, %v4416
    %v4481 = vpack.c.b16 %v4419, %v4417
    %v4482 = vpack.c.b16 %v4422, %v4420
    %v4483 = vpack.c.b16 %v4423, %v4421
    %v4484 = vpack.c.b16 %v4426, %v4424
    %v4485 = vpack.c.b16 %v4427, %v4425
    %v4486 = vpack.c.b16 %v4430, %v4428
    %v4487 = vpack.c.b16 %v4431, %v4429
    %v4488 = vpack.c.b16 %v4434, %v4432
    %v4489 = vpack.c.b16 %v4435, %v4433
    %v4490 = vpack.c.b16 %v4438, %v4436
    %v4491 = vpack.c.b16 %v4439, %v4437
    %v4492 = vpack.c.b16 %v4442, %v4440
    %v4493 = vpack.c.b16 %v4443, %v4441
    %v4494 = vpack.c.b16 %v4446, %v4444
    %v4495 = vpack.c.b16 %v4447, %v4445
    %v4496 = vpack.c.b16 %v4450, %v4448
    %v4497 = vpack.c.b16 %v4451, %v4449
    %v4498 = vpack.c.b16 %v4454, %v4452
    %v4499 = vpack.c.b16 %v4455, %v4453
    %v4500 = vpack.c.b16 %v4458, %v4456
    %v4501 = vpack.c.b16 %v4459, %v4457
    %v4502 = vpack.c.b16 %v4462, %v4460
    %v4503 = vpack.c.b16 %v4463, %v4461
    %v4504 = vpack.c.b16 %v4466, %v4464
    %v4505 = vpack.c.b16 %v4467, %v4465
    %v4506 = vpack.c.b16 %v4470, %v4468
    %v4507 = vpack.c.b16 %v4471, %v4469
    %v4508 = vpack.c.b16 %v4474, %v4472
    %v4509 = vpack.c.b16 %v4475, %v4473
    %v4510 = vpack.c.b16 %v4478, %v4476
    %v4511 = vpack.c.b16 %v4479, %v4477
    %4544 = vmatprep.subr.bf16.mxu0 %v4481
    %4545 = vmatpush1.bf16.msra.mxu0 %v4480
    %4546 = vmatprep.subr.bf16.mxu0 %v4483
    %4547 = vmatpush1.bf16.msra.mxu0 %v4482
    %4548 = vmatprep.subr.bf16.mxu0 %v4485
    %4549 = vmatpush1.bf16.msra.mxu0 %v4484
    %4550 = vmatprep.subr.bf16.mxu0 %v4487
    %4551 = vmatpush1.bf16.msra.mxu0 %v4486
    %4552 = vmatprep.subr.bf16.mxu0 %v4489
    %4553 = vmatpush1.bf16.msra.mxu0 %v4488
    %4554 = vmatprep.subr.bf16.mxu0 %v4491
    %4555 = vmatpush1.bf16.msra.mxu0 %v4490
    %4556 = vmatprep.subr.bf16.mxu0 %v4493
    %4557 = vmatpush1.bf16.msra.mxu0 %v4492
    %4558 = vmatprep.subr.bf16.mxu0 %v4495
    %4559 = vmatpush1.bf16.msra.mxu0 %v4494
    %4560 = vmatprep.subr.bf16.mxu0 %v4497
    %4561 = vmatpush1.bf16.msra.mxu0 %v4496
    %4562 = vmatprep.subr.bf16.mxu0 %v4499
    %4563 = vmatpush1.bf16.msra.mxu0 %v4498
    %4564 = vmatprep.subr.bf16.mxu0 %v4501
    %4565 = vmatpush1.bf16.msra.mxu0 %v4500
    %4566 = vmatprep.subr.bf16.mxu0 %v4503
    %4567 = vmatpush1.bf16.msra.mxu0 %v4502
    %4568 = vmatprep.subr.bf16.mxu0 %v4505
    %4569 = vmatpush1.bf16.msra.mxu0 %v4504
    %4570 = vmatprep.subr.bf16.mxu0 %v4507
    %4571 = vmatpush1.bf16.msra.mxu0 %v4506
    %4572 = vmatprep.subr.bf16.mxu0 %v4509
    %4573 = vmatpush1.bf16.msra.mxu0 %v4508
    %4574 = vmatprep.subr.bf16.mxu0 %v4511
    %4575 = vmatpush1.bf16.msra.mxu0 %v4510
    %4576 = vmatprep.mubr.bf16.mxu0 %v4383
    %4577 = vmatmul.mubr.bf16.gmra.mrb[0].mxu0 %v4382
    %v4578 = vpop.f32.mrb[0].mxu0
    %v4579 = vadd.f32 0.0, %v4578
    %v4580 = vpop.f32.mrb[0].mxu0
    %v4581 = vadd.f32 0.0, %v4580
    %v4582 = vpop.f32.mrb[0].mxu0
    %v4583 = vpop.f32.mrb[0].mxu0
    %4584 = vdwg.mxu0
    %v4585 = vxor.u32 %v4579, 2147483648
    %v4586 = vxor.u32 %v4581, 2147483648
    %v4587 = vmul.f32 %v4585, 1.442695
    %v4588 = vpow.pop %v4587
    %v4589 = vmul.f32 %v4586, 1.442695
    %v4590 = vpow.pop %v4589
    %v4591 = vadd.f32 %v4588, 1.0
    %v4592 = vadd.f32 %v4590, 1.0
    %v4593 = vrcp.pop %v4591
    %v4594 = vmul.f32 1.0, %v4593
    %v4595 = vrcp.pop %v4592
    %v4596 = vmul.f32 1.0, %v4595
    %v4597 = vpack.c.bf16 %v2682, %v2681
    %v4598 = vpack.c.bf16 %v4594, %v4594
    %v4599 = vpack.c.bf16 %v4596, %v4596
    %v4601 = vsel %vm3226, %v4597, 0
    %v4604 = vsel %vm3233, %v4598, 0
    %v4607 = vsel %vm3233, %v4599, 0
    %4609 = vmatprep.subr.bf16.mxu0 %v4607
    %4610 = vmatpush1.bf16.msra.mxu0 %v4604
    %4611 = vmatprep.subr.bf16.mxu0 0
    %4612 = vmatpush1.bf16.msra.mxu0 0
    %4613 = vmatprep.subr.bf16.mxu0 0
    %4614 = vmatpush1.bf16.msra.mxu0 0
    %4615 = vmatprep.subr.bf16.mxu0 0
    %4616 = vmatpush1.bf16.msra.mxu0 0
    %4617 = vmatprep.subr.bf16.mxu0 0
    %4618 = vmatpush1.bf16.msra.mxu0 0
    %4619 = vmatprep.subr.bf16.mxu0 0
    %4620 = vmatpush1.bf16.msra.mxu0 0
    %4621 = vmatprep.subr.bf16.mxu0 0
    %4622 = vmatpush1.bf16.msra.mxu0 0
    %4623 = vmatprep.subr.bf16.mxu0 0
    %4624 = vmatpush1.bf16.msra.mxu0 0
    %4625 = vmatprep.subr.bf16.mxu0 0
    %4626 = vmatpush1.bf16.msra.mxu0 0
    %4627 = vmatprep.subr.bf16.mxu0 0
    %4628 = vmatpush1.bf16.msra.mxu0 0
    %4629 = vmatprep.subr.bf16.mxu0 0
    %4630 = vmatpush1.bf16.msra.mxu0 0
    %4631 = vmatprep.subr.bf16.mxu0 0
    %4632 = vmatpush1.bf16.msra.mxu0 0
    %4633 = vmatprep.subr.bf16.mxu0 0
    %4634 = vmatpush1.bf16.msra.mxu0 0
    %4635 = vmatprep.subr.bf16.mxu0 0
    %4636 = vmatpush1.bf16.msra.mxu0 0
    %4637 = vmatprep.subr.bf16.mxu0 0
    %4638 = vmatpush1.bf16.msra.mxu0 0
    %4639 = vmatprep.subr.bf16.mxu0 0
    %4640 = vmatpush1.bf16.msra.mxu0 0
    %4641 = vmatprep.mubr.bf16.mxu0 0
    %4642 = vmatmul.mubr.bf16.gmra.mrb[0].mxu0 %v4601
    %v4643 = vpop.f32.mrb[0].mxu0
    %v4644 = vadd.f32 0.0, %v4643
    %v4645 = vpop.f32.mrb[0].mxu0
    %v4646 = vadd.f32 0.0, %v4645
    %v4647 = vpop.f32.mrb[0].mxu0
    %v4648 = vadd.f32 0.0, %v4647
    %v4649 = vpop.f32.mrb[0].mxu0
    %v4650 = vadd.f32 0.0, %v4649
    %4651 = vdwg.mxu0
    %v4652 = vmul.f32 %v4052, %v4644
    %v4653 = vmul.f32 %v4053, %v4646
    %v4654 = vmul.f32 %v4054, %v4648
    %v4655 = vmul.f32 %v4055, %v4650
    %v4656 = vld [vmem:[#allocation7] sm:$0xf]
    %v4657 = vld [vmem:[#allocation7 + $0x4] sm:$0xf]
    %v4658 = vld [vmem:[#allocation7 + $0x8] sm:$0xf]
    %v4659 = vld [vmem:[#allocation7 + $0xc] sm:$0xf]
    %v4660 = vld [vmem:[#allocation7 + $0x10] sm:$0xf]
    %v4661 = vld [vmem:[#allocation7 + $0x14] sm:$0xf]
    %v4662 = vld [vmem:[#allocation7 + $0x18] sm:$0xf]
    %v4663 = vld [vmem:[#allocation7 + $0x1c] sm:$0xf]
    %v4664 = vld [vmem:[#allocation7 + $0x20] sm:$0xf]
    %v4665 = vld [vmem:[#allocation7 + $0x24] sm:$0xf]
    %v4666 = vld [vmem:[#allocation7 + $0x28] sm:$0xf]
    %v4667 = vld [vmem:[#allocation7 + $0x2c] sm:$0xf]
    %v4668 = vld [vmem:[#allocation7 + $0x30] sm:$0xf]
    %v4669 = vld [vmem:[#allocation7 + $0x34] sm:$0xf]
    %v4670 = vld [vmem:[#allocation7 + $0x38] sm:$0xf]
    %v4671 = vld [vmem:[#allocation7 + $0x3c] sm:$0xf]
    %v4672 = vld [vmem:[#allocation7 + $0x40] sm:$0xf]
    %v4673 = vld [vmem:[#allocation7 + $0x44] sm:$0xf]
    %v4674 = vld [vmem:[#allocation7 + $0x48] sm:$0xf]
    %v4675 = vld [vmem:[#allocation7 + $0x4c] sm:$0xf]
    %v4676 = vld [vmem:[#allocation7 + $0x50] sm:$0xf]
    %v4677 = vld [vmem:[#allocation7 + $0x54] sm:$0xf]
    %v4678 = vld [vmem:[#allocation7 + $0x58] sm:$0xf]
    %v4679 = vld [vmem:[#allocation7 + $0x5c] sm:$0xf]
    %v4680 = vld [vmem:[#allocation7 + $0x60] sm:$0xf]
    %v4681 = vld [vmem:[#allocation7 + $0x64] sm:$0xf]
    %v4682 = vld [vmem:[#allocation7 + $0x68] sm:$0xf]
    %v4683 = vld [vmem:[#allocation7 + $0x6c] sm:$0xf]
    %v4684 = vld [vmem:[#allocation7 + $0x70] sm:$0xf]
    %v4685 = vld [vmem:[#allocation7 + $0x74] sm:$0xf]
    %v4686 = vld [vmem:[#allocation7 + $0x78] sm:$0xf]
    %v4687 = vld [vmem:[#allocation7 + $0x7c] sm:$0xf]
    %v4688 = vpack.c.bf16 %v4654, %v4652
    %v4689 = vpack.c.bf16 %v4655, %v4653
    %s4690 = scalar_lea.vmem [#allocation7], 128
    %v4691 = vld [vmem:[%s4690] sm:$0xf]
    %v4692 = vld [vmem:[%s4690 + $0x4] sm:$0xf]
    %v4693 = vld [vmem:[%s4690 + $0x8] sm:$0xf]
    %v4694 = vld [vmem:[%s4690 + $0xc] sm:$0xf]
    %v4695 = vld [vmem:[%s4690 + $0x10] sm:$0xf]
    %v4696 = vld [vmem:[%s4690 + $0x14] sm:$0xf]
    %v4697 = vld [vmem:[%s4690 + $0x18] sm:$0xf]
    %v4698 = vld [vmem:[%s4690 + $0x1c] sm:$0xf]
    %v4699 = vld [vmem:[%s4690 + $0x20] sm:$0xf]
    %v4700 = vld [vmem:[%s4690 + $0x24] sm:$0xf]
    %v4701 = vld [vmem:[%s4690 + $0x28] sm:$0xf]
    %v4702 = vld [vmem:[%s4690 + $0x2c] sm:$0xf]
    %v4703 = vld [vmem:[%s4690 + $0x30] sm:$0xf]
    %v4704 = vld [vmem:[%s4690 + $0x34] sm:$0xf]
    %v4705 = vld [vmem:[%s4690 + $0x38] sm:$0xf]
    %v4706 = vld [vmem:[%s4690 + $0x3c] sm:$0xf]
    %v4707 = vld [vmem:[%s4690 + $0x40] sm:$0xf]
    %v4708 = vld [vmem:[%s4690 + $0x44] sm:$0xf]
    %v4709 = vld [vmem:[%s4690 + $0x48] sm:$0xf]
    %v4710 = vld [vmem:[%s4690 + $0x4c] sm:$0xf]
    %v4711 = vld [vmem:[%s4690 + $0x50] sm:$0xf]
    %v4712 = vld [vmem:[%s4690 + $0x54] sm:$0xf]
    %v4713 = vld [vmem:[%s4690 + $0x58] sm:$0xf]
    %v4714 = vld [vmem:[%s4690 + $0x5c] sm:$0xf]
    %v4715 = vld [vmem:[%s4690 + $0x60] sm:$0xf]
    %v4716 = vld [vmem:[%s4690 + $0x64] sm:$0xf]
    %v4717 = vld [vmem:[%s4690 + $0x68] sm:$0xf]
    %v4718 = vld [vmem:[%s4690 + $0x6c] sm:$0xf]
    %v4719 = vld [vmem:[%s4690 + $0x70] sm:$0xf]
    %v4720 = vld [vmem:[%s4690 + $0x74] sm:$0xf]
    %v4721 = vld [vmem:[%s4690 + $0x78] sm:$0xf]
    %v4722 = vld [vmem:[%s4690 + $0x7c] sm:$0xf]
    %v4724 = vshrl.u32 %v4688, 16
    %v4726 = vshll.u32 %v4688, 16
    %v4728 = vrot.slane %v4726, 1
    %v4729 = vor.u32 %v4724, %v4728
    %v4731 = vshrl.u32 %v4689, 16
    %v4733 = vshll.u32 %v4689, 16
    %v4735 = vrot.slane %v4733, 1
    %v4736 = vor.u32 %v4731, %v4735
    %v4771 = vunpack.c.l.b16 %v4691
    %v4772 = vunpack.c.l.b16 %v4692
    %v4773 = vunpack.c.l.b16 %v4693
    %v4774 = vunpack.c.l.b16 %v4694
    %v4775 = vunpack.c.l.b16 %v4695
    %v4776 = vunpack.c.l.b16 %v4696
    %v4777 = vunpack.c.l.b16 %v4697
    %v4778 = vunpack.c.l.b16 %v4698
    %v4779 = vunpack.c.l.b16 %v4699
    %v4780 = vunpack.c.l.b16 %v4700
    %v4781 = vunpack.c.l.b16 %v4701
    %v4782 = vunpack.c.l.b16 %v4702
    %v4783 = vunpack.c.l.b16 %v4703
    %v4784 = vunpack.c.l.b16 %v4704
    %v4785 = vunpack.c.l.b16 %v4705
    %v4786 = vunpack.c.l.b16 %v4706
    %v4787 = vunpack.c.l.b16 %v4707
    %v4788 = vunpack.c.l.b16 %v4708
    %v4789 = vunpack.c.l.b16 %v4709
    %v4790 = vunpack.c.l.b16 %v4710
    %v4791 = vunpack.c.l.b16 %v4711
    %v4792 = vunpack.c.l.b16 %v4712
    %v4793 = vunpack.c.l.b16 %v4713
    %v4794 = vunpack.c.l.b16 %v4714
    %v4795 = vunpack.c.l.b16 %v4715
    %v4796 = vunpack.c.l.b16 %v4716
    %v4797 = vunpack.c.l.b16 %v4717
    %v4798 = vunpack.c.l.b16 %v4718
    %v4799 = vunpack.c.l.b16 %v4719
    %v4800 = vunpack.c.l.b16 %v4720
    %v4801 = vunpack.c.l.b16 %v4721
    %v4802 = vunpack.c.l.b16 %v4722
    %v4803 = vpack.c.b16 %v4772, %v4771
    %v4804 = vpack.c.b16 %v4774, %v4773
    %v4805 = vpack.c.b16 %v4776, %v4775
    %v4806 = vpack.c.b16 %v4778, %v4777
    %v4807 = vpack.c.b16 %v4780, %v4779
    %v4808 = vpack.c.b16 %v4782, %v4781
    %v4809 = vpack.c.b16 %v4784, %v4783
    %v4810 = vpack.c.b16 %v4786, %v4785
    %v4811 = vpack.c.b16 %v4788, %v4787
    %v4812 = vpack.c.b16 %v4790, %v4789
    %v4813 = vpack.c.b16 %v4792, %v4791
    %v4814 = vpack.c.b16 %v4794, %v4793
    %v4815 = vpack.c.b16 %v4796, %v4795
    %v4816 = vpack.c.b16 %v4798, %v4797
    %v4817 = vpack.c.b16 %v4800, %v4799
    %v4818 = vpack.c.b16 %v4802, %v4801
    %4835 = vmatprep.subr.bf16.mxu0 0
    %4836 = vmatpush1.bf16.msra.mxu0 %v4803
    %4837 = vmatprep.subr.bf16.mxu0 0
    %4838 = vmatpush1.bf16.msra.mxu0 %v4804
    %4839 = vmatprep.subr.bf16.mxu0 0
    %4840 = vmatpush1.bf16.msra.mxu0 %v4805
    %4841 = vmatprep.subr.bf16.mxu0 0
    %4842 = vmatpush1.bf16.msra.mxu0 %v4806
    %4843 = vmatprep.subr.bf16.mxu0 0
    %4844 = vmatpush1.bf16.msra.mxu0 %v4807
    %4845 = vmatprep.subr.bf16.mxu0 0
    %4846 = vmatpush1.bf16.msra.mxu0 %v4808
    %4847 = vmatprep.subr.bf16.mxu0 0
    %4848 = vmatpush1.bf16.msra.mxu0 %v4809
    %4849 = vmatprep.subr.bf16.mxu0 0
    %4850 = vmatpush1.bf16.msra.mxu0 %v4810
    %4851 = vmatprep.subr.bf16.mxu0 0
    %4852 = vmatpush1.bf16.msra.mxu0 %v4811
    %4853 = vmatprep.subr.bf16.mxu0 0
    %4854 = vmatpush1.bf16.msra.mxu0 %v4812
    %4855 = vmatprep.subr.bf16.mxu0 0
    %4856 = vmatpush1.bf16.msra.mxu0 %v4813
    %4857 = vmatprep.subr.bf16.mxu0 0
    %4858 = vmatpush1.bf16.msra.mxu0 %v4814
    %4859 = vmatprep.subr.bf16.mxu0 0
    %4860 = vmatpush1.bf16.msra.mxu0 %v4815
    %4861 = vmatprep.subr.bf16.mxu0 0
    %4862 = vmatpush1.bf16.msra.mxu0 %v4816
    %4863 = vmatprep.subr.bf16.mxu0 0
    %4864 = vmatpush1.bf16.msra.mxu0 %v4817
    %4865 = vmatprep.subr.bf16.mxu0 0
    %4866 = vmatpush1.bf16.msra.mxu0 %v4818
    %4867 = vmatprep.mubr.bf16.mxu0 %v4736
    %4868 = vmatmul.mubr.bf16.gmra.mrb[0].mxu0 %v4729
    %v4869 = vpop.f32.mrb[0].mxu0
    %v4870 = vadd.f32 0.0, %v4869
    %v4871 = vpop.f32.mrb[0].mxu0
    %v4872 = vpop.f32.mrb[0].mxu0
    %v4873 = vadd.f32 0.0, %v4872
    %v4874 = vpop.f32.mrb[0].mxu0
    %4875 = vdwg.mxu0
    %v4908 = vunpack.c.l.b16 %v4656
    %v4909 = vunpack.c.l.b16 %v4657
    %v4910 = vunpack.c.l.b16 %v4658
    %v4911 = vunpack.c.l.b16 %v4659
    %v4912 = vunpack.c.l.b16 %v4660
    %v4913 = vunpack.c.l.b16 %v4661
    %v4914 = vunpack.c.l.b16 %v4662
    %v4915 = vunpack.c.l.b16 %v4663
    %v4916 = vunpack.c.l.b16 %v4664
    %v4917 = vunpack.c.l.b16 %v4665
    %v4918 = vunpack.c.l.b16 %v4666
    %v4919 = vunpack.c.l.b16 %v4667
    %v4920 = vunpack.c.l.b16 %v4668
    %v4921 = vunpack.c.l.b16 %v4669
    %v4922 = vunpack.c.l.b16 %v4670
    %v4923 = vunpack.c.l.b16 %v4671
    %v4924 = vunpack.c.l.b16 %v4672
    %v4925 = vunpack.c.l.b16 %v4673
    %v4926 = vunpack.c.l.b16 %v4674
    %v4927 = vunpack.c.l.b16 %v4675
    %v4928 = vunpack.c.l.b16 %v4676
    %v4929 = vunpack.c.l.b16 %v4677
    %v4930 = vunpack.c.l.b16 %v4678
    %v4931 = vunpack.c.l.b16 %v4679
    %v4932 = vunpack.c.l.b16 %v4680
    %v4933 = vunpack.c.l.b16 %v4681
    %v4934 = vunpack.c.l.b16 %v4682
    %v4935 = vunpack.c.l.b16 %v4683
    %v4936 = vunpack.c.l.b16 %v4684
    %v4937 = vunpack.c.l.b16 %v4685
    %v4938 = vunpack.c.l.b16 %v4686
    %v4939 = vunpack.c.l.b16 %v4687
    %v4940 = vpack.c.b16 %v4909, %v4908
    %v4941 = vpack.c.b16 %v4911, %v4910
    %v4942 = vpack.c.b16 %v4913, %v4912
    %v4943 = vpack.c.b16 %v4915, %v4914
    %v4944 = vpack.c.b16 %v4917, %v4916
    %v4945 = vpack.c.b16 %v4919, %v4918
    %v4946 = vpack.c.b16 %v4921, %v4920
    %v4947 = vpack.c.b16 %v4923, %v4922
    %v4948 = vpack.c.b16 %v4925, %v4924
    %v4949 = vpack.c.b16 %v4927, %v4926
    %v4950 = vpack.c.b16 %v4929, %v4928
    %v4951 = vpack.c.b16 %v4931, %v4930
    %v4952 = vpack.c.b16 %v4933, %v4932
    %v4953 = vpack.c.b16 %v4935, %v4934
    %v4954 = vpack.c.b16 %v4937, %v4936
    %v4955 = vpack.c.b16 %v4939, %v4938
    %4972 = vmatprep.subr.bf16.mxu0 0
    %4973 = vmatpush1.bf16.msra.mxu0 %v4940
    %4974 = vmatprep.subr.bf16.mxu0 0
    %4975 = vmatpush1.bf16.msra.mxu0 %v4941
    %4976 = vmatprep.subr.bf16.mxu0 0
    %4977 = vmatpush1.bf16.msra.mxu0 %v4942
    %4978 = vmatprep.subr.bf16.mxu0 0
    %4979 = vmatpush1.bf16.msra.mxu0 %v4943
    %4980 = vmatprep.subr.bf16.mxu0 0
    %4981 = vmatpush1.bf16.msra.mxu0 %v4944
    %4982 = vmatprep.subr.bf16.mxu0 0
    %4983 = vmatpush1.bf16.msra.mxu0 %v4945
    %4984 = vmatprep.subr.bf16.mxu0 0
    %4985 = vmatpush1.bf16.msra.mxu0 %v4946
    %4986 = vmatprep.subr.bf16.mxu0 0
    %4987 = vmatpush1.bf16.msra.mxu0 %v4947
    %4988 = vmatprep.subr.bf16.mxu0 0
    %4989 = vmatpush1.bf16.msra.mxu0 %v4948
    %4990 = vmatprep.subr.bf16.mxu0 0
    %4991 = vmatpush1.bf16.msra.mxu0 %v4949
    %4992 = vmatprep.subr.bf16.mxu0 0
    %4993 = vmatpush1.bf16.msra.mxu0 %v4950
    %4994 = vmatprep.subr.bf16.mxu0 0
    %4995 = vmatpush1.bf16.msra.mxu0 %v4951
    %4996 = vmatprep.subr.bf16.mxu0 0
    %4997 = vmatpush1.bf16.msra.mxu0 %v4952
    %4998 = vmatprep.subr.bf16.mxu0 0
    %4999 = vmatpush1.bf16.msra.mxu0 %v4953
    %5000 = vmatprep.subr.bf16.mxu0 0
    %5001 = vmatpush1.bf16.msra.mxu0 %v4954
    %5002 = vmatprep.subr.bf16.mxu0 0
    %5003 = vmatpush1.bf16.msra.mxu0 %v4955
    %5004 = vmatprep.mubr.bf16.mxu0 %v4689
    %5005 = vmatmul.mubr.bf16.gmra.mrb[0].mxu0 %v4688
    %v5006 = vpop.f32.mrb[0].mxu0
    %v5007 = vadd.f32 %v4870, %v5006
    %v5008 = vpop.f32.mrb[0].mxu0
    %v5009 = vpop.f32.mrb[0].mxu0
    %v5010 = vadd.f32 %v4873, %v5009
    %v5011 = vpop.f32.mrb[0].mxu0
    %5012 = vdwg.mxu0
    %s5013 = scalar_lea.vmem [#allocation7], 256
    %v5014 = vld [vmem:[%s5013] sm:$0xf]
    %v5015 = vld [vmem:[%s5013 + $0x4] sm:$0xf]
    %v5016 = vld [vmem:[%s5013 + $0x8] sm:$0xf]
    %v5017 = vld [vmem:[%s5013 + $0xc] sm:$0xf]
    %v5018 = vld [vmem:[%s5013 + $0x10] sm:$0xf]
    %v5019 = vld [vmem:[%s5013 + $0x14] sm:$0xf]
    %v5020 = vld [vmem:[%s5013 + $0x18] sm:$0xf]
    %v5021 = vld [vmem:[%s5013 + $0x1c] sm:$0xf]
    %v5022 = vld [vmem:[%s5013 + $0x20] sm:$0xf]
    %v5023 = vld [vmem:[%s5013 + $0x24] sm:$0xf]
    %v5024 = vld [vmem:[%s5013 + $0x28] sm:$0xf]
    %v5025 = vld [vmem:[%s5013 + $0x2c] sm:$0xf]
    %v5026 = vld [vmem:[%s5013 + $0x30] sm:$0xf]
    %v5027 = vld [vmem:[%s5013 + $0x34] sm:$0xf]
    %v5028 = vld [vmem:[%s5013 + $0x38] sm:$0xf]
    %v5029 = vld [vmem:[%s5013 + $0x3c] sm:$0xf]
    %v5030 = vld [vmem:[%s5013 + $0x40] sm:$0xf]
    %v5031 = vld [vmem:[%s5013 + $0x44] sm:$0xf]
    %v5032 = vld [vmem:[%s5013 + $0x48] sm:$0xf]
    %v5033 = vld [vmem:[%s5013 + $0x4c] sm:$0xf]
    %v5034 = vld [vmem:[%s5013 + $0x50] sm:$0xf]
    %v5035 = vld [vmem:[%s5013 + $0x54] sm:$0xf]
    %v5036 = vld [vmem:[%s5013 + $0x58] sm:$0xf]
    %v5037 = vld [vmem:[%s5013 + $0x5c] sm:$0xf]
    %v5038 = vld [vmem:[%s5013 + $0x60] sm:$0xf]
    %v5039 = vld [vmem:[%s5013 + $0x64] sm:$0xf]
    %v5040 = vld [vmem:[%s5013 + $0x68] sm:$0xf]
    %v5041 = vld [vmem:[%s5013 + $0x6c] sm:$0xf]
    %v5042 = vld [vmem:[%s5013 + $0x70] sm:$0xf]
    %v5043 = vld [vmem:[%s5013 + $0x74] sm:$0xf]
    %v5044 = vld [vmem:[%s5013 + $0x78] sm:$0xf]
    %v5045 = vld [vmem:[%s5013 + $0x7c] sm:$0xf]
    %v5048 = vrot.slane %v4688, 1
    %v5049 = vrot.slane %v4689, 1
    %v5084 = vunpack.c.l.b16 %v5014
    %v5085 = vunpack.c.l.b16 %v5015
    %v5086 = vunpack.c.l.b16 %v5016
    %v5087 = vunpack.c.l.b16 %v5017
    %v5088 = vunpack.c.l.b16 %v5018
    %v5089 = vunpack.c.l.b16 %v5019
    %v5090 = vunpack.c.l.b16 %v5020
    %v5091 = vunpack.c.l.b16 %v5021
    %v5092 = vunpack.c.l.b16 %v5022
    %v5093 = vunpack.c.l.b16 %v5023
    %v5094 = vunpack.c.l.b16 %v5024
    %v5095 = vunpack.c.l.b16 %v5025
    %v5096 = vunpack.c.l.b16 %v5026
    %v5097 = vunpack.c.l.b16 %v5027
    %v5098 = vunpack.c.l.b16 %v5028
    %v5099 = vunpack.c.l.b16 %v5029
    %v5100 = vunpack.c.l.b16 %v5030
    %v5101 = vunpack.c.l.b16 %v5031
    %v5102 = vunpack.c.l.b16 %v5032
    %v5103 = vunpack.c.l.b16 %v5033
    %v5104 = vunpack.c.l.b16 %v5034
    %v5105 = vunpack.c.l.b16 %v5035
    %v5106 = vunpack.c.l.b16 %v5036
    %v5107 = vunpack.c.l.b16 %v5037
    %v5108 = vunpack.c.l.b16 %v5038
    %v5109 = vunpack.c.l.b16 %v5039
    %v5110 = vunpack.c.l.b16 %v5040
    %v5111 = vunpack.c.l.b16 %v5041
    %v5112 = vunpack.c.l.b16 %v5042
    %v5113 = vunpack.c.l.b16 %v5043
    %v5114 = vunpack.c.l.b16 %v5044
    %v5115 = vunpack.c.l.b16 %v5045
    %v5116 = vpack.c.b16 %v5085, %v5084
    %v5117 = vpack.c.b16 %v5087, %v5086
    %v5118 = vpack.c.b16 %v5089, %v5088
    %v5119 = vpack.c.b16 %v5091, %v5090
    %v5120 = vpack.c.b16 %v5093, %v5092
    %v5121 = vpack.c.b16 %v5095, %v5094
    %v5122 = vpack.c.b16 %v5097, %v5096
    %v5123 = vpack.c.b16 %v5099, %v5098
    %v5124 = vpack.c.b16 %v5101, %v5100
    %v5125 = vpack.c.b16 %v5103, %v5102
    %v5126 = vpack.c.b16 %v5105, %v5104
    %v5127 = vpack.c.b16 %v5107, %v5106
    %v5128 = vpack.c.b16 %v5109, %v5108
    %v5129 = vpack.c.b16 %v5111, %v5110
    %v5130 = vpack.c.b16 %v5113, %v5112
    %v5131 = vpack.c.b16 %v5115, %v5114
    %5148 = vmatprep.subr.bf16.mxu0 0
    %5149 = vmatpush1.bf16.msra.mxu0 %v5116
    %5150 = vmatprep.subr.bf16.mxu0 0
    %5151 = vmatpush1.bf16.msra.mxu0 %v5117
    %5152 = vmatprep.subr.bf16.mxu0 0
    %5153 = vmatpush1.bf16.msra.mxu0 %v5118
    %5154 = vmatprep.subr.bf16.mxu0 0
    %5155 = vmatpush1.bf16.msra.mxu0 %v5119
    %5156 = vmatprep.subr.bf16.mxu0 0
    %5157 = vmatpush1.bf16.msra.mxu0 %v5120
    %5158 = vmatprep.subr.bf16.mxu0 0
    %5159 = vmatpush1.bf16.msra.mxu0 %v5121
    %5160 = vmatprep.subr.bf16.mxu0 0
    %5161 = vmatpush1.bf16.msra.mxu0 %v5122
    %5162 = vmatprep.subr.bf16.mxu0 0
    %5163 = vmatpush1.bf16.msra.mxu0 %v5123
    %5164 = vmatprep.subr.bf16.mxu0 0
    %5165 = vmatpush1.bf16.msra.mxu0 %v5124
    %5166 = vmatprep.subr.bf16.mxu0 0
    %5167 = vmatpush1.bf16.msra.mxu0 %v5125
    %5168 = vmatprep.subr.bf16.mxu0 0
    %5169 = vmatpush1.bf16.msra.mxu0 %v5126
    %5170 = vmatprep.subr.bf16.mxu0 0
    %5171 = vmatpush1.bf16.msra.mxu0 %v5127
    %5172 = vmatprep.subr.bf16.mxu0 0
    %5173 = vmatpush1.bf16.msra.mxu0 %v5128
    %5174 = vmatprep.subr.bf16.mxu0 0
    %5175 = vmatpush1.bf16.msra.mxu0 %v5129
    %5176 = vmatprep.subr.bf16.mxu0 0
    %5177 = vmatpush1.bf16.msra.mxu0 %v5130
    %5178 = vmatprep.subr.bf16.mxu0 0
    %5179 = vmatpush1.bf16.msra.mxu0 %v5131
    %5180 = vmatprep.mubr.bf16.mxu0 %v5049
    %5181 = vmatmul.mubr.bf16.gmra.mrb[0].mxu0 %v5048
    %v5182 = vpop.f32.mrb[0].mxu0
    %v5183 = vadd.f32 0.0, %v5182
    %v5184 = vpop.f32.mrb[0].mxu0
    %v5185 = vpop.f32.mrb[0].mxu0
    %v5186 = vadd.f32 0.0, %v5185
    %v5187 = vpop.f32.mrb[0].mxu0
    %5188 = vdwg.mxu0
    %v5189 = vadd.f32 %v5007, %v5183
    %v5190 = vadd.f32 %v5010, %v5186
    %v5191 = vlaneseq
    %v5192 = vshrl.u32 %v5191, 7
    %v5193 = vsub.s32 5, %v5192
    %v5194 = vrot.slane %v77, %v5193
    %v5195 = vmul.f32 %v5189, %v5194
    %v5196 = vmul.f32 %v5190, %v5194
    %v5197 = vlaneseq
    %v5198 = vshrl.u32 %v5197, 7
    %v5199 = vsub.s32 6, %v5198
    %v5200 = vrot.slane %v77, %v5199
    %v5201 = vadd.f32 %v5195, %v5200
    %v5202 = vadd.f32 %v5196, %v5200
    %v5203 = vmax.f32 %v5201, 0.0
    %v5204 = vmax.f32 %v5202, 0.0
    %v5205 = vpack.c.bf16 %v2677, %v2677
    %v5206 = vpack.c.bf16 %v5204, %v5203
    %vm5207 = vcmask 97280
    %v5209 = vsel %vm5207, %v5205, 0
    %vm5211 = vcmask 1045504
    %v5213 = vsel %vm5211, %v5206, 0
    %5215 = vmatprep.subr.bf16.mxu0 0
    %5216 = vmatpush1.bf16.msra.mxu0 %v5213
    %5217 = vmatprep.subr.bf16.mxu0 0
    %5218 = vmatpush1.bf16.msra.mxu0 0
    %5219 = vmatprep.subr.bf16.mxu0 0
    %5220 = vmatpush1.bf16.msra.mxu0 0
    %5221 = vmatprep.subr.bf16.mxu0 0
    %5222 = vmatpush1.bf16.msra.mxu0 0
    %5223 = vmatprep.subr.bf16.mxu0 0
    %5224 = vmatpush1.bf16.msra.mxu0 0
    %5225 = vmatprep.subr.bf16.mxu0 0
    %5226 = vmatpush1.bf16.msra.mxu0 0
    %5227 = vmatprep.subr.bf16.mxu0 0
    %5228 = vmatpush1.bf16.msra.mxu0 0
    %5229 = vmatprep.subr.bf16.mxu0 0
    %5230 = vmatpush1.bf16.msra.mxu0 0
    %5231 = vmatprep.subr.bf16.mxu0 0
    %5232 = vmatpush1.bf16.msra.mxu0 0
    %5233 = vmatprep.subr.bf16.mxu0 0
    %5234 = vmatpush1.bf16.msra.mxu0 0
    %5235 = vmatprep.subr.bf16.mxu0 0
    %5236 = vmatpush1.bf16.msra.mxu0 0
    %5237 = vmatprep.subr.bf16.mxu0 0
    %5238 = vmatpush1.bf16.msra.mxu0 0
    %5239 = vmatprep.subr.bf16.mxu0 0
    %5240 = vmatpush1.bf16.msra.mxu0 0
    %5241 = vmatprep.subr.bf16.mxu0 0
    %5242 = vmatpush1.bf16.msra.mxu0 0
    %5243 = vmatprep.subr.bf16.mxu0 0
    %5244 = vmatpush1.bf16.msra.mxu0 0
    %5245 = vmatprep.subr.bf16.mxu0 0
    %5246 = vmatpush1.bf16.msra.mxu0 0
    %5247 = vmatprep.mubr.bf16.mxu0 0
    %5248 = vmatmul.mubr.bf16.gmra.mrb[0].mxu0 %v5209
    %v5249 = vpop.f32.mrb[0].mxu0
    %v5250 = vadd.f32 0.0, %v5249
    %v5251 = vpop.f32.mrb[0].mxu0
    %v5252 = vpop.f32.mrb[0].mxu0
    %v5253 = vpop.f32.mrb[0].mxu0
    %5254 = vdwg.mxu0
    %v5255 = vmul.f32 %v5250, 0.33333334
    %v5256 = vld [vmem:[%s7] sm:$0xf]
    %v5257 = vld [vmem:[%s7 + $0x4] sm:$0xf]
    %v5258 = vld [vmem:[%s7 + $0x8] sm:$0xf]
    %v5259 = vld [vmem:[%s7 + $0xc] sm:$0xf]
    %v5260 = vld [vmem:[%s7 + $0x10] sm:$0xf]
    %v5261 = vld [vmem:[%s7 + $0x14] sm:$0xf]
    %v5262 = vld [vmem:[%s7 + $0x18] sm:$0xf]
    %v5263 = vld [vmem:[%s7 + $0x1c] sm:$0xf]
    %v5264 = vld [vmem:[%s7 + $0x20] sm:$0xf]
    %v5265 = vld [vmem:[%s7 + $0x24] sm:$0xf]
    %v5266 = vld [vmem:[%s7 + $0x28] sm:$0xf]
    %v5267 = vld [vmem:[%s7 + $0x2c] sm:$0xf]
    %v5268 = vld [vmem:[%s7 + $0x30] sm:$0xf]
    %v5269 = vld [vmem:[%s7 + $0x34] sm:$0xf]
    %v5270 = vld [vmem:[%s7 + $0x38] sm:$0xf]
    %v5271 = vld [vmem:[%s7 + $0x3c] sm:$0xf]
    %v5272 = vpack.c.bf16 %v2674, %v2674
    %v5273 = vld [vmem:[%s7 + $0x40] sm:$0xf]
    %v5274 = vld [vmem:[%s7 + $0x44] sm:$0xf]
    %v5275 = vld [vmem:[%s7 + $0x48] sm:$0xf]
    %v5276 = vld [vmem:[%s7 + $0x4c] sm:$0xf]
    %v5277 = vld [vmem:[%s7 + $0x50] sm:$0xf]
    %v5278 = vld [vmem:[%s7 + $0x54] sm:$0xf]
    %v5279 = vld [vmem:[%s7 + $0x58] sm:$0xf]
    %v5280 = vld [vmem:[%s7 + $0x5c] sm:$0xf]
    %v5281 = vld [vmem:[%s7 + $0x60] sm:$0xf]
    %v5282 = vld [vmem:[%s7 + $0x64] sm:$0xf]
    %v5283 = vld [vmem:[%s7 + $0x68] sm:$0xf]
    %v5284 = vld [vmem:[%s7 + $0x6c] sm:$0xf]
    %v5285 = vld [vmem:[%s7 + $0x70] sm:$0xf]
    %v5286 = vld [vmem:[%s7 + $0x74] sm:$0xf]
    %v5287 = vld [vmem:[%s7 + $0x78] sm:$0xf]
    %v5288 = vld [vmem:[%s7 + $0x7c] sm:$0xf]
    %v5289 = vpack.c.bf16 %v5255, %v5255
    %v5306 = vunpack.c.l.b16 %v5273
    %v5307 = vunpack.c.l.b16 %v5274
    %v5308 = vunpack.c.l.b16 %v5275
    %v5309 = vunpack.c.l.b16 %v5276
    %v5310 = vunpack.c.l.b16 %v5277
    %v5311 = vunpack.c.l.b16 %v5278
    %v5312 = vunpack.c.l.b16 %v5279
    %v5313 = vunpack.c.l.b16 %v5280
    %v5314 = vunpack.c.l.b16 %v5281
    %v5315 = vunpack.c.l.b16 %v5282
    %v5316 = vunpack.c.l.b16 %v5283
    %v5317 = vunpack.c.l.b16 %v5284
    %v5318 = vunpack.c.l.b16 %v5285
    %v5319 = vunpack.c.l.b16 %v5286
    %v5320 = vunpack.c.l.b16 %v5287
    %v5321 = vunpack.c.l.b16 %v5288
    %v5322 = vpack.c.b16 %v5307, %v5306
    %v5323 = vpack.c.b16 %v5309, %v5308
    %v5324 = vpack.c.b16 %v5311, %v5310
    %v5325 = vpack.c.b16 %v5313, %v5312
    %v5326 = vpack.c.b16 %v5315, %v5314
    %v5327 = vpack.c.b16 %v5317, %v5316
    %v5328 = vpack.c.b16 %v5319, %v5318
    %v5329 = vpack.c.b16 %v5321, %v5320
    %5338 = vmatprep.subr.bf16.mxu0 0
    %5339 = vmatpush1.bf16.msra.mxu0 %v5322
    %5340 = vmatprep.subr.bf16.mxu0 0
    %5341 = vmatpush1.bf16.msra.mxu0 %v5323
    %5342 = vmatprep.subr.bf16.mxu0 0
    %5343 = vmatpush1.bf16.msra.mxu0 %v5324
    %5344 = vmatprep.subr.bf16.mxu0 0
    %5345 = vmatpush1.bf16.msra.mxu0 %v5325
    %5346 = vmatprep.subr.bf16.mxu0 0
    %5347 = vmatpush1.bf16.msra.mxu0 %v5326
    %5348 = vmatprep.subr.bf16.mxu0 0
    %5349 = vmatpush1.bf16.msra.mxu0 %v5327
    %5350 = vmatprep.subr.bf16.mxu0 0
    %5351 = vmatpush1.bf16.msra.mxu0 %v5328
    %5352 = vmatprep.subr.bf16.mxu0 0
    %5353 = vmatpush1.bf16.msra.mxu0 %v5329
    %5354 = vmatprep.subr.bf16.mxu0 0
    %5355 = vmatpush1.bf16.msra.mxu0 0
    %5356 = vmatprep.subr.bf16.mxu0 0
    %5357 = vmatpush1.bf16.msra.mxu0 0
    %5358 = vmatprep.subr.bf16.mxu0 0
    %5359 = vmatpush1.bf16.msra.mxu0 0
    %5360 = vmatprep.subr.bf16.mxu0 0
    %5361 = vmatpush1.bf16.msra.mxu0 0
    %5362 = vmatprep.subr.bf16.mxu0 0
    %5363 = vmatpush1.bf16.msra.mxu0 0
    %5364 = vmatprep.subr.bf16.mxu0 0
    %5365 = vmatpush1.bf16.msra.mxu0 0
    %5366 = vmatprep.subr.bf16.mxu0 0
    %5367 = vmatpush1.bf16.msra.mxu0 0
    %5368 = vmatprep.subr.bf16.mxu0 0
    %5369 = vmatpush1.bf16.msra.mxu0 0
    %5370 = vmatprep.mubr.bf16.mxu0 0
    %5371 = vmatmul.mubr.bf16.gmra.mrb[0].mxu0 %v5289
    %v5372 = vpop.f32.mrb[0].mxu0
    %v5373 = vadd.f32 0.0, %v5372
    %v5374 = vpop.f32.mrb[0].mxu0
    %v5375 = vpop.f32.mrb[0].mxu0
    %v5376 = vpop.f32.mrb[0].mxu0
    %5377 = vdwg.mxu0
    %v5394 = vunpack.c.l.b16 %v5256
    %v5395 = vunpack.c.l.b16 %v5257
    %v5396 = vunpack.c.l.b16 %v5258
    %v5397 = vunpack.c.l.b16 %v5259
    %v5398 = vunpack.c.l.b16 %v5260
    %v5399 = vunpack.c.l.b16 %v5261
    %v5400 = vunpack.c.l.b16 %v5262
    %v5401 = vunpack.c.l.b16 %v5263
    %v5402 = vunpack.c.l.b16 %v5264
    %v5403 = vunpack.c.l.b16 %v5265
    %v5404 = vunpack.c.l.b16 %v5266
    %v5405 = vunpack.c.l.b16 %v5267
    %v5406 = vunpack.c.l.b16 %v5268
    %v5407 = vunpack.c.l.b16 %v5269
    %v5408 = vunpack.c.l.b16 %v5270
    %v5409 = vunpack.c.l.b16 %v5271
    %v5410 = vpack.c.b16 %v5395, %v5394
    %v5411 = vpack.c.b16 %v5397, %v5396
    %v5412 = vpack.c.b16 %v5399, %v5398
    %v5413 = vpack.c.b16 %v5401, %v5400
    %v5414 = vpack.c.b16 %v5403, %v5402
    %v5415 = vpack.c.b16 %v5405, %v5404
    %v5416 = vpack.c.b16 %v5407, %v5406
    %v5417 = vpack.c.b16 %v5409, %v5408
    %5426 = vmatprep.subr.bf16.mxu0 0
    %5427 = vmatpush1.bf16.msra.mxu0 %v5410
    %5428 = vmatprep.subr.bf16.mxu0 0
    %5429 = vmatpush1.bf16.msra.mxu0 %v5411
    %5430 = vmatprep.subr.bf16.mxu0 0
    %5431 = vmatpush1.bf16.msra.mxu0 %v5412
    %5432 = vmatprep.subr.bf16.mxu0 0
    %5433 = vmatpush1.bf16.msra.mxu0 %v5413
    %5434 = vmatprep.subr.bf16.mxu0 0
    %5435 = vmatpush1.bf16.msra.mxu0 %v5414
    %5436 = vmatprep.subr.bf16.mxu0 0
    %5437 = vmatpush1.bf16.msra.mxu0 %v5415
    %5438 = vmatprep.subr.bf16.mxu0 0
    %5439 = vmatpush1.bf16.msra.mxu0 %v5416
    %5440 = vmatprep.subr.bf16.mxu0 0
    %5441 = vmatpush1.bf16.msra.mxu0 %v5417
    %5442 = vmatprep.subr.bf16.mxu0 0
    %5443 = vmatpush1.bf16.msra.mxu0 0
    %5444 = vmatprep.subr.bf16.mxu0 0
    %5445 = vmatpush1.bf16.msra.mxu0 0
    %5446 = vmatprep.subr.bf16.mxu0 0
    %5447 = vmatpush1.bf16.msra.mxu0 0
    %5448 = vmatprep.subr.bf16.mxu0 0
    %5449 = vmatpush1.bf16.msra.mxu0 0
    %5450 = vmatprep.subr.bf16.mxu0 0
    %5451 = vmatpush1.bf16.msra.mxu0 0
    %5452 = vmatprep.subr.bf16.mxu0 0
    %5453 = vmatpush1.bf16.msra.mxu0 0
    %5454 = vmatprep.subr.bf16.mxu0 0
    %5455 = vmatpush1.bf16.msra.mxu0 0
    %5456 = vmatprep.subr.bf16.mxu0 0
    %5457 = vmatpush1.bf16.msra.mxu0 0
    %5458 = vmatprep.mubr.bf16.mxu0 0
    %5459 = vmatmul.mubr.bf16.gmra.mrb[0].mxu0 %v5272
    %v5460 = vpop.f32.mrb[0].mxu0
    %v5461 = vadd.f32 %v5373, %v5460
    %v5462 = vpop.f32.mrb[0].mxu0
    %v5463 = vpop.f32.mrb[0].mxu0
    %v5464 = vpop.f32.mrb[0].mxu0
    %5465 = vdwg.mxu0
    %v5466 = vlaneseq
    %v5467 = vshrl.u32 %v5466, 7
    %v5468 = vsub.s32 7, %v5467
    %v5469 = vrot.slane %v77, %v5468
    %v5470 = vadd.f32 %v5461, %v5469
    %5471 = vst [vmem:[%s10] sm:$0xff] %v5470
    // Predicated region
    $region54: #{mlstm_fcn_forward.1} parent=1 // pred_check
      _
    $region55: #{mlstm_fcn_forward.1} parent=1 // pred_check_branch
      %5473 = sbr.rel (0) target = $region57
    $region56: #{mlstm_fcn_forward.1} parent=1 // pred_region
      _
    $region57: #{mlstm_fcn_forward.1} parent=1 // pred_fallthru
      _
    // Predicated region
    $region58: #{mlstm_fcn_forward.1} parent=1 // pred_check
      _
    $region59: #{mlstm_fcn_forward.1} parent=1 // pred_check_branch
      %5475 = sbr.rel (0) target = $region61
    $region60: #{mlstm_fcn_forward.1} parent=1 // pred_region
      _
    $region61: #{mlstm_fcn_forward.1} parent=1 // pred_fallthru
      _
    %5476 = vsyncpa [#allocation4], 1
    %5477 = vsyncpa [#allocation6], 1

</llo_original>
